<compile_context>
chip_gen: v7x
topology: tpu7x:2x2x1
jax: 0.10.0
libtpu: 0.0.40
codegen_flags: <defaults>
</compile_context>

<pallas_src>
import functools

import jax
import jax.numpy as jnp
from jax.experimental import pallas as pl
from jax.experimental.pallas import tpu as pltpu


def _round_up(v, m):
    return ((v + m - 1) // m) * m


# ----------------------------------------------------------------------------
# Single fused kernel: all layers + mask + output projection, grid=(1,).
# ----------------------------------------------------------------------------
def fused_lstm_kernel(*refs, nlayers, bp):
    # refs = (x2d, mask2d, [w_ih, w_hh, b] * nlayers, w_out, b_out,
    #         y_ref, gx_scr, hseq_scr)
    x_ref = refs[0]
    mask_ref = refs[1]
    layer_refs = refs[2:2 + 3 * nlayers]
    wout_ref = refs[2 + 3 * nlayers]
    bout_ref = refs[3 + 3 * nlayers]
    y_ref = refs[4 + 3 * nlayers]
    gx_scr = refs[5 + 3 * nlayers]
    hseq_scr = refs[6 + 3 * nlayers]

    tb, hp = hseq_scr.shape          # (T*Bp, Hp)
    t_steps = tb // bp

    def run_layer(layer_in_2d, w_ih_ref, w_hh_ref, b_ref):
        # Hoisted input projection for all timesteps at once (big MXU matmul);
        # the bias is folded in here, off the recurrent critical path.
        gx_scr[...] = (
            jnp.dot(layer_in_2d, w_ih_ref[...],
                    preferred_element_type=jnp.float32)
            + b_ref[...])

        def step(t, carry):
            h, c = carry
            # 8-sublane-aligned slab of precomputed gates for timestep t.
            row = t * bp if isinstance(t, int) else pl.multiple_of(t * bp, bp)
            gates = gx_scr[pl.ds(row, bp), :] + jnp.dot(
                h, w_hh_ref[...], preferred_element_type=jnp.float32)
            # Gate slices are 128-lane aligned because Hp % 128 == 0.
            i_g = jax.nn.sigmoid(gates[:, 0 * hp:1 * hp])
            f_g = jax.nn.sigmoid(gates[:, 1 * hp:2 * hp])
            g_g = jnp.tanh(gates[:, 2 * hp:3 * hp])
            o_g = jax.nn.sigmoid(gates[:, 3 * hp:4 * hp])
            c_new = f_g * c + i_g * g_g
            h_new = o_g * jnp.tanh(c_new)
            hseq_scr[pl.ds(row, bp), :] = h_new
            return h_new, c_new

        zeros = jnp.zeros((bp, hp), jnp.float32)
        if t_steps <= 16:
            carry = (zeros, zeros)
            for t in range(t_steps):       # short fixed trip count: unroll
                carry = step(t, carry)
        else:
            jax.lax.fori_loop(0, t_steps, step, (zeros, zeros))

    # Layer 0 consumes x; deeper layers consume the previous layer's hidden
    # sequence, which is still resident in VMEM scratch.
    run_layer(x_ref[...], *layer_refs[0:3])
    for layer in range(1, nlayers):
        run_layer(hseq_scr[...], *layer_refs[3 * layer:3 * layer + 3])

    # pad_packed mask (zero h at t >= length), then one big output matmul.
    h_masked = hseq_scr[...] * mask_ref[...]
    y_ref[...] = (jnp.dot(h_masked, wout_ref[...],
                          preferred_element_type=jnp.float32)
                  + bout_ref[...])


# ----------------------------------------------------------------------------
# Wrapper: full module forward.
# ----------------------------------------------------------------------------
@functools.partial(jax.jit, static_argnames=("nout",))
def lstm_forward(x, input_lengths, params, *, nout):
    """x: (B, T, nin) float32, input_lengths: (B,) int32 -> (B, T, nout)."""
    B, T, nin = x.shape
    nlayers = len(params["layers"])
    Hp = params["w_out"].shape[0]          # padded hidden (multiple of 128)
    Np = params["w_out"].shape[1]          # padded nout  (multiple of 128)
    G4 = params["layers"][0][1].shape[1]   # 4 * Hp
    Bp = _round_up(B, 8)                   # padded batch (sublane aligned)

    # Pad batch, go time-major, flatten to a lane/sublane-friendly 2-D slab.
    xp = jnp.zeros((Bp, T, nin), jnp.float32).at[:B].set(x.astype(jnp.float32))
    x2d = jnp.transpose(xp, (1, 0, 2)).reshape(T * Bp, nin)

    # pad_packed_sequence mask via integer compare, rows in (t, b) order.
    t_idx = jnp.arange(T, dtype=jnp.int32)[:, None]                 # (T, 1)
    lens = jnp.zeros((Bp,), jnp.int32).at[:B].set(
        input_lengths.astype(jnp.int32))
    mask2d = (t_idx < lens[None, :]).astype(jnp.float32).reshape(T * Bp, 1)

    args = [x2d, mask2d]
    for (w_ih, w_hh, b) in params["layers"]:
        args += [w_ih, w_hh, b]
    args += [params["w_out"], params["b_out"]]

    in_specs = [pl.BlockSpec(a.shape, lambda i: (0, 0)) for a in args]

    y2d = pl.pallas_call(
        functools.partial(fused_lstm_kernel, nlayers=nlayers, bp=Bp),
        out_shape=jax.ShapeDtypeStruct((T * Bp, Np), jnp.float32),
        grid=(1,),
        in_specs=in_specs,
        out_specs=pl.BlockSpec((T * Bp, Np), lambda i: (0, 0)),
        scratch_shapes=[
            pltpu.VMEM((T * Bp, G4), jnp.float32),   # per-layer gates_x
            pltpu.VMEM((T * Bp, Hp), jnp.float32),   # per-layer hidden sequence
        ],
        compiler_params=pltpu.CompilerParams(
            dimension_semantics=("arbitrary",)),
    )(*args)

    # Back to batch-first and strip the lane/sublane padding (tiny XLA copies).
    return jnp.transpose(y2d.reshape(T, Bp, Np)[:, :B, :nout], (1, 0, 2))


# ----------------------------------------------------------------------------
# Pure-JAX reference (lax.scan) on the UNPADDED params for correctness check.
# ----------------------------------------------------------------------------
def lstm_reference(x, input_lengths, params):
    B, T, _ = x.shape
    h_seq = jnp.transpose(x, (1, 0, 2))
    for (w_ih, w_hh, b) in params["layers"]:
        H = w_hh.shape[0]

        def step(carry, x_t, w_ih=w_ih, w_hh=w_hh, b=b, H=H):
            h, c = carry
            gates = x_t @ w_ih + h @ w_hh + b[0]
            i = jax.nn.sigmoid(gates[:, :H])
            f = jax.nn.sigmoid(gates[:, H:2 * H])
            g = jnp.tanh(gates[:, 2 * H:3 * H])
            o = jax.nn.sigmoid(gates[:, 3 * H:])
            c = f * c + i * g
            h = o * jnp.tanh(c)
            return (h, c), h

        init = (jnp.zeros((B, H), jnp.float32), jnp.zeros((B, H), jnp.float32))
        _, h_seq = jax.lax.scan(step, init, h_seq)
    mask = (jnp.arange(T)[:, None, None]
            < input_lengths[None, :, None]).astype(jnp.float32)
    out = h_seq * mask
    y = out @ params["w_out"] + params["b_out"][0]
    return jnp.transpose(y, (1, 0, 2))


# ----------------------------------------------------------------------------
# Parameter init (PyTorch-equivalent shapes, stored transposed) + padding.
# ----------------------------------------------------------------------------
def init_params(key, nin, nhid, nlayers, nout):
    """W_ih (4H, Din) -> stored transposed (Din, 4H); b_ih + b_hh folded."""
    k = 1.0 / jnp.sqrt(jnp.float32(nhid))
    layers = []
    for layer in range(nlayers):
        d_in = nin if layer == 0 else nhid
        key, k1, k2, k3, k4 = jax.random.split(key, 5)
        w_ih = jax.random.uniform(k1, (d_in, 4 * nhid), jnp.float32, -k, k)
        w_hh = jax.random.uniform(k2, (nhid, 4 * nhid), jnp.float32, -k, k)
        b_ih = jax.random.uniform(k3, (4 * nhid,), jnp.float32, -k, k)
        b_hh = jax.random.uniform(k4, (4 * nhid,), jnp.float32, -k, k)
        layers.append((w_ih, w_hh, (b_ih + b_hh)[None, :]))
    key, k5, k6 = jax.random.split(key, 3)
    w_out = jax.random.uniform(k5, (nhid, nout), jnp.float32, -k, k)
    b_out = jax.random.uniform(k6, (nout,), jnp.float32, -k, k)[None, :]
    return {"layers": layers, "w_out": w_out, "b_out": b_out}


def _pad_gate_cols(w, h, hp):
    """(rows, 4*h) -> (rows, 4*hp): each gate block starts at a 128-lane
    boundary; padded columns are zero (exact: padded h/c lanes stay 0)."""
    out = jnp.zeros((w.shape[0], 4 * hp), w.dtype)
    for g in range(4):
        out = out.at[:, g * hp:g * hp + h].set(w[:, g * h:(g + 1) * h])
    return out


def _pad_rows(w, rows):
    out = jnp.zeros((rows, w.shape[1]), w.dtype)
    return out.at[:w.shape[0]].set(w)


def pad_params(raw):
    H = raw["layers"][0][1].shape[0]
    nout = raw["w_out"].shape[1]
    Hp = _round_up(H, 128)
    Np = _round_up(nout, 128)
    layers = []
    for idx, (w_ih, w_hh, b) in enumerate(raw["layers"]):
        w_ih_p = _pad_gate_cols(w_ih, H, Hp)
        if idx > 0:                         # deeper layers consume padded h
            w_ih_p = _pad_rows(w_ih_p, Hp)
        w_hh_p = _pad_rows(_pad_gate_cols(w_hh, H, Hp), Hp)
        b_p = _pad_gate_cols(b, H, Hp)
        layers.append((w_ih_p, w_hh_p, b_p))
    w_out_p = _pad_rows(
        jnp.zeros((H, Np), raw["w_out"].dtype).at[:, :nout].set(raw["w_out"]),
        Hp)
    b_out_p = jnp.zeros((1, Np), raw["b_out"].dtype).at[:, :nout].set(
        raw["b_out"])
    return {"layers": layers, "w_out": w_out_p, "b_out": b_out_p}


if __name__ == "__main__":
    # Small, module-consistent shapes.
    nin, nhid, nlayers, nout = 16, 32, 2, 4
    batch, samples_length = 2, 8

    key = jax.random.PRNGKey(0)
    key, kx = jax.random.split(key)
    x = jax.random.normal(kx, (batch, samples_length, nin), jnp.float32)
    input_lengths = jnp.array([8, 5], dtype=jnp.int32)

    raw_params = init_params(jax.random.PRNGKey(1), nin, nhid, nlayers, nout)
    padded_params = pad_params(raw_params)

    y = lstm_forward(x, input_lengths, padded_params, nout=nout)
    y = jax.block_until_ready(y)

    y_ref = lstm_reference(x, input_lengths, raw_params)
    assert y.shape == (batch, samples_length, nout)
    assert jnp.allclose(y, y_ref, atol=1e-3, rtol=1e-3), "mismatch vs reference"

    print("KERNEL_OK")
</pallas_src>

<mosaic_0001>
module attributes {stable_mosaic.version = 11 : i64} {
  func.func @fused_lstm_kernel(%arg0: i32, %arg1: memref<64x16xf32, #tpu.memory_space<vmem>>, %arg2: memref<64x1xf32, #tpu.memory_space<vmem>>, %arg3: memref<16x512xf32, #tpu.memory_space<vmem>>, %arg4: memref<128x512xf32, #tpu.memory_space<vmem>>, %arg5: memref<1x512xf32, #tpu.memory_space<vmem>>, %arg6: memref<128x512xf32, #tpu.memory_space<vmem>>, %arg7: memref<128x512xf32, #tpu.memory_space<vmem>>, %arg8: memref<1x512xf32, #tpu.memory_space<vmem>>, %arg9: memref<128x128xf32, #tpu.memory_space<vmem>>, %arg10: memref<1x128xf32, #tpu.memory_space<vmem>>, %arg11: memref<64x128xf32, #tpu.memory_space<vmem>>, %arg12: memref<64x512xf32, #tpu.memory_space<vmem>>, %arg13: memref<64x128xf32, #tpu.memory_space<vmem>>) attributes {dimension_semantics = [#tpu.dimension_semantics<arbitrary>], iteration_bounds = array<i64: 1>, scalar_prefetch = 0 : i64, scratch_operands = 2 : i64, tpu.core_type = #tpu.core_type<tc>, window_params = [{pipeline_mode = #tpu.pipeline_mode<synchronous>, transform_indices = @transform_0, window_bounds = array<i64: 64, 16>}, {pipeline_mode = #tpu.pipeline_mode<synchronous>, transform_indices = @transform_1, window_bounds = array<i64: 64, 1>}, {pipeline_mode = #tpu.pipeline_mode<synchronous>, transform_indices = @transform_2, window_bounds = array<i64: 16, 512>}, {pipeline_mode = #tpu.pipeline_mode<synchronous>, transform_indices = @transform_3, window_bounds = array<i64: 128, 512>}, {pipeline_mode = #tpu.pipeline_mode<synchronous>, transform_indices = @transform_4, window_bounds = array<i64: 1, 512>}, {pipeline_mode = #tpu.pipeline_mode<synchronous>, transform_indices = @transform_5, window_bounds = array<i64: 128, 512>}, {pipeline_mode = #tpu.pipeline_mode<synchronous>, transform_indices = @transform_6, window_bounds = array<i64: 128, 512>}, {pipeline_mode = #tpu.pipeline_mode<synchronous>, transform_indices = @transform_7, window_bounds = array<i64: 1, 512>}, {pipeline_mode = #tpu.pipeline_mode<synchronous>, transform_indices = @transform_8, window_bounds = array<i64: 128, 128>}, {pipeline_mode = #tpu.pipeline_mode<synchronous>, transform_indices = @transform_9, window_bounds = array<i64: 1, 128>}, {pipeline_mode = #tpu.pipeline_mode<synchronous>, transform_indices = @transform_10, window_bounds = array<i64: 64, 128>}]} {
    %c0 = arith.constant 0 : index
    %c0_0 = arith.constant 0 : index
    %0 = vector.load %arg1[%c0, %c0_0] : memref<64x16xf32, #tpu.memory_space<vmem>>, vector<64x16xf32>
    %c0_1 = arith.constant 0 : index
    %c0_2 = arith.constant 0 : index
    %1 = vector.load %arg3[%c0_1, %c0_2] : memref<16x512xf32, #tpu.memory_space<vmem>>, vector<16x512xf32>
    %cst = arith.constant dense<0.000000e+00> : vector<64x512xf32>
    %2 = tpu.matmul %0, %1, %cst {dimension_numbers = #tpu.dot_dimension_numbers<[1], [0], [0], [1], [0, 0, 1, 1], [], []>} : vector<64x16xf32>, vector<16x512xf32>, vector<64x512xf32> -> vector<64x512xf32>
    %c0_3 = arith.constant 0 : index
    %c0_4 = arith.constant 0 : index
    %3 = vector.load %arg5[%c0_3, %c0_4] : memref<1x512xf32, #tpu.memory_space<vmem>>, vector<1x512xf32>
    %4 = vector.broadcast %3 : vector<1x512xf32> to vector<64x512xf32>
    %5 = arith.addf %2, %4 : vector<64x512xf32>
    %c0_5 = arith.constant 0 : index
    %c0_6 = arith.constant 0 : index
    %6 = vector.load %arg12[%c0_5, %c0_6] : memref<64x512xf32, #tpu.memory_space<vmem>>, vector<64x512xf32>
    tpu.vector_store %arg12[%c0_5, %c0_6], %5 {strides = array<i32>} : memref<64x512xf32, #tpu.memory_space<vmem>>, vector<64x512xf32>,
    %cst_7 = arith.constant 0.000000e+00 : f32
    %7 = vector.broadcast %cst_7 : f32 to vector<8x128xf32>
    %c0_8 = arith.constant 0 : index
    %c0_9 = arith.constant 0 : index
    %8 = vector.load %arg12[%c0_8, %c0_9] : memref<64x512xf32, #tpu.memory_space<vmem>>, vector<8x512xf32>
    %c0_10 = arith.constant 0 : index
    %c0_11 = arith.constant 0 : index
    %9 = vector.load %arg4[%c0_10, %c0_11] : memref<128x512xf32, #tpu.memory_space<vmem>>, vector<128x512xf32>
    %cst_12 = arith.constant dense<0.000000e+00> : vector<8x512xf32>
    %10 = tpu.matmul %7, %9, %cst_12 {dimension_numbers = #tpu.dot_dimension_numbers<[1], [0], [0], [1], [0, 0, 1, 1], [], []>} : vector<8x128xf32>, vector<128x512xf32>, vector<8x512xf32> -> vector<8x512xf32>
    %11 = arith.addf %8, %10 : vector<8x512xf32>
    %12 = vector.extract_strided_slice %11 {offsets = [0, 0], sizes = [8, 128], strides = [1, 1]} : vector<8x512xf32> to vector<8x128xf32>
    %13 = arith.negf %12 : vector<8x128xf32>
    %14 = math.exp %13 : vector<8x128xf32>
    %cst_13 = arith.constant 1.000000e+00 : f32
    %15 = vector.broadcast %cst_13 : f32 to vector<8x128xf32>
    %16 = arith.addf %15, %14 : vector<8x128xf32>
    %17 = arith.divf %15, %16 : vector<8x128xf32>
    %18 = vector.extract_strided_slice %11 {offsets = [0, 128], sizes = [8, 128], strides = [1, 1]} : vector<8x512xf32> to vector<8x128xf32>
    %19 = arith.negf %18 : vector<8x128xf32>
    %20 = math.exp %19 : vector<8x128xf32>
    %cst_14 = arith.constant 1.000000e+00 : f32
    %21 = vector.broadcast %cst_14 : f32 to vector<8x128xf32>
    %22 = arith.addf %21, %20 : vector<8x128xf32>
    %23 = arith.divf %21, %22 : vector<8x128xf32>
    %24 = vector.extract_strided_slice %11 {offsets = [0, 256], sizes = [8, 128], strides = [1, 1]} : vector<8x512xf32> to vector<8x128xf32>
    %25 = math.tanh %24 : vector<8x128xf32>
    %26 = vector.extract_strided_slice %11 {offsets = [0, 384], sizes = [8, 128], strides = [1, 1]} : vector<8x512xf32> to vector<8x128xf32>
    %27 = arith.negf %26 : vector<8x128xf32>
    %28 = math.exp %27 : vector<8x128xf32>
    %cst_15 = arith.constant 1.000000e+00 : f32
    %29 = vector.broadcast %cst_15 : f32 to vector<8x128xf32>
    %30 = arith.addf %29, %28 : vector<8x128xf32>
    %31 = arith.divf %29, %30 : vector<8x128xf32>
    %32 = arith.mulf %23, %7 : vector<8x128xf32>
    %33 = arith.mulf %17, %25 : vector<8x128xf32>
    %34 = arith.addf %32, %33 : vector<8x128xf32>
    %35 = math.tanh %34 : vector<8x128xf32>
    %36 = arith.mulf %31, %35 : vector<8x128xf32>
    %c0_16 = arith.constant 0 : index
    %c0_17 = arith.constant 0 : index
    %37 = vector.load %arg13[%c0_16, %c0_17] : memref<64x128xf32, #tpu.memory_space<vmem>>, vector<8x128xf32>
    tpu.vector_store %arg13[%c0_16, %c0_17], %36 {strides = array<i32>} : memref<64x128xf32, #tpu.memory_space<vmem>>, vector<8x128xf32>,
    %c8 = arith.constant 8 : index
    %c0_18 = arith.constant 0 : index
    %38 = vector.load %arg12[%c8, %c0_18] : memref<64x512xf32, #tpu.memory_space<vmem>>, vector<8x512xf32>
    %c0_19 = arith.constant 0 : index
    %c0_20 = arith.constant 0 : index
    %39 = vector.load %arg4[%c0_19, %c0_20] : memref<128x512xf32, #tpu.memory_space<vmem>>, vector<128x512xf32>
    %cst_21 = arith.constant dense<0.000000e+00> : vector<8x512xf32>
    %40 = tpu.matmul %36, %39, %cst_21 {dimension_numbers = #tpu.dot_dimension_numbers<[1], [0], [0], [1], [0, 0, 1, 1], [], []>} : vector<8x128xf32>, vector<128x512xf32>, vector<8x512xf32> -> vector<8x512xf32>
    %41 = arith.addf %38, %40 : vector<8x512xf32>
    %42 = vector.extract_strided_slice %41 {offsets = [0, 0], sizes = [8, 128], strides = [1, 1]} : vector<8x512xf32> to vector<8x128xf32>
    %43 = arith.negf %42 : vector<8x128xf32>
    %44 = math.exp %43 : vector<8x128xf32>
    %cst_22 = arith.constant 1.000000e+00 : f32
    %45 = vector.broadcast %cst_22 : f32 to vector<8x128xf32>
    %46 = arith.addf %45, %44 : vector<8x128xf32>
    %47 = arith.divf %45, %46 : vector<8x128xf32>
    %48 = vector.extract_strided_slice %41 {offsets = [0, 128], sizes = [8, 128], strides = [1, 1]} : vector<8x512xf32> to vector<8x128xf32>
    %49 = arith.negf %48 : vector<8x128xf32>
    %50 = math.exp %49 : vector<8x128xf32>
    %cst_23 = arith.constant 1.000000e+00 : f32
    %51 = vector.broadcast %cst_23 : f32 to vector<8x128xf32>
    %52 = arith.addf %51, %50 : vector<8x128xf32>
    %53 = arith.divf %51, %52 : vector<8x128xf32>
    %54 = vector.extract_strided_slice %41 {offsets = [0, 256], sizes = [8, 128], strides = [1, 1]} : vector<8x512xf32> to vector<8x128xf32>
    %55 = math.tanh %54 : vector<8x128xf32>
    %56 = vector.extract_strided_slice %41 {offsets = [0, 384], sizes = [8, 128], strides = [1, 1]} : vector<8x512xf32> to vector<8x128xf32>
    %57 = arith.negf %56 : vector<8x128xf32>
    %58 = math.exp %57 : vector<8x128xf32>
    %cst_24 = arith.constant 1.000000e+00 : f32
    %59 = vector.broadcast %cst_24 : f32 to vector<8x128xf32>
    %60 = arith.addf %59, %58 : vector<8x128xf32>
    %61 = arith.divf %59, %60 : vector<8x128xf32>
    %62 = arith.mulf %53, %34 : vector<8x128xf32>
    %63 = arith.mulf %47, %55 : vector<8x128xf32>
    %64 = arith.addf %62, %63 : vector<8x128xf32>
    %65 = math.tanh %64 : vector<8x128xf32>
    %66 = arith.mulf %61, %65 : vector<8x128xf32>
    %c8_25 = arith.constant 8 : index
    %c0_26 = arith.constant 0 : index
    %67 = vector.load %arg13[%c8_25, %c0_26] : memref<64x128xf32, #tpu.memory_space<vmem>>, vector<8x128xf32>
    tpu.vector_store %arg13[%c8_25, %c0_26], %66 {strides = array<i32>} : memref<64x128xf32, #tpu.memory_space<vmem>>, vector<8x128xf32>,
    %c16 = arith.constant 16 : index
    %c0_27 = arith.constant 0 : index
    %68 = vector.load %arg12[%c16, %c0_27] : memref<64x512xf32, #tpu.memory_space<vmem>>, vector<8x512xf32>
    %c0_28 = arith.constant 0 : index
    %c0_29 = arith.constant 0 : index
    %69 = vector.load %arg4[%c0_28, %c0_29] : memref<128x512xf32, #tpu.memory_space<vmem>>, vector<128x512xf32>
    %cst_30 = arith.constant dense<0.000000e+00> : vector<8x512xf32>
    %70 = tpu.matmul %66, %69, %cst_30 {dimension_numbers = #tpu.dot_dimension_numbers<[1], [0], [0], [1], [0, 0, 1, 1], [], []>} : vector<8x128xf32>, vector<128x512xf32>, vector<8x512xf32> -> vector<8x512xf32>
    %71 = arith.addf %68, %70 : vector<8x512xf32>
    %72 = vector.extract_strided_slice %71 {offsets = [0, 0], sizes = [8, 128], strides = [1, 1]} : vector<8x512xf32> to vector<8x128xf32>
    %73 = arith.negf %72 : vector<8x128xf32>
    %74 = math.exp %73 : vector<8x128xf32>
    %cst_31 = arith.constant 1.000000e+00 : f32
    %75 = vector.broadcast %cst_31 : f32 to vector<8x128xf32>
    %76 = arith.addf %75, %74 : vector<8x128xf32>
    %77 = arith.divf %75, %76 : vector<8x128xf32>
    %78 = vector.extract_strided_slice %71 {offsets = [0, 128], sizes = [8, 128], strides = [1, 1]} : vector<8x512xf32> to vector<8x128xf32>
    %79 = arith.negf %78 : vector<8x128xf32>
    %80 = math.exp %79 : vector<8x128xf32>
    %cst_32 = arith.constant 1.000000e+00 : f32
    %81 = vector.broadcast %cst_32 : f32 to vector<8x128xf32>
    %82 = arith.addf %81, %80 : vector<8x128xf32>
    %83 = arith.divf %81, %82 : vector<8x128xf32>
    %84 = vector.extract_strided_slice %71 {offsets = [0, 256], sizes = [8, 128], strides = [1, 1]} : vector<8x512xf32> to vector<8x128xf32>
    %85 = math.tanh %84 : vector<8x128xf32>
    %86 = vector.extract_strided_slice %71 {offsets = [0, 384], sizes = [8, 128], strides = [1, 1]} : vector<8x512xf32> to vector<8x128xf32>
    %87 = arith.negf %86 : vector<8x128xf32>
    %88 = math.exp %87 : vector<8x128xf32>
    %cst_33 = arith.constant 1.000000e+00 : f32
    %89 = vector.broadcast %cst_33 : f32 to vector<8x128xf32>
    %90 = arith.addf %89, %88 : vector<8x128xf32>
    %91 = arith.divf %89, %90 : vector<8x128xf32>
    %92 = arith.mulf %83, %64 : vector<8x128xf32>
    %93 = arith.mulf %77, %85 : vector<8x128xf32>
    %94 = arith.addf %92, %93 : vector<8x128xf32>
    %95 = math.tanh %94 : vector<8x128xf32>
    %96 = arith.mulf %91, %95 : vector<8x128xf32>
    %c16_34 = arith.constant 16 : index
    %c0_35 = arith.constant 0 : index
    %97 = vector.load %arg13[%c16_34, %c0_35] : memref<64x128xf32, #tpu.memory_space<vmem>>, vector<8x128xf32>
    tpu.vector_store %arg13[%c16_34, %c0_35], %96 {strides = array<i32>} : memref<64x128xf32, #tpu.memory_space<vmem>>, vector<8x128xf32>,
    %c24 = arith.constant 24 : index
    %c0_36 = arith.constant 0 : index
    %98 = vector.load %arg12[%c24, %c0_36] : memref<64x512xf32, #tpu.memory_space<vmem>>, vector<8x512xf32>
    %c0_37 = arith.constant 0 : index
    %c0_38 = arith.constant 0 : index
    %99 = vector.load %arg4[%c0_37, %c0_38] : memref<128x512xf32, #tpu.memory_space<vmem>>, vector<128x512xf32>
    %cst_39 = arith.constant dense<0.000000e+00> : vector<8x512xf32>
    %100 = tpu.matmul %96, %99, %cst_39 {dimension_numbers = #tpu.dot_dimension_numbers<[1], [0], [0], [1], [0, 0, 1, 1], [], []>} : vector<8x128xf32>, vector<128x512xf32>, vector<8x512xf32> -> vector<8x512xf32>
    %101 = arith.addf %98, %100 : vector<8x512xf32>
    %102 = vector.extract_strided_slice %101 {offsets = [0, 0], sizes = [8, 128], strides = [1, 1]} : vector<8x512xf32> to vector<8x128xf32>
    %103 = arith.negf %102 : vector<8x128xf32>
    %104 = math.exp %103 : vector<8x128xf32>
    %cst_40 = arith.constant 1.000000e+00 : f32
    %105 = vector.broadcast %cst_40 : f32 to vector<8x128xf32>
    %106 = arith.addf %105, %104 : vector<8x128xf32>
    %107 = arith.divf %105, %106 : vector<8x128xf32>
    %108 = vector.extract_strided_slice %101 {offsets = [0, 128], sizes = [8, 128], strides = [1, 1]} : vector<8x512xf32> to vector<8x128xf32>
    %109 = arith.negf %108 : vector<8x128xf32>
    %110 = math.exp %109 : vector<8x128xf32>
    %cst_41 = arith.constant 1.000000e+00 : f32
    %111 = vector.broadcast %cst_41 : f32 to vector<8x128xf32>
    %112 = arith.addf %111, %110 : vector<8x128xf32>
    %113 = arith.divf %111, %112 : vector<8x128xf32>
    %114 = vector.extract_strided_slice %101 {offsets = [0, 256], sizes = [8, 128], strides = [1, 1]} : vector<8x512xf32> to vector<8x128xf32>
    %115 = math.tanh %114 : vector<8x128xf32>
    %116 = vector.extract_strided_slice %101 {offsets = [0, 384], sizes = [8, 128], strides = [1, 1]} : vector<8x512xf32> to vector<8x128xf32>
    %117 = arith.negf %116 : vector<8x128xf32>
    %118 = math.exp %117 : vector<8x128xf32>
    %cst_42 = arith.constant 1.000000e+00 : f32
    %119 = vector.broadcast %cst_42 : f32 to vector<8x128xf32>
    %120 = arith.addf %119, %118 : vector<8x128xf32>
    %121 = arith.divf %119, %120 : vector<8x128xf32>
    %122 = arith.mulf %113, %94 : vector<8x128xf32>
    %123 = arith.mulf %107, %115 : vector<8x128xf32>
    %124 = arith.addf %122, %123 : vector<8x128xf32>
    %125 = math.tanh %124 : vector<8x128xf32>
    %126 = arith.mulf %121, %125 : vector<8x128xf32>
    %c24_43 = arith.constant 24 : index
    %c0_44 = arith.constant 0 : index
    %127 = vector.load %arg13[%c24_43, %c0_44] : memref<64x128xf32, #tpu.memory_space<vmem>>, vector<8x128xf32>
    tpu.vector_store %arg13[%c24_43, %c0_44], %126 {strides = array<i32>} : memref<64x128xf32, #tpu.memory_space<vmem>>, vector<8x128xf32>,
    %c32 = arith.constant 32 : index
    %c0_45 = arith.constant 0 : index
    %128 = vector.load %arg12[%c32, %c0_45] : memref<64x512xf32, #tpu.memory_space<vmem>>, vector<8x512xf32>
    %c0_46 = arith.constant 0 : index
    %c0_47 = arith.constant 0 : index
    %129 = vector.load %arg4[%c0_46, %c0_47] : memref<128x512xf32, #tpu.memory_space<vmem>>, vector<128x512xf32>
    %cst_48 = arith.constant dense<0.000000e+00> : vector<8x512xf32>
    %130 = tpu.matmul %126, %129, %cst_48 {dimension_numbers = #tpu.dot_dimension_numbers<[1], [0], [0], [1], [0, 0, 1, 1], [], []>} : vector<8x128xf32>, vector<128x512xf32>, vector<8x512xf32> -> vector<8x512xf32>
    %131 = arith.addf %128, %130 : vector<8x512xf32>
    %132 = vector.extract_strided_slice %131 {offsets = [0, 0], sizes = [8, 128], strides = [1, 1]} : vector<8x512xf32> to vector<8x128xf32>
    %133 = arith.negf %132 : vector<8x128xf32>
    %134 = math.exp %133 : vector<8x128xf32>
    %cst_49 = arith.constant 1.000000e+00 : f32
    %135 = vector.broadcast %cst_49 : f32 to vector<8x128xf32>
    %136 = arith.addf %135, %134 : vector<8x128xf32>
    %137 = arith.divf %135, %136 : vector<8x128xf32>
    %138 = vector.extract_strided_slice %131 {offsets = [0, 128], sizes = [8, 128], strides = [1, 1]} : vector<8x512xf32> to vector<8x128xf32>
    %139 = arith.negf %138 : vector<8x128xf32>
    %140 = math.exp %139 : vector<8x128xf32>
    %cst_50 = arith.constant 1.000000e+00 : f32
    %141 = vector.broadcast %cst_50 : f32 to vector<8x128xf32>
    %142 = arith.addf %141, %140 : vector<8x128xf32>
    %143 = arith.divf %141, %142 : vector<8x128xf32>
    %144 = vector.extract_strided_slice %131 {offsets = [0, 256], sizes = [8, 128], strides = [1, 1]} : vector<8x512xf32> to vector<8x128xf32>
    %145 = math.tanh %144 : vector<8x128xf32>
    %146 = vector.extract_strided_slice %131 {offsets = [0, 384], sizes = [8, 128], strides = [1, 1]} : vector<8x512xf32> to vector<8x128xf32>
    %147 = arith.negf %146 : vector<8x128xf32>
    %148 = math.exp %147 : vector<8x128xf32>
    %cst_51 = arith.constant 1.000000e+00 : f32
    %149 = vector.broadcast %cst_51 : f32 to vector<8x128xf32>
    %150 = arith.addf %149, %148 : vector<8x128xf32>
    %151 = arith.divf %149, %150 : vector<8x128xf32>
    %152 = arith.mulf %143, %124 : vector<8x128xf32>
    %153 = arith.mulf %137, %145 : vector<8x128xf32>
    %154 = arith.addf %152, %153 : vector<8x128xf32>
    %155 = math.tanh %154 : vector<8x128xf32>
    %156 = arith.mulf %151, %155 : vector<8x128xf32>
    %c32_52 = arith.constant 32 : index
    %c0_53 = arith.constant 0 : index
    %157 = vector.load %arg13[%c32_52, %c0_53] : memref<64x128xf32, #tpu.memory_space<vmem>>, vector<8x128xf32>
    tpu.vector_store %arg13[%c32_52, %c0_53], %156 {strides = array<i32>} : memref<64x128xf32, #tpu.memory_space<vmem>>, vector<8x128xf32>,
    %c40 = arith.constant 40 : index
    %c0_54 = arith.constant 0 : index
    %158 = vector.load %arg12[%c40, %c0_54] : memref<64x512xf32, #tpu.memory_space<vmem>>, vector<8x512xf32>
    %c0_55 = arith.constant 0 : index
    %c0_56 = arith.constant 0 : index
    %159 = vector.load %arg4[%c0_55, %c0_56] : memref<128x512xf32, #tpu.memory_space<vmem>>, vector<128x512xf32>
    %cst_57 = arith.constant dense<0.000000e+00> : vector<8x512xf32>
    %160 = tpu.matmul %156, %159, %cst_57 {dimension_numbers = #tpu.dot_dimension_numbers<[1], [0], [0], [1], [0, 0, 1, 1], [], []>} : vector<8x128xf32>, vector<128x512xf32>, vector<8x512xf32> -> vector<8x512xf32>
    %161 = arith.addf %158, %160 : vector<8x512xf32>
    %162 = vector.extract_strided_slice %161 {offsets = [0, 0], sizes = [8, 128], strides = [1, 1]} : vector<8x512xf32> to vector<8x128xf32>
    %163 = arith.negf %162 : vector<8x128xf32>
    %164 = math.exp %163 : vector<8x128xf32>
    %cst_58 = arith.constant 1.000000e+00 : f32
    %165 = vector.broadcast %cst_58 : f32 to vector<8x128xf32>
    %166 = arith.addf %165, %164 : vector<8x128xf32>
    %167 = arith.divf %165, %166 : vector<8x128xf32>
    %168 = vector.extract_strided_slice %161 {offsets = [0, 128], sizes = [8, 128], strides = [1, 1]} : vector<8x512xf32> to vector<8x128xf32>
    %169 = arith.negf %168 : vector<8x128xf32>
    %170 = math.exp %169 : vector<8x128xf32>
    %cst_59 = arith.constant 1.000000e+00 : f32
    %171 = vector.broadcast %cst_59 : f32 to vector<8x128xf32>
    %172 = arith.addf %171, %170 : vector<8x128xf32>
    %173 = arith.divf %171, %172 : vector<8x128xf32>
    %174 = vector.extract_strided_slice %161 {offsets = [0, 256], sizes = [8, 128], strides = [1, 1]} : vector<8x512xf32> to vector<8x128xf32>
    %175 = math.tanh %174 : vector<8x128xf32>
    %176 = vector.extract_strided_slice %161 {offsets = [0, 384], sizes = [8, 128], strides = [1, 1]} : vector<8x512xf32> to vector<8x128xf32>
    %177 = arith.negf %176 : vector<8x128xf32>
    %178 = math.exp %177 : vector<8x128xf32>
    %cst_60 = arith.constant 1.000000e+00 : f32
    %179 = vector.broadcast %cst_60 : f32 to vector<8x128xf32>
    %180 = arith.addf %179, %178 : vector<8x128xf32>
    %181 = arith.divf %179, %180 : vector<8x128xf32>
    %182 = arith.mulf %173, %154 : vector<8x128xf32>
    %183 = arith.mulf %167, %175 : vector<8x128xf32>
    %184 = arith.addf %182, %183 : vector<8x128xf32>
    %185 = math.tanh %184 : vector<8x128xf32>
    %186 = arith.mulf %181, %185 : vector<8x128xf32>
    %c40_61 = arith.constant 40 : index
    %c0_62 = arith.constant 0 : index
    %187 = vector.load %arg13[%c40_61, %c0_62] : memref<64x128xf32, #tpu.memory_space<vmem>>, vector<8x128xf32>
    tpu.vector_store %arg13[%c40_61, %c0_62], %186 {strides = array<i32>} : memref<64x128xf32, #tpu.memory_space<vmem>>, vector<8x128xf32>,
    %c48 = arith.constant 48 : index
    %c0_63 = arith.constant 0 : index
    %188 = vector.load %arg12[%c48, %c0_63] : memref<64x512xf32, #tpu.memory_space<vmem>>, vector<8x512xf32>
    %c0_64 = arith.constant 0 : index
    %c0_65 = arith.constant 0 : index
    %189 = vector.load %arg4[%c0_64, %c0_65] : memref<128x512xf32, #tpu.memory_space<vmem>>, vector<128x512xf32>
    %cst_66 = arith.constant dense<0.000000e+00> : vector<8x512xf32>
    %190 = tpu.matmul %186, %189, %cst_66 {dimension_numbers = #tpu.dot_dimension_numbers<[1], [0], [0], [1], [0, 0, 1, 1], [], []>} : vector<8x128xf32>, vector<128x512xf32>, vector<8x512xf32> -> vector<8x512xf32>
    %191 = arith.addf %188, %190 : vector<8x512xf32>
    %192 = vector.extract_strided_slice %191 {offsets = [0, 0], sizes = [8, 128], strides = [1, 1]} : vector<8x512xf32> to vector<8x128xf32>
    %193 = arith.negf %192 : vector<8x128xf32>
    %194 = math.exp %193 : vector<8x128xf32>
    %cst_67 = arith.constant 1.000000e+00 : f32
    %195 = vector.broadcast %cst_67 : f32 to vector<8x128xf32>
    %196 = arith.addf %195, %194 : vector<8x128xf32>
    %197 = arith.divf %195, %196 : vector<8x128xf32>
    %198 = vector.extract_strided_slice %191 {offsets = [0, 128], sizes = [8, 128], strides = [1, 1]} : vector<8x512xf32> to vector<8x128xf32>
    %199 = arith.negf %198 : vector<8x128xf32>
    %200 = math.exp %199 : vector<8x128xf32>
    %cst_68 = arith.constant 1.000000e+00 : f32
    %201 = vector.broadcast %cst_68 : f32 to vector<8x128xf32>
    %202 = arith.addf %201, %200 : vector<8x128xf32>
    %203 = arith.divf %201, %202 : vector<8x128xf32>
    %204 = vector.extract_strided_slice %191 {offsets = [0, 256], sizes = [8, 128], strides = [1, 1]} : vector<8x512xf32> to vector<8x128xf32>
    %205 = math.tanh %204 : vector<8x128xf32>
    %206 = vector.extract_strided_slice %191 {offsets = [0, 384], sizes = [8, 128], strides = [1, 1]} : vector<8x512xf32> to vector<8x128xf32>
    %207 = arith.negf %206 : vector<8x128xf32>
    %208 = math.exp %207 : vector<8x128xf32>
    %cst_69 = arith.constant 1.000000e+00 : f32
    %209 = vector.broadcast %cst_69 : f32 to vector<8x128xf32>
    %210 = arith.addf %209, %208 : vector<8x128xf32>
    %211 = arith.divf %209, %210 : vector<8x128xf32>
    %212 = arith.mulf %203, %184 : vector<8x128xf32>
    %213 = arith.mulf %197, %205 : vector<8x128xf32>
    %214 = arith.addf %212, %213 : vector<8x128xf32>
    %215 = math.tanh %214 : vector<8x128xf32>
    %216 = arith.mulf %211, %215 : vector<8x128xf32>
    %c48_70 = arith.constant 48 : index
    %c0_71 = arith.constant 0 : index
    %217 = vector.load %arg13[%c48_70, %c0_71] : memref<64x128xf32, #tpu.memory_space<vmem>>, vector<8x128xf32>
    tpu.vector_store %arg13[%c48_70, %c0_71], %216 {strides = array<i32>} : memref<64x128xf32, #tpu.memory_space<vmem>>, vector<8x128xf32>,
    %c56 = arith.constant 56 : index
    %c0_72 = arith.constant 0 : index
    %218 = vector.load %arg12[%c56, %c0_72] : memref<64x512xf32, #tpu.memory_space<vmem>>, vector<8x512xf32>
    %c0_73 = arith.constant 0 : index
    %c0_74 = arith.constant 0 : index
    %219 = vector.load %arg4[%c0_73, %c0_74] : memref<128x512xf32, #tpu.memory_space<vmem>>, vector<128x512xf32>
    %cst_75 = arith.constant dense<0.000000e+00> : vector<8x512xf32>
    %220 = tpu.matmul %216, %219, %cst_75 {dimension_numbers = #tpu.dot_dimension_numbers<[1], [0], [0], [1], [0, 0, 1, 1], [], []>} : vector<8x128xf32>, vector<128x512xf32>, vector<8x512xf32> -> vector<8x512xf32>
    %221 = arith.addf %218, %220 : vector<8x512xf32>
    %222 = vector.extract_strided_slice %221 {offsets = [0, 0], sizes = [8, 128], strides = [1, 1]} : vector<8x512xf32> to vector<8x128xf32>
    %223 = arith.negf %222 : vector<8x128xf32>
    %224 = math.exp %223 : vector<8x128xf32>
    %cst_76 = arith.constant 1.000000e+00 : f32
    %225 = vector.broadcast %cst_76 : f32 to vector<8x128xf32>
    %226 = arith.addf %225, %224 : vector<8x128xf32>
    %227 = arith.divf %225, %226 : vector<8x128xf32>
    %228 = vector.extract_strided_slice %221 {offsets = [0, 128], sizes = [8, 128], strides = [1, 1]} : vector<8x512xf32> to vector<8x128xf32>
    %229 = arith.negf %228 : vector<8x128xf32>
    %230 = math.exp %229 : vector<8x128xf32>
    %cst_77 = arith.constant 1.000000e+00 : f32
    %231 = vector.broadcast %cst_77 : f32 to vector<8x128xf32>
    %232 = arith.addf %231, %230 : vector<8x128xf32>
    %233 = arith.divf %231, %232 : vector<8x128xf32>
    %234 = vector.extract_strided_slice %221 {offsets = [0, 256], sizes = [8, 128], strides = [1, 1]} : vector<8x512xf32> to vector<8x128xf32>
    %235 = math.tanh %234 : vector<8x128xf32>
    %236 = vector.extract_strided_slice %221 {offsets = [0, 384], sizes = [8, 128], strides = [1, 1]} : vector<8x512xf32> to vector<8x128xf32>
    %237 = arith.negf %236 : vector<8x128xf32>
    %238 = math.exp %237 : vector<8x128xf32>
    %cst_78 = arith.constant 1.000000e+00 : f32
    %239 = vector.broadcast %cst_78 : f32 to vector<8x128xf32>
    %240 = arith.addf %239, %238 : vector<8x128xf32>
    %241 = arith.divf %239, %240 : vector<8x128xf32>
    %242 = arith.mulf %233, %214 : vector<8x128xf32>
    %243 = arith.mulf %227, %235 : vector<8x128xf32>
    %244 = arith.addf %242, %243 : vector<8x128xf32>
    %245 = math.tanh %244 : vector<8x128xf32>
    %246 = arith.mulf %241, %245 : vector<8x128xf32>
    %c56_79 = arith.constant 56 : index
    %c0_80 = arith.constant 0 : index
    %247 = vector.load %arg13[%c56_79, %c0_80] : memref<64x128xf32, #tpu.memory_space<vmem>>, vector<8x128xf32>
    tpu.vector_store %arg13[%c56_79, %c0_80], %246 {strides = array<i32>} : memref<64x128xf32, #tpu.memory_space<vmem>>, vector<8x128xf32>,
    %c0_81 = arith.constant 0 : index
    %c0_82 = arith.constant 0 : index
    %248 = vector.load %arg13[%c0_81, %c0_82] : memref<64x128xf32, #tpu.memory_space<vmem>>, vector<64x128xf32>
    %c0_83 = arith.constant 0 : index
    %c0_84 = arith.constant 0 : index
    %249 = vector.load %arg6[%c0_83, %c0_84] : memref<128x512xf32, #tpu.memory_space<vmem>>, vector<128x512xf32>
    %cst_85 = arith.constant dense<0.000000e+00> : vector<64x512xf32>
    %250 = tpu.matmul %248, %249, %cst_85 {dimension_numbers = #tpu.dot_dimension_numbers<[1], [0], [0], [1], [0, 0, 1, 1], [], []>} : vector<64x128xf32>, vector<128x512xf32>, vector<64x512xf32> -> vector<64x512xf32>
    %c0_86 = arith.constant 0 : index
    %c0_87 = arith.constant 0 : index
    %251 = vector.load %arg8[%c0_86, %c0_87] : memref<1x512xf32, #tpu.memory_space<vmem>>, vector<1x512xf32>
    %252 = vector.broadcast %251 : vector<1x512xf32> to vector<64x512xf32>
    %253 = arith.addf %250, %252 : vector<64x512xf32>
    %c0_88 = arith.constant 0 : index
    %c0_89 = arith.constant 0 : index
    %254 = vector.load %arg12[%c0_88, %c0_89] : memref<64x512xf32, #tpu.memory_space<vmem>>, vector<64x512xf32>
    tpu.vector_store %arg12[%c0_88, %c0_89], %253 {strides = array<i32>} : memref<64x512xf32, #tpu.memory_space<vmem>>, vector<64x512xf32>,
    %cst_90 = arith.constant 0.000000e+00 : f32
    %255 = vector.broadcast %cst_90 : f32 to vector<8x128xf32>
    %c0_91 = arith.constant 0 : index
    %c0_92 = arith.constant 0 : index
    %256 = vector.load %arg12[%c0_91, %c0_92] : memref<64x512xf32, #tpu.memory_space<vmem>>, vector<8x512xf32>
    %c0_93 = arith.constant 0 : index
    %c0_94 = arith.constant 0 : index
    %257 = vector.load %arg7[%c0_93, %c0_94] : memref<128x512xf32, #tpu.memory_space<vmem>>, vector<128x512xf32>
    %cst_95 = arith.constant dense<0.000000e+00> : vector<8x512xf32>
    %258 = tpu.matmul %255, %257, %cst_95 {dimension_numbers = #tpu.dot_dimension_numbers<[1], [0], [0], [1], [0, 0, 1, 1], [], []>} : vector<8x128xf32>, vector<128x512xf32>, vector<8x512xf32> -> vector<8x512xf32>
    %259 = arith.addf %256, %258 : vector<8x512xf32>
    %260 = vector.extract_strided_slice %259 {offsets = [0, 0], sizes = [8, 128], strides = [1, 1]} : vector<8x512xf32> to vector<8x128xf32>
    %261 = arith.negf %260 : vector<8x128xf32>
    %262 = math.exp %261 : vector<8x128xf32>
    %cst_96 = arith.constant 1.000000e+00 : f32
    %263 = vector.broadcast %cst_96 : f32 to vector<8x128xf32>
    %264 = arith.addf %263, %262 : vector<8x128xf32>
    %265 = arith.divf %263, %264 : vector<8x128xf32>
    %266 = vector.extract_strided_slice %259 {offsets = [0, 128], sizes = [8, 128], strides = [1, 1]} : vector<8x512xf32> to vector<8x128xf32>
    %267 = arith.negf %266 : vector<8x128xf32>
    %268 = math.exp %267 : vector<8x128xf32>
    %cst_97 = arith.constant 1.000000e+00 : f32
    %269 = vector.broadcast %cst_97 : f32 to vector<8x128xf32>
    %270 = arith.addf %269, %268 : vector<8x128xf32>
    %271 = arith.divf %269, %270 : vector<8x128xf32>
    %272 = vector.extract_strided_slice %259 {offsets = [0, 256], sizes = [8, 128], strides = [1, 1]} : vector<8x512xf32> to vector<8x128xf32>
    %273 = math.tanh %272 : vector<8x128xf32>
    %274 = vector.extract_strided_slice %259 {offsets = [0, 384], sizes = [8, 128], strides = [1, 1]} : vector<8x512xf32> to vector<8x128xf32>
    %275 = arith.negf %274 : vector<8x128xf32>
    %276 = math.exp %275 : vector<8x128xf32>
    %cst_98 = arith.constant 1.000000e+00 : f32
    %277 = vector.broadcast %cst_98 : f32 to vector<8x128xf32>
    %278 = arith.addf %277, %276 : vector<8x128xf32>
    %279 = arith.divf %277, %278 : vector<8x128xf32>
    %280 = arith.mulf %271, %255 : vector<8x128xf32>
    %281 = arith.mulf %265, %273 : vector<8x128xf32>
    %282 = arith.addf %280, %281 : vector<8x128xf32>
    %283 = math.tanh %282 : vector<8x128xf32>
    %284 = arith.mulf %279, %283 : vector<8x128xf32>
    %c0_99 = arith.constant 0 : index
    %c0_100 = arith.constant 0 : index
    %285 = vector.load %arg13[%c0_99, %c0_100] : memref<64x128xf32, #tpu.memory_space<vmem>>, vector<8x128xf32>
    tpu.vector_store %arg13[%c0_99, %c0_100], %284 {strides = array<i32>} : memref<64x128xf32, #tpu.memory_space<vmem>>, vector<8x128xf32>,
    %c8_101 = arith.constant 8 : index
    %c0_102 = arith.constant 0 : index
    %286 = vector.load %arg12[%c8_101, %c0_102] : memref<64x512xf32, #tpu.memory_space<vmem>>, vector<8x512xf32>
    %c0_103 = arith.constant 0 : index
    %c0_104 = arith.constant 0 : index
    %287 = vector.load %arg7[%c0_103, %c0_104] : memref<128x512xf32, #tpu.memory_space<vmem>>, vector<128x512xf32>
    %cst_105 = arith.constant dense<0.000000e+00> : vector<8x512xf32>
    %288 = tpu.matmul %284, %287, %cst_105 {dimension_numbers = #tpu.dot_dimension_numbers<[1], [0], [0], [1], [0, 0, 1, 1], [], []>} : vector<8x128xf32>, vector<128x512xf32>, vector<8x512xf32> -> vector<8x512xf32>
    %289 = arith.addf %286, %288 : vector<8x512xf32>
    %290 = vector.extract_strided_slice %289 {offsets = [0, 0], sizes = [8, 128], strides = [1, 1]} : vector<8x512xf32> to vector<8x128xf32>
    %291 = arith.negf %290 : vector<8x128xf32>
    %292 = math.exp %291 : vector<8x128xf32>
    %cst_106 = arith.constant 1.000000e+00 : f32
    %293 = vector.broadcast %cst_106 : f32 to vector<8x128xf32>
    %294 = arith.addf %293, %292 : vector<8x128xf32>
    %295 = arith.divf %293, %294 : vector<8x128xf32>
    %296 = vector.extract_strided_slice %289 {offsets = [0, 128], sizes = [8, 128], strides = [1, 1]} : vector<8x512xf32> to vector<8x128xf32>
    %297 = arith.negf %296 : vector<8x128xf32>
    %298 = math.exp %297 : vector<8x128xf32>
    %cst_107 = arith.constant 1.000000e+00 : f32
    %299 = vector.broadcast %cst_107 : f32 to vector<8x128xf32>
    %300 = arith.addf %299, %298 : vector<8x128xf32>
    %301 = arith.divf %299, %300 : vector<8x128xf32>
    %302 = vector.extract_strided_slice %289 {offsets = [0, 256], sizes = [8, 128], strides = [1, 1]} : vector<8x512xf32> to vector<8x128xf32>
    %303 = math.tanh %302 : vector<8x128xf32>
    %304 = vector.extract_strided_slice %289 {offsets = [0, 384], sizes = [8, 128], strides = [1, 1]} : vector<8x512xf32> to vector<8x128xf32>
    %305 = arith.negf %304 : vector<8x128xf32>
    %306 = math.exp %305 : vector<8x128xf32>
    %cst_108 = arith.constant 1.000000e+00 : f32
    %307 = vector.broadcast %cst_108 : f32 to vector<8x128xf32>
    %308 = arith.addf %307, %306 : vector<8x128xf32>
    %309 = arith.divf %307, %308 : vector<8x128xf32>
    %310 = arith.mulf %301, %282 : vector<8x128xf32>
    %311 = arith.mulf %295, %303 : vector<8x128xf32>
    %312 = arith.addf %310, %311 : vector<8x128xf32>
    %313 = math.tanh %312 : vector<8x128xf32>
    %314 = arith.mulf %309, %313 : vector<8x128xf32>
    %c8_109 = arith.constant 8 : index
    %c0_110 = arith.constant 0 : index
    %315 = vector.load %arg13[%c8_109, %c0_110] : memref<64x128xf32, #tpu.memory_space<vmem>>, vector<8x128xf32>
    tpu.vector_store %arg13[%c8_109, %c0_110], %314 {strides = array<i32>} : memref<64x128xf32, #tpu.memory_space<vmem>>, vector<8x128xf32>,
    %c16_111 = arith.constant 16 : index
    %c0_112 = arith.constant 0 : index
    %316 = vector.load %arg12[%c16_111, %c0_112] : memref<64x512xf32, #tpu.memory_space<vmem>>, vector<8x512xf32>
    %c0_113 = arith.constant 0 : index
    %c0_114 = arith.constant 0 : index
    %317 = vector.load %arg7[%c0_113, %c0_114] : memref<128x512xf32, #tpu.memory_space<vmem>>, vector<128x512xf32>
    %cst_115 = arith.constant dense<0.000000e+00> : vector<8x512xf32>
    %318 = tpu.matmul %314, %317, %cst_115 {dimension_numbers = #tpu.dot_dimension_numbers<[1], [0], [0], [1], [0, 0, 1, 1], [], []>} : vector<8x128xf32>, vector<128x512xf32>, vector<8x512xf32> -> vector<8x512xf32>
    %319 = arith.addf %316, %318 : vector<8x512xf32>
    %320 = vector.extract_strided_slice %319 {offsets = [0, 0], sizes = [8, 128], strides = [1, 1]} : vector<8x512xf32> to vector<8x128xf32>
    %321 = arith.negf %320 : vector<8x128xf32>
    %322 = math.exp %321 : vector<8x128xf32>
    %cst_116 = arith.constant 1.000000e+00 : f32
    %323 = vector.broadcast %cst_116 : f32 to vector<8x128xf32>
    %324 = arith.addf %323, %322 : vector<8x128xf32>
    %325 = arith.divf %323, %324 : vector<8x128xf32>
    %326 = vector.extract_strided_slice %319 {offsets = [0, 128], sizes = [8, 128], strides = [1, 1]} : vector<8x512xf32> to vector<8x128xf32>
    %327 = arith.negf %326 : vector<8x128xf32>
    %328 = math.exp %327 : vector<8x128xf32>
    %cst_117 = arith.constant 1.000000e+00 : f32
    %329 = vector.broadcast %cst_117 : f32 to vector<8x128xf32>
    %330 = arith.addf %329, %328 : vector<8x128xf32>
    %331 = arith.divf %329, %330 : vector<8x128xf32>
    %332 = vector.extract_strided_slice %319 {offsets = [0, 256], sizes = [8, 128], strides = [1, 1]} : vector<8x512xf32> to vector<8x128xf32>
    %333 = math.tanh %332 : vector<8x128xf32>
    %334 = vector.extract_strided_slice %319 {offsets = [0, 384], sizes = [8, 128], strides = [1, 1]} : vector<8x512xf32> to vector<8x128xf32>
    %335 = arith.negf %334 : vector<8x128xf32>
    %336 = math.exp %335 : vector<8x128xf32>
    %cst_118 = arith.constant 1.000000e+00 : f32
    %337 = vector.broadcast %cst_118 : f32 to vector<8x128xf32>
    %338 = arith.addf %337, %336 : vector<8x128xf32>
    %339 = arith.divf %337, %338 : vector<8x128xf32>
    %340 = arith.mulf %331, %312 : vector<8x128xf32>
    %341 = arith.mulf %325, %333 : vector<8x128xf32>
    %342 = arith.addf %340, %341 : vector<8x128xf32>
    %343 = math.tanh %342 : vector<8x128xf32>
    %344 = arith.mulf %339, %343 : vector<8x128xf32>
    %c16_119 = arith.constant 16 : index
    %c0_120 = arith.constant 0 : index
    %345 = vector.load %arg13[%c16_119, %c0_120] : memref<64x128xf32, #tpu.memory_space<vmem>>, vector<8x128xf32>
    tpu.vector_store %arg13[%c16_119, %c0_120], %344 {strides = array<i32>} : memref<64x128xf32, #tpu.memory_space<vmem>>, vector<8x128xf32>,
    %c24_121 = arith.constant 24 : index
    %c0_122 = arith.constant 0 : index
    %346 = vector.load %arg12[%c24_121, %c0_122] : memref<64x512xf32, #tpu.memory_space<vmem>>, vector<8x512xf32>
    %c0_123 = arith.constant 0 : index
    %c0_124 = arith.constant 0 : index
    %347 = vector.load %arg7[%c0_123, %c0_124] : memref<128x512xf32, #tpu.memory_space<vmem>>, vector<128x512xf32>
    %cst_125 = arith.constant dense<0.000000e+00> : vector<8x512xf32>
    %348 = tpu.matmul %344, %347, %cst_125 {dimension_numbers = #tpu.dot_dimension_numbers<[1], [0], [0], [1], [0, 0, 1, 1], [], []>} : vector<8x128xf32>, vector<128x512xf32>, vector<8x512xf32> -> vector<8x512xf32>
    %349 = arith.addf %346, %348 : vector<8x512xf32>
    %350 = vector.extract_strided_slice %349 {offsets = [0, 0], sizes = [8, 128], strides = [1, 1]} : vector<8x512xf32> to vector<8x128xf32>
    %351 = arith.negf %350 : vector<8x128xf32>
    %352 = math.exp %351 : vector<8x128xf32>
    %cst_126 = arith.constant 1.000000e+00 : f32
    %353 = vector.broadcast %cst_126 : f32 to vector<8x128xf32>
    %354 = arith.addf %353, %352 : vector<8x128xf32>
    %355 = arith.divf %353, %354 : vector<8x128xf32>
    %356 = vector.extract_strided_slice %349 {offsets = [0, 128], sizes = [8, 128], strides = [1, 1]} : vector<8x512xf32> to vector<8x128xf32>
    %357 = arith.negf %356 : vector<8x128xf32>
    %358 = math.exp %357 : vector<8x128xf32>
    %cst_127 = arith.constant 1.000000e+00 : f32
    %359 = vector.broadcast %cst_127 : f32 to vector<8x128xf32>
    %360 = arith.addf %359, %358 : vector<8x128xf32>
    %361 = arith.divf %359, %360 : vector<8x128xf32>
    %362 = vector.extract_strided_slice %349 {offsets = [0, 256], sizes = [8, 128], strides = [1, 1]} : vector<8x512xf32> to vector<8x128xf32>
    %363 = math.tanh %362 : vector<8x128xf32>
    %364 = vector.extract_strided_slice %349 {offsets = [0, 384], sizes = [8, 128], strides = [1, 1]} : vector<8x512xf32> to vector<8x128xf32>
    %365 = arith.negf %364 : vector<8x128xf32>
    %366 = math.exp %365 : vector<8x128xf32>
    %cst_128 = arith.constant 1.000000e+00 : f32
    %367 = vector.broadcast %cst_128 : f32 to vector<8x128xf32>
    %368 = arith.addf %367, %366 : vector<8x128xf32>
    %369 = arith.divf %367, %368 : vector<8x128xf32>
    %370 = arith.mulf %361, %342 : vector<8x128xf32>
    %371 = arith.mulf %355, %363 : vector<8x128xf32>
    %372 = arith.addf %370, %371 : vector<8x128xf32>
    %373 = math.tanh %372 : vector<8x128xf32>
    %374 = arith.mulf %369, %373 : vector<8x128xf32>
    %c24_129 = arith.constant 24 : index
    %c0_130 = arith.constant 0 : index
    %375 = vector.load %arg13[%c24_129, %c0_130] : memref<64x128xf32, #tpu.memory_space<vmem>>, vector<8x128xf32>
    tpu.vector_store %arg13[%c24_129, %c0_130], %374 {strides = array<i32>} : memref<64x128xf32, #tpu.memory_space<vmem>>, vector<8x128xf32>,
    %c32_131 = arith.constant 32 : index
    %c0_132 = arith.constant 0 : index
    %376 = vector.load %arg12[%c32_131, %c0_132] : memref<64x512xf32, #tpu.memory_space<vmem>>, vector<8x512xf32>
    %c0_133 = arith.constant 0 : index
    %c0_134 = arith.constant 0 : index
    %377 = vector.load %arg7[%c0_133, %c0_134] : memref<128x512xf32, #tpu.memory_space<vmem>>, vector<128x512xf32>
    %cst_135 = arith.constant dense<0.000000e+00> : vector<8x512xf32>
    %378 = tpu.matmul %374, %377, %cst_135 {dimension_numbers = #tpu.dot_dimension_numbers<[1], [0], [0], [1], [0, 0, 1, 1], [], []>} : vector<8x128xf32>, vector<128x512xf32>, vector<8x512xf32> -> vector<8x512xf32>
    %379 = arith.addf %376, %378 : vector<8x512xf32>
    %380 = vector.extract_strided_slice %379 {offsets = [0, 0], sizes = [8, 128], strides = [1, 1]} : vector<8x512xf32> to vector<8x128xf32>
    %381 = arith.negf %380 : vector<8x128xf32>
    %382 = math.exp %381 : vector<8x128xf32>
    %cst_136 = arith.constant 1.000000e+00 : f32
    %383 = vector.broadcast %cst_136 : f32 to vector<8x128xf32>
    %384 = arith.addf %383, %382 : vector<8x128xf32>
    %385 = arith.divf %383, %384 : vector<8x128xf32>
    %386 = vector.extract_strided_slice %379 {offsets = [0, 128], sizes = [8, 128], strides = [1, 1]} : vector<8x512xf32> to vector<8x128xf32>
    %387 = arith.negf %386 : vector<8x128xf32>
    %388 = math.exp %387 : vector<8x128xf32>
    %cst_137 = arith.constant 1.000000e+00 : f32
    %389 = vector.broadcast %cst_137 : f32 to vector<8x128xf32>
    %390 = arith.addf %389, %388 : vector<8x128xf32>
    %391 = arith.divf %389, %390 : vector<8x128xf32>
    %392 = vector.extract_strided_slice %379 {offsets = [0, 256], sizes = [8, 128], strides = [1, 1]} : vector<8x512xf32> to vector<8x128xf32>
    %393 = math.tanh %392 : vector<8x128xf32>
    %394 = vector.extract_strided_slice %379 {offsets = [0, 384], sizes = [8, 128], strides = [1, 1]} : vector<8x512xf32> to vector<8x128xf32>
    %395 = arith.negf %394 : vector<8x128xf32>
    %396 = math.exp %395 : vector<8x128xf32>
    %cst_138 = arith.constant 1.000000e+00 : f32
    %397 = vector.broadcast %cst_138 : f32 to vector<8x128xf32>
    %398 = arith.addf %397, %396 : vector<8x128xf32>
    %399 = arith.divf %397, %398 : vector<8x128xf32>
    %400 = arith.mulf %391, %372 : vector<8x128xf32>
    %401 = arith.mulf %385, %393 : vector<8x128xf32>
    %402 = arith.addf %400, %401 : vector<8x128xf32>
    %403 = math.tanh %402 : vector<8x128xf32>
    %404 = arith.mulf %399, %403 : vector<8x128xf32>
    %c32_139 = arith.constant 32 : index
    %c0_140 = arith.constant 0 : index
    %405 = vector.load %arg13[%c32_139, %c0_140] : memref<64x128xf32, #tpu.memory_space<vmem>>, vector<8x128xf32>
    tpu.vector_store %arg13[%c32_139, %c0_140], %404 {strides = array<i32>} : memref<64x128xf32, #tpu.memory_space<vmem>>, vector<8x128xf32>,
    %c40_141 = arith.constant 40 : index
    %c0_142 = arith.constant 0 : index
    %406 = vector.load %arg12[%c40_141, %c0_142] : memref<64x512xf32, #tpu.memory_space<vmem>>, vector<8x512xf32>
    %c0_143 = arith.constant 0 : index
    %c0_144 = arith.constant 0 : index
    %407 = vector.load %arg7[%c0_143, %c0_144] : memref<128x512xf32, #tpu.memory_space<vmem>>, vector<128x512xf32>
    %cst_145 = arith.constant dense<0.000000e+00> : vector<8x512xf32>
    %408 = tpu.matmul %404, %407, %cst_145 {dimension_numbers = #tpu.dot_dimension_numbers<[1], [0], [0], [1], [0, 0, 1, 1], [], []>} : vector<8x128xf32>, vector<128x512xf32>, vector<8x512xf32> -> vector<8x512xf32>
    %409 = arith.addf %406, %408 : vector<8x512xf32>
    %410 = vector.extract_strided_slice %409 {offsets = [0, 0], sizes = [8, 128], strides = [1, 1]} : vector<8x512xf32> to vector<8x128xf32>
    %411 = arith.negf %410 : vector<8x128xf32>
    %412 = math.exp %411 : vector<8x128xf32>
    %cst_146 = arith.constant 1.000000e+00 : f32
    %413 = vector.broadcast %cst_146 : f32 to vector<8x128xf32>
    %414 = arith.addf %413, %412 : vector<8x128xf32>
    %415 = arith.divf %413, %414 : vector<8x128xf32>
    %416 = vector.extract_strided_slice %409 {offsets = [0, 128], sizes = [8, 128], strides = [1, 1]} : vector<8x512xf32> to vector<8x128xf32>
    %417 = arith.negf %416 : vector<8x128xf32>
    %418 = math.exp %417 : vector<8x128xf32>
    %cst_147 = arith.constant 1.000000e+00 : f32
    %419 = vector.broadcast %cst_147 : f32 to vector<8x128xf32>
    %420 = arith.addf %419, %418 : vector<8x128xf32>
    %421 = arith.divf %419, %420 : vector<8x128xf32>
    %422 = vector.extract_strided_slice %409 {offsets = [0, 256], sizes = [8, 128], strides = [1, 1]} : vector<8x512xf32> to vector<8x128xf32>
    %423 = math.tanh %422 : vector<8x128xf32>
    %424 = vector.extract_strided_slice %409 {offsets = [0, 384], sizes = [8, 128], strides = [1, 1]} : vector<8x512xf32> to vector<8x128xf32>
    %425 = arith.negf %424 : vector<8x128xf32>
    %426 = math.exp %425 : vector<8x128xf32>
    %cst_148 = arith.constant 1.000000e+00 : f32
    %427 = vector.broadcast %cst_148 : f32 to vector<8x128xf32>
    %428 = arith.addf %427, %426 : vector<8x128xf32>
    %429 = arith.divf %427, %428 : vector<8x128xf32>
    %430 = arith.mulf %421, %402 : vector<8x128xf32>
    %431 = arith.mulf %415, %423 : vector<8x128xf32>
    %432 = arith.addf %430, %431 : vector<8x128xf32>
    %433 = math.tanh %432 : vector<8x128xf32>
    %434 = arith.mulf %429, %433 : vector<8x128xf32>
    %c40_149 = arith.constant 40 : index
    %c0_150 = arith.constant 0 : index
    %435 = vector.load %arg13[%c40_149, %c0_150] : memref<64x128xf32, #tpu.memory_space<vmem>>, vector<8x128xf32>
    tpu.vector_store %arg13[%c40_149, %c0_150], %434 {strides = array<i32>} : memref<64x128xf32, #tpu.memory_space<vmem>>, vector<8x128xf32>,
    %c48_151 = arith.constant 48 : index
    %c0_152 = arith.constant 0 : index
    %436 = vector.load %arg12[%c48_151, %c0_152] : memref<64x512xf32, #tpu.memory_space<vmem>>, vector<8x512xf32>
    %c0_153 = arith.constant 0 : index
    %c0_154 = arith.constant 0 : index
    %437 = vector.load %arg7[%c0_153, %c0_154] : memref<128x512xf32, #tpu.memory_space<vmem>>, vector<128x512xf32>
    %cst_155 = arith.constant dense<0.000000e+00> : vector<8x512xf32>
    %438 = tpu.matmul %434, %437, %cst_155 {dimension_numbers = #tpu.dot_dimension_numbers<[1], [0], [0], [1], [0, 0, 1, 1], [], []>} : vector<8x128xf32>, vector<128x512xf32>, vector<8x512xf32> -> vector<8x512xf32>
    %439 = arith.addf %436, %438 : vector<8x512xf32>
    %440 = vector.extract_strided_slice %439 {offsets = [0, 0], sizes = [8, 128], strides = [1, 1]} : vector<8x512xf32> to vector<8x128xf32>
    %441 = arith.negf %440 : vector<8x128xf32>
    %442 = math.exp %441 : vector<8x128xf32>
    %cst_156 = arith.constant 1.000000e+00 : f32
    %443 = vector.broadcast %cst_156 : f32 to vector<8x128xf32>
    %444 = arith.addf %443, %442 : vector<8x128xf32>
    %445 = arith.divf %443, %444 : vector<8x128xf32>
    %446 = vector.extract_strided_slice %439 {offsets = [0, 128], sizes = [8, 128], strides = [1, 1]} : vector<8x512xf32> to vector<8x128xf32>
    %447 = arith.negf %446 : vector<8x128xf32>
    %448 = math.exp %447 : vector<8x128xf32>
    %cst_157 = arith.constant 1.000000e+00 : f32
    %449 = vector.broadcast %cst_157 : f32 to vector<8x128xf32>
    %450 = arith.addf %449, %448 : vector<8x128xf32>
    %451 = arith.divf %449, %450 : vector<8x128xf32>
    %452 = vector.extract_strided_slice %439 {offsets = [0, 256], sizes = [8, 128], strides = [1, 1]} : vector<8x512xf32> to vector<8x128xf32>
    %453 = math.tanh %452 : vector<8x128xf32>
    %454 = vector.extract_strided_slice %439 {offsets = [0, 384], sizes = [8, 128], strides = [1, 1]} : vector<8x512xf32> to vector<8x128xf32>
    %455 = arith.negf %454 : vector<8x128xf32>
    %456 = math.exp %455 : vector<8x128xf32>
    %cst_158 = arith.constant 1.000000e+00 : f32
    %457 = vector.broadcast %cst_158 : f32 to vector<8x128xf32>
    %458 = arith.addf %457, %456 : vector<8x128xf32>
    %459 = arith.divf %457, %458 : vector<8x128xf32>
    %460 = arith.mulf %451, %432 : vector<8x128xf32>
    %461 = arith.mulf %445, %453 : vector<8x128xf32>
    %462 = arith.addf %460, %461 : vector<8x128xf32>
    %463 = math.tanh %462 : vector<8x128xf32>
    %464 = arith.mulf %459, %463 : vector<8x128xf32>
    %c48_159 = arith.constant 48 : index
    %c0_160 = arith.constant 0 : index
    %465 = vector.load %arg13[%c48_159, %c0_160] : memref<64x128xf32, #tpu.memory_space<vmem>>, vector<8x128xf32>
    tpu.vector_store %arg13[%c48_159, %c0_160], %464 {strides = array<i32>} : memref<64x128xf32, #tpu.memory_space<vmem>>, vector<8x128xf32>,
    %c56_161 = arith.constant 56 : index
    %c0_162 = arith.constant 0 : index
    %466 = vector.load %arg12[%c56_161, %c0_162] : memref<64x512xf32, #tpu.memory_space<vmem>>, vector<8x512xf32>
    %c0_163 = arith.constant 0 : index
    %c0_164 = arith.constant 0 : index
    %467 = vector.load %arg7[%c0_163, %c0_164] : memref<128x512xf32, #tpu.memory_space<vmem>>, vector<128x512xf32>
    %cst_165 = arith.constant dense<0.000000e+00> : vector<8x512xf32>
    %468 = tpu.matmul %464, %467, %cst_165 {dimension_numbers = #tpu.dot_dimension_numbers<[1], [0], [0], [1], [0, 0, 1, 1], [], []>} : vector<8x128xf32>, vector<128x512xf32>, vector<8x512xf32> -> vector<8x512xf32>
    %469 = arith.addf %466, %468 : vector<8x512xf32>
    %470 = vector.extract_strided_slice %469 {offsets = [0, 0], sizes = [8, 128], strides = [1, 1]} : vector<8x512xf32> to vector<8x128xf32>
    %471 = arith.negf %470 : vector<8x128xf32>
    %472 = math.exp %471 : vector<8x128xf32>
    %cst_166 = arith.constant 1.000000e+00 : f32
    %473 = vector.broadcast %cst_166 : f32 to vector<8x128xf32>
    %474 = arith.addf %473, %472 : vector<8x128xf32>
    %475 = arith.divf %473, %474 : vector<8x128xf32>
    %476 = vector.extract_strided_slice %469 {offsets = [0, 128], sizes = [8, 128], strides = [1, 1]} : vector<8x512xf32> to vector<8x128xf32>
    %477 = arith.negf %476 : vector<8x128xf32>
    %478 = math.exp %477 : vector<8x128xf32>
    %cst_167 = arith.constant 1.000000e+00 : f32
    %479 = vector.broadcast %cst_167 : f32 to vector<8x128xf32>
    %480 = arith.addf %479, %478 : vector<8x128xf32>
    %481 = arith.divf %479, %480 : vector<8x128xf32>
    %482 = vector.extract_strided_slice %469 {offsets = [0, 256], sizes = [8, 128], strides = [1, 1]} : vector<8x512xf32> to vector<8x128xf32>
    %483 = math.tanh %482 : vector<8x128xf32>
    %484 = vector.extract_strided_slice %469 {offsets = [0, 384], sizes = [8, 128], strides = [1, 1]} : vector<8x512xf32> to vector<8x128xf32>
    %485 = arith.negf %484 : vector<8x128xf32>
    %486 = math.exp %485 : vector<8x128xf32>
    %cst_168 = arith.constant 1.000000e+00 : f32
    %487 = vector.broadcast %cst_168 : f32 to vector<8x128xf32>
    %488 = arith.addf %487, %486 : vector<8x128xf32>
    %489 = arith.divf %487, %488 : vector<8x128xf32>
    %490 = arith.mulf %481, %462 : vector<8x128xf32>
    %491 = arith.mulf %475, %483 : vector<8x128xf32>
    %492 = arith.addf %490, %491 : vector<8x128xf32>
    %493 = math.tanh %492 : vector<8x128xf32>
    %494 = arith.mulf %489, %493 : vector<8x128xf32>
    %c56_169 = arith.constant 56 : index
    %c0_170 = arith.constant 0 : index
    %495 = vector.load %arg13[%c56_169, %c0_170] : memref<64x128xf32, #tpu.memory_space<vmem>>, vector<8x128xf32>
    tpu.vector_store %arg13[%c56_169, %c0_170], %494 {strides = array<i32>} : memref<64x128xf32, #tpu.memory_space<vmem>>, vector<8x128xf32>,
    %c0_171 = arith.constant 0 : index
    %c0_172 = arith.constant 0 : index
    %496 = vector.load %arg13[%c0_171, %c0_172] : memref<64x128xf32, #tpu.memory_space<vmem>>, vector<64x128xf32>
    %c0_173 = arith.constant 0 : index
    %c0_174 = arith.constant 0 : index
    %497 = vector.load %arg2[%c0_173, %c0_174] : memref<64x1xf32, #tpu.memory_space<vmem>>, vector<64x1xf32>
    %498 = vector.broadcast %497 : vector<64x1xf32> to vector<64x128xf32>
    %499 = arith.mulf %496, %498 : vector<64x128xf32>
    %c0_175 = arith.constant 0 : index
    %c0_176 = arith.constant 0 : index
    %500 = vector.load %arg9[%c0_175, %c0_176] : memref<128x128xf32, #tpu.memory_space<vmem>>, vector<128x128xf32>
    %cst_177 = arith.constant dense<0.000000e+00> : vector<64x128xf32>
    %501 = tpu.matmul %499, %500, %cst_177 {dimension_numbers = #tpu.dot_dimension_numbers<[1], [0], [0], [1], [0, 0, 1, 1], [], []>} : vector<64x128xf32>, vector<128x128xf32>, vector<64x128xf32> -> vector<64x128xf32>
    %c0_178 = arith.constant 0 : index
    %c0_179 = arith.constant 0 : index
    %502 = vector.load %arg10[%c0_178, %c0_179] : memref<1x128xf32, #tpu.memory_space<vmem>>, vector<1x128xf32>
    %503 = vector.broadcast %502 : vector<1x128xf32> to vector<64x128xf32>
    %504 = arith.addf %501, %503 : vector<64x128xf32>
    %c0_180 = arith.constant 0 : index
    %c0_181 = arith.constant 0 : index
    %505 = vector.load %arg11[%c0_180, %c0_181] : memref<64x128xf32, #tpu.memory_space<vmem>>, vector<64x128xf32>
    tpu.vector_store %arg11[%c0_180, %c0_181], %504 {strides = array<i32>} : memref<64x128xf32, #tpu.memory_space<vmem>>, vector<64x128xf32>,
    return
  }
  func.func @transform_0(%arg0: i32) -> (i32, i32) {
    %c0_i32 = arith.constant 0 : i32
    %c0_i32_0 = arith.constant 0 : i32
    %c0_i32_1 = arith.constant 0 : i32
    return %c0_i32, %c0_i32_0 : i32, i32
  }
  func.func @transform_1(%arg0: i32) -> (i32, i32) {
    %c0_i32 = arith.constant 0 : i32
    %c0_i32_0 = arith.constant 0 : i32
    %c0_i32_1 = arith.constant 0 : i32
    return %c0_i32, %c0_i32_0 : i32, i32
  }
  func.func @transform_2(%arg0: i32) -> (i32, i32) {
    %c0_i32 = arith.constant 0 : i32
    %c0_i32_0 = arith.constant 0 : i32
    %c0_i32_1 = arith.constant 0 : i32
    return %c0_i32, %c0_i32_0 : i32, i32
  }
  func.func @transform_3(%arg0: i32) -> (i32, i32) {
    %c0_i32 = arith.constant 0 : i32
    %c0_i32_0 = arith.constant 0 : i32
    %c0_i32_1 = arith.constant 0 : i32
    return %c0_i32, %c0_i32_0 : i32, i32
  }
  func.func @transform_4(%arg0: i32) -> (i32, i32) {
    %c0_i32 = arith.constant 0 : i32
    %c0_i32_0 = arith.constant 0 : i32
    %c0_i32_1 = arith.constant 0 : i32
    return %c0_i32, %c0_i32_0 : i32, i32
  }
  func.func @transform_5(%arg0: i32) -> (i32, i32) {
    %c0_i32 = arith.constant 0 : i32
    %c0_i32_0 = arith.constant 0 : i32
    %c0_i32_1 = arith.constant 0 : i32
    return %c0_i32, %c0_i32_0 : i32, i32
  }
  func.func @transform_6(%arg0: i32) -> (i32, i32) {
    %c0_i32 = arith.constant 0 : i32
    %c0_i32_0 = arith.constant 0 : i32
    %c0_i32_1 = arith.constant 0 : i32
    return %c0_i32, %c0_i32_0 : i32, i32
  }
  func.func @transform_7(%arg0: i32) -> (i32, i32) {
    %c0_i32 = arith.constant 0 : i32
    %c0_i32_0 = arith.constant 0 : i32
    %c0_i32_1 = arith.constant 0 : i32
    return %c0_i32, %c0_i32_0 : i32, i32
  }
  func.func @transform_8(%arg0: i32) -> (i32, i32) {
    %c0_i32 = arith.constant 0 : i32
    %c0_i32_0 = arith.constant 0 : i32
    %c0_i32_1 = arith.constant 0 : i32
    return %c0_i32, %c0_i32_0 : i32, i32
  }
  func.func @transform_9(%arg0: i32) -> (i32, i32) {
    %c0_i32 = arith.constant 0 : i32
    %c0_i32_0 = arith.constant 0 : i32
    %c0_i32_1 = arith.constant 0 : i32
    return %c0_i32, %c0_i32_0 : i32, i32
  }
  func.func @transform_10(%arg0: i32) -> (i32, i32) {
    %c0_i32 = arith.constant 0 : i32
    %c0_i32_0 = arith.constant 0 : i32
    %c0_i32_1 = arith.constant 0 : i32
    return %c0_i32, %c0_i32_0 : i32, i32
  }
}

</mosaic_0001>

<llo_original>
// kernel: lstm_forward.1
$region0: #{lstm_forward.1}
  #allocation0 [shape = 'u32[]', space=smem, size = 0x4, offset = 0x4, fixed_abs, tag = 'smem constant byte address 0x4 - core index']
  #allocation1 [shape = 'u32[144,128]{1,0:T(1,128)}', space=vmem, size = 0x12000, scoped, tag = 'internal scratch']
  #allocation2 [shape = 'f32[64,512]{1,0:T(8,128)}', space=vmem, size = 0x20000, scoped, tag = 'scratch operand']
  #allocation3 [shape = 'f32[64,128]{1,0:T(8,128)}', space=vmem, size = 0x8000, scoped, tag = 'scratch operand']
  %s0 = inlined_call_operand.vmem [shape: f32[64,16], index: 0, kind: input, shape index: {}]
  %s1 = inlined_call_operand.vmem [shape: f32[64,1], index: 1, kind: input, shape index: {}]
  %s2 = inlined_call_operand.vmem [shape: f32[16,512], index: 2, kind: input, shape index: {}]
  %s3 = inlined_call_operand.hbm [shape: f32[128,512], index: 3, kind: input, shape index: {}]
  %s4 = inlined_call_operand.vmem [shape: f32[1,512], index: 4, kind: input, shape index: {}]
  %s5 = inlined_call_operand.hbm [shape: f32[128,512], index: 5, kind: input, shape index: {}]
  %s6 = inlined_call_operand.hbm [shape: f32[128,512], index: 6, kind: input, shape index: {}]
  %s7 = inlined_call_operand.vmem [shape: f32[1,512], index: 7, kind: input, shape index: {}]
  %s8 = inlined_call_operand.vmem [shape: f32[128,128], index: 8, kind: input, shape index: {}]
  %s9 = inlined_call_operand.vmem [shape: f32[1,128], index: 9, kind: input, shape index: {}]
  %s10 = inlined_call_operand.vmem [shape: f32[64,128], index: 10, kind: output, shape index: {}]
  %s11 = sld [smem:[#allocation0]]
  $region62: #{lstm_forward.1} parent=0
    _
  %s13 = ssub.s32 1, %s11
  %s14 = scalar_select 0, %s13, %s11
  $region1: #{lstm_forward.1} parent=0
    #allocation4 [shape = 'u8[262144]{0}', space=vmem, size = 0x40000, scoped, tag = 'input window, operand 3, single buffered']
    #allocation5 [shape = 's32[1]{0}', space=sflag, size = 0x4, scoped, tag = 'scoped memory for lstm_forward.1']
    #allocation6 [shape = 'u8[262144]{0}', space=vmem, size = 0x40000, scoped, tag = 'input window, operand 5, single buffered']
    #allocation7 [shape = 's32[1]{0}', space=sflag, size = 0x4, scoped, tag = 'scoped memory for lstm_forward.1']
    #allocation8 [shape = 'u8[262144]{0}', space=vmem, size = 0x40000, scoped, tag = 'input window, operand 6, single buffered']
    %15 = vsyncpa [#allocation5], 0
    %16 = vsyncpa [#allocation7], 0
    // Predicated region
    $region2: #{lstm_forward.1} parent=1 // pred_check
      _
    $region3: #{lstm_forward.1} parent=1 // pred_check_branch
      %18 = sbr.rel (0) target = $region5
    $region4: #{lstm_forward.1} parent=1 // pred_region
      _
    $region5: #{lstm_forward.1} parent=1 // pred_fallthru
      _
    // Predicated region
    $region6: #{lstm_forward.1} parent=1 // pred_check
      _
    $region7: #{lstm_forward.1} parent=1 // pred_check_branch
      %20 = sbr.rel (0) target = $region9
    $region8: #{lstm_forward.1} parent=1 // pred_region
      _
    $region9: #{lstm_forward.1} parent=1 // pred_fallthru
      _
    // Predicated region
    $region10: #{lstm_forward.1} parent=1 // pred_check
      _
    $region11: #{lstm_forward.1} parent=1 // pred_check_branch
      %22 = sbr.rel (0) target = $region13
    $region12: #{lstm_forward.1} parent=1 // pred_region
      _
    $region13: #{lstm_forward.1} parent=1 // pred_fallthru
      _
    // Predicated region
    $region14: #{lstm_forward.1} parent=1 // pred_check
      _
    $region15: #{lstm_forward.1} parent=1 // pred_check_branch
      %24 = sbr.rel (0) target = $region17
    $region16: #{lstm_forward.1} parent=1 // pred_region
      %s26 = ssub.s32 8192, 8192
      %27 = vsyncadd [#allocation5], %s26
      %s28 = sshll.u32 [#allocation4], 4
      %s29 = int_to_ptr.vmem [resolvable:$true] %s28
      %34 = dma.hbm_to_vmem [thread:$0]  %s3, 8192, %s29, [#allocation5], 512, 512, 32
    $region17: #{lstm_forward.1} parent=1 // pred_fallthru
      _
    // Predicated region
    $region18: #{lstm_forward.1} parent=1 // pred_check
      _
    $region19: #{lstm_forward.1} parent=1 // pred_check_branch
      %36 = sbr.rel (0) target = $region21
    $region20: #{lstm_forward.1} parent=1 // pred_region
      _
    $region21: #{lstm_forward.1} parent=1 // pred_fallthru
      _
    // Predicated region
    $region22: #{lstm_forward.1} parent=1 // pred_check
      _
    $region23: #{lstm_forward.1} parent=1 // pred_check_branch
      %38 = sbr.rel (0) target = $region25
    $region24: #{lstm_forward.1} parent=1 // pred_region
      %s40 = ssub.s32 8192, 8192
      %41 = vsyncadd [#allocation7], %s40
      %s42 = sshll.u32 [#allocation6], 4
      %s43 = int_to_ptr.vmem [resolvable:$true] %s42
      %48 = dma.hbm_to_vmem [thread:$0]  %s5, 8192, %s43, [#allocation7], 512, 512, 32
    $region25: #{lstm_forward.1} parent=1 // pred_fallthru
      _
    // Predicated region
    $region26: #{lstm_forward.1} parent=1 // pred_check
      _
    $region27: #{lstm_forward.1} parent=1 // pred_check_branch
      %50 = sbr.rel (0) target = $region29
    $region28: #{lstm_forward.1} parent=1 // pred_region
      %s52 = ssub.s32 8192, 8192
      %53 = vsyncadd [#allocation7], %s52
      %s54 = sshll.u32 [#allocation8], 4
      %s55 = int_to_ptr.vmem [resolvable:$true] %s54
      %60 = dma.hbm_to_vmem [thread:$0]  %s6, 8192, %s55, [#allocation7], 512, 512, 32
    $region29: #{lstm_forward.1} parent=1 // pred_fallthru
      _
    // Predicated region
    $region30: #{lstm_forward.1} parent=1 // pred_check
      _
    $region31: #{lstm_forward.1} parent=1 // pred_check_branch
      %62 = sbr.rel (0) target = $region33
    $region32: #{lstm_forward.1} parent=1 // pred_region
      _
    $region33: #{lstm_forward.1} parent=1 // pred_fallthru
      _
    // Predicated region
    $region34: #{lstm_forward.1} parent=1 // pred_check
      _
    $region35: #{lstm_forward.1} parent=1 // pred_check_branch
      %64 = sbr.rel (0) target = $region37
    $region36: #{lstm_forward.1} parent=1 // pred_region
      _
    $region37: #{lstm_forward.1} parent=1 // pred_fallthru
      _
    // Predicated region
    $region38: #{lstm_forward.1} parent=1 // pred_check
      _
    $region39: #{lstm_forward.1} parent=1 // pred_check_branch
      %66 = sbr.rel (0) target = $region41
    $region40: #{lstm_forward.1} parent=1 // pred_region
      _
    $region41: #{lstm_forward.1} parent=1 // pred_fallthru
      _
    // Predicated region
    $region42: #{lstm_forward.1} parent=1 // pred_check
      _
    $region43: #{lstm_forward.1} parent=1 // pred_check_branch
      %68 = sbr.rel (0) target = $region45
    $region44: #{lstm_forward.1} parent=1 // pred_region
      %69 = dma.done [#allocation5], 8192
    $region45: #{lstm_forward.1} parent=1 // pred_fallthru
      _
    // Predicated region
    $region46: #{lstm_forward.1} parent=1 // pred_check
      _
    $region47: #{lstm_forward.1} parent=1 // pred_check_branch
      %71 = sbr.rel (0) target = $region49
    $region48: #{lstm_forward.1} parent=1 // pred_region
      %72 = dma.done [#allocation7], 8192
    $region49: #{lstm_forward.1} parent=1 // pred_fallthru
      _
    // Predicated region
    $region50: #{lstm_forward.1} parent=1 // pred_check
      _
    $region51: #{lstm_forward.1} parent=1 // pred_check_branch
      %74 = sbr.rel (0) target = $region53
    $region52: #{lstm_forward.1} parent=1 // pred_region
      %75 = dma.done [#allocation7], 8192
    $region53: #{lstm_forward.1} parent=1 // pred_fallthru
      _
    %v76 = vld [vmem:[%s0] sm:$0xff]
    %v77 = vld [vmem:[%s0 + $0x8] sm:$0xff]
    %v78 = vld [vmem:[%s0 + $0x10] sm:$0xff]
    %v79 = vld [vmem:[%s0 + $0x18] sm:$0xff]
    %v80 = vld [vmem:[%s0 + $0x20] sm:$0xff]
    %v81 = vld [vmem:[%s0 + $0x28] sm:$0xff]
    %v82 = vld [vmem:[%s0 + $0x30] sm:$0xff]
    %v83 = vld [vmem:[%s0 + $0x38] sm:$0xff]
    %v84 = vld [vmem:[%s2] sm:$0xff]
    %v85 = vld [vmem:[%s2 + $0x8] sm:$0xff]
    %v86 = vld [vmem:[%s2 + $0x10] sm:$0xff]
    %v87 = vld [vmem:[%s2 + $0x18] sm:$0xff]
    %v88 = vld [vmem:[%s2 + $0x20] sm:$0xff]
    %v89 = vld [vmem:[%s2 + $0x28] sm:$0xff]
    %v90 = vld [vmem:[%s2 + $0x30] sm:$0xff]
    %v91 = vld [vmem:[%s2 + $0x38] sm:$0xff]
    %v92 = vld [vmem:[%s4] sm:$0xf]
    %v94 = vlaneseq
    %v95 = vshrl.u32 %v94, 7
    %v96 = vsub.s32 0, %v95
    %v97 = vrot.slane %v92, %v96
    %v98 = vlaneseq
    %v99 = vshrl.u32 %v98, 7
    %v100 = vsub.s32 1, %v99
    %v101 = vrot.slane %v92, %v100
    %v102 = vlaneseq
    %v103 = vshrl.u32 %v102, 7
    %v104 = vsub.s32 2, %v103
    %v105 = vrot.slane %v92, %v104
    %v106 = vlaneseq
    %v107 = vshrl.u32 %v106, 7
    %v108 = vsub.s32 3, %v107
    %v109 = vrot.slane %v92, %v108
    %vm114 = vcmask 130048
    %v116 = vsel %vm114, %v76, 0
    %v119 = vsel %vm114, %v77, 0
    %v122 = vsel %vm114, %v78, 0
    %v125 = vsel %vm114, %v79, 0
    %v128 = vsel %vm114, %v80, 0
    %v131 = vsel %vm114, %v81, 0
    %v134 = vsel %vm114, %v82, 0
    %v137 = vsel %vm114, %v83, 0
    %139 = vmatprep.subr.mxu0 %v85
    %140 = vmatpush1.msra.mxu0 %v84
    %141 = vmatprep.subr.mxu0 %v89
    %142 = vmatpush1.msra.mxu0 %v88
    %143 = vmatprep.subr.mxu0 0.0
    %144 = vmatpush1.msra.mxu0 0.0
    %145 = vmatprep.subr.mxu0 0.0
    %146 = vmatpush1.msra.mxu0 0.0
    %147 = vmatprep.subr.mxu0 0.0
    %148 = vmatpush1.msra.mxu0 0.0
    %149 = vmatprep.subr.mxu0 0.0
    %150 = vmatpush1.msra.mxu0 0.0
    %151 = vmatprep.subr.mxu0 0.0
    %152 = vmatpush1.msra.mxu0 0.0
    %153 = vmatprep.subr.mxu0 0.0
    %154 = vmatpush1.msra.mxu0 0.0
    %155 = vmatprep.subr.mxu0 0.0
    %156 = vmatpush1.msra.mxu0 0.0
    %157 = vmatprep.subr.mxu0 0.0
    %158 = vmatpush1.msra.mxu0 0.0
    %159 = vmatprep.subr.mxu0 0.0
    %160 = vmatpush1.msra.mxu0 0.0
    %161 = vmatprep.subr.mxu0 0.0
    %162 = vmatpush1.msra.mxu0 0.0
    %163 = vmatprep.subr.mxu0 0.0
    %164 = vmatpush1.msra.mxu0 0.0
    %165 = vmatprep.subr.mxu0 0.0
    %166 = vmatpush1.msra.mxu0 0.0
    %167 = vmatprep.subr.mxu0 0.0
    %168 = vmatpush1.msra.mxu0 0.0
    %169 = vmatprep.subr.mxu0 0.0
    %170 = vmatpush1.msra.mxu0 0.0
    %171 = vmatprep.subr.mxu0 0.0
    %172 = vmatpush1.msra.mxu0 0.0
    %173 = vmatprep.subr.mxu0 0.0
    %174 = vmatpush1.msra.mxu0 0.0
    %175 = vmatprep.subr.mxu0 0.0
    %176 = vmatpush1.msra.mxu0 0.0
    %177 = vmatprep.subr.mxu0 0.0
    %178 = vmatpush1.msra.mxu0 0.0
    %179 = vmatprep.subr.mxu0 0.0
    %180 = vmatpush1.msra.mxu0 0.0
    %181 = vmatprep.subr.mxu0 0.0
    %182 = vmatpush1.msra.mxu0 0.0
    %183 = vmatprep.subr.mxu0 0.0
    %184 = vmatpush1.msra.mxu0 0.0
    %185 = vmatprep.subr.mxu0 0.0
    %186 = vmatpush1.msra.mxu0 0.0
    %187 = vmatprep.subr.mxu0 0.0
    %188 = vmatpush1.msra.mxu0 0.0
    %189 = vmatprep.subr.mxu0 0.0
    %190 = vmatpush1.msra.mxu0 0.0
    %191 = vmatprep.subr.mxu0 0.0
    %192 = vmatpush1.msra.mxu0 0.0
    %193 = vmatprep.subr.mxu0 0.0
    %194 = vmatpush1.msra.mxu0 0.0
    %195 = vmatprep.subr.mxu0 0.0
    %196 = vmatpush1.msra.mxu0 0.0
    %197 = vmatprep.subr.mxu0 0.0
    %198 = vmatpush1.msra.mxu0 0.0
    %199 = vmatprep.subr.mxu0 0.0
    %200 = vmatpush1.msra.mxu0 0.0
    %201 = vmatprep.subr.mxu0 0.0
    %202 = vmatpush1.msra.mxu0 0.0
    %203 = vmatprep.mubr.f32.mxu0 0.0
    %204 = vmatmul.mubr.f32.gmra.mrb[0].mxu0 %v116
    %v205 = vpop.f32.mrb[0].mxu0
    %v206 = vadd.f32 %v97, %v205
    %v207 = vpop.f32.mrb[0].mxu0
    %v208 = vadd.f32 %v101, %v207
    %209 = vmatprep.mubr.f32.mxu0 0.0
    %210 = vmatmul.mubr.f32.gmra.mrb[0].mxu0 %v119
    %v211 = vpop.f32.mrb[0].mxu0
    %v212 = vadd.f32 %v97, %v211
    %v213 = vpop.f32.mrb[0].mxu0
    %v214 = vadd.f32 %v101, %v213
    %215 = vmatprep.mubr.f32.mxu0 0.0
    %216 = vmatmul.mubr.f32.gmra.mrb[0].mxu0 %v122
    %v217 = vpop.f32.mrb[0].mxu0
    %v218 = vadd.f32 %v97, %v217
    %v219 = vpop.f32.mrb[0].mxu0
    %v220 = vadd.f32 %v101, %v219
    %221 = vmatprep.mubr.f32.mxu0 0.0
    %222 = vmatmul.mubr.f32.gmra.mrb[0].mxu0 %v125
    %v223 = vpop.f32.mrb[0].mxu0
    %v224 = vadd.f32 %v97, %v223
    %v225 = vpop.f32.mrb[0].mxu0
    %v226 = vadd.f32 %v101, %v225
    %227 = vmatprep.mubr.f32.mxu0 0.0
    %228 = vmatmul.mubr.f32.gmra.mrb[0].mxu0 %v128
    %v229 = vpop.f32.mrb[0].mxu0
    %v230 = vadd.f32 %v97, %v229
    %v231 = vpop.f32.mrb[0].mxu0
    %v232 = vadd.f32 %v101, %v231
    %233 = vmatprep.mubr.f32.mxu0 0.0
    %234 = vmatmul.mubr.f32.gmra.mrb[0].mxu0 %v131
    %v235 = vpop.f32.mrb[0].mxu0
    %v236 = vadd.f32 %v97, %v235
    %v237 = vpop.f32.mrb[0].mxu0
    %v238 = vadd.f32 %v101, %v237
    %239 = vmatprep.mubr.f32.mxu0 0.0
    %240 = vmatmul.mubr.f32.gmra.mrb[0].mxu0 %v134
    %v241 = vpop.f32.mrb[0].mxu0
    %v242 = vadd.f32 %v97, %v241
    %v243 = vpop.f32.mrb[0].mxu0
    %v244 = vadd.f32 %v101, %v243
    %245 = vmatprep.mubr.f32.mxu0 0.0
    %246 = vmatmul.mubr.f32.gmra.mrb[0].mxu0 %v137
    %v247 = vpop.f32.mrb[0].mxu0
    %v248 = vadd.f32 %v97, %v247
    %v249 = vpop.f32.mrb[0].mxu0
    %v250 = vadd.f32 %v101, %v249
    %251 = vdwg.mxu0
    %252 = vmatprep.subr.mxu0 %v87
    %253 = vmatpush1.msra.mxu0 %v86
    %254 = vmatprep.subr.mxu0 %v91
    %255 = vmatpush1.msra.mxu0 %v90
    %256 = vmatprep.subr.mxu0 0.0
    %257 = vmatpush1.msra.mxu0 0.0
    %258 = vmatprep.subr.mxu0 0.0
    %259 = vmatpush1.msra.mxu0 0.0
    %260 = vmatprep.subr.mxu0 0.0
    %261 = vmatpush1.msra.mxu0 0.0
    %262 = vmatprep.subr.mxu0 0.0
    %263 = vmatpush1.msra.mxu0 0.0
    %264 = vmatprep.subr.mxu0 0.0
    %265 = vmatpush1.msra.mxu0 0.0
    %266 = vmatprep.subr.mxu0 0.0
    %267 = vmatpush1.msra.mxu0 0.0
    %268 = vmatprep.subr.mxu0 0.0
    %269 = vmatpush1.msra.mxu0 0.0
    %270 = vmatprep.subr.mxu0 0.0
    %271 = vmatpush1.msra.mxu0 0.0
    %272 = vmatprep.subr.mxu0 0.0
    %273 = vmatpush1.msra.mxu0 0.0
    %274 = vmatprep.subr.mxu0 0.0
    %275 = vmatpush1.msra.mxu0 0.0
    %276 = vmatprep.subr.mxu0 0.0
    %277 = vmatpush1.msra.mxu0 0.0
    %278 = vmatprep.subr.mxu0 0.0
    %279 = vmatpush1.msra.mxu0 0.0
    %280 = vmatprep.subr.mxu0 0.0
    %281 = vmatpush1.msra.mxu0 0.0
    %282 = vmatprep.subr.mxu0 0.0
    %283 = vmatpush1.msra.mxu0 0.0
    %284 = vmatprep.subr.mxu0 0.0
    %285 = vmatpush1.msra.mxu0 0.0
    %286 = vmatprep.subr.mxu0 0.0
    %287 = vmatpush1.msra.mxu0 0.0
    %288 = vmatprep.subr.mxu0 0.0
    %289 = vmatpush1.msra.mxu0 0.0
    %290 = vmatprep.subr.mxu0 0.0
    %291 = vmatpush1.msra.mxu0 0.0
    %292 = vmatprep.subr.mxu0 0.0
    %293 = vmatpush1.msra.mxu0 0.0
    %294 = vmatprep.subr.mxu0 0.0
    %295 = vmatpush1.msra.mxu0 0.0
    %296 = vmatprep.subr.mxu0 0.0
    %297 = vmatpush1.msra.mxu0 0.0
    %298 = vmatprep.subr.mxu0 0.0
    %299 = vmatpush1.msra.mxu0 0.0
    %300 = vmatprep.subr.mxu0 0.0
    %301 = vmatpush1.msra.mxu0 0.0
    %302 = vmatprep.subr.mxu0 0.0
    %303 = vmatpush1.msra.mxu0 0.0
    %304 = vmatprep.subr.mxu0 0.0
    %305 = vmatpush1.msra.mxu0 0.0
    %306 = vmatprep.subr.mxu0 0.0
    %307 = vmatpush1.msra.mxu0 0.0
    %308 = vmatprep.subr.mxu0 0.0
    %309 = vmatpush1.msra.mxu0 0.0
    %310 = vmatprep.subr.mxu0 0.0
    %311 = vmatpush1.msra.mxu0 0.0
    %312 = vmatprep.subr.mxu0 0.0
    %313 = vmatpush1.msra.mxu0 0.0
    %314 = vmatprep.subr.mxu0 0.0
    %315 = vmatpush1.msra.mxu0 0.0
    %316 = vmatprep.mubr.f32.mxu0 0.0
    %317 = vmatmul.mubr.f32.gmra.mrb[0].mxu0 %v116
    %v318 = vpop.f32.mrb[0].mxu0
    %v319 = vadd.f32 %v105, %v318
    %v320 = vpop.f32.mrb[0].mxu0
    %v321 = vadd.f32 %v109, %v320
    %322 = vmatprep.mubr.f32.mxu0 0.0
    %323 = vmatmul.mubr.f32.gmra.mrb[0].mxu0 %v119
    %v324 = vpop.f32.mrb[0].mxu0
    %v325 = vadd.f32 %v105, %v324
    %v326 = vpop.f32.mrb[0].mxu0
    %v327 = vadd.f32 %v109, %v326
    %328 = vmatprep.mubr.f32.mxu0 0.0
    %329 = vmatmul.mubr.f32.gmra.mrb[0].mxu0 %v122
    %v330 = vpop.f32.mrb[0].mxu0
    %v331 = vadd.f32 %v105, %v330
    %v332 = vpop.f32.mrb[0].mxu0
    %v333 = vadd.f32 %v109, %v332
    %334 = vmatprep.mubr.f32.mxu0 0.0
    %335 = vmatmul.mubr.f32.gmra.mrb[0].mxu0 %v125
    %v336 = vpop.f32.mrb[0].mxu0
    %v337 = vadd.f32 %v105, %v336
    %v338 = vpop.f32.mrb[0].mxu0
    %v339 = vadd.f32 %v109, %v338
    %340 = vmatprep.mubr.f32.mxu0 0.0
    %341 = vmatmul.mubr.f32.gmra.mrb[0].mxu0 %v128
    %v342 = vpop.f32.mrb[0].mxu0
    %v343 = vadd.f32 %v105, %v342
    %v344 = vpop.f32.mrb[0].mxu0
    %v345 = vadd.f32 %v109, %v344
    %346 = vmatprep.mubr.f32.mxu0 0.0
    %347 = vmatmul.mubr.f32.gmra.mrb[0].mxu0 %v131
    %v348 = vpop.f32.mrb[0].mxu0
    %v349 = vadd.f32 %v105, %v348
    %v350 = vpop.f32.mrb[0].mxu0
    %v351 = vadd.f32 %v109, %v350
    %352 = vmatprep.mubr.f32.mxu0 0.0
    %353 = vmatmul.mubr.f32.gmra.mrb[0].mxu0 %v134
    %v354 = vpop.f32.mrb[0].mxu0
    %v355 = vadd.f32 %v105, %v354
    %v356 = vpop.f32.mrb[0].mxu0
    %v357 = vadd.f32 %v109, %v356
    %358 = vmatprep.mubr.f32.mxu0 0.0
    %359 = vmatmul.mubr.f32.gmra.mrb[0].mxu0 %v137
    %v360 = vpop.f32.mrb[0].mxu0
    %v361 = vadd.f32 %v105, %v360
    %v362 = vpop.f32.mrb[0].mxu0
    %v363 = vadd.f32 %v109, %v362
    %364 = vdwg.mxu0
    %365 = vst [vmem:[#allocation2] sm:$0xff] %v206
    %366 = vst [vmem:[#allocation2 + $0x8] sm:$0xff] %v208
    %367 = vst [vmem:[#allocation2 + $0x10] sm:$0xff] %v319
    %368 = vst [vmem:[#allocation2 + $0x18] sm:$0xff] %v321
    %369 = vst [vmem:[#allocation2 + $0x20] sm:$0xff] %v212
    %370 = vst [vmem:[#allocation2 + $0x28] sm:$0xff] %v214
    %371 = vst [vmem:[#allocation2 + $0x30] sm:$0xff] %v325
    %372 = vst [vmem:[#allocation2 + $0x38] sm:$0xff] %v327
    %373 = vst [vmem:[#allocation2 + $0x40] sm:$0xff] %v218
    %374 = vst [vmem:[#allocation2 + $0x48] sm:$0xff] %v220
    %375 = vst [vmem:[#allocation2 + $0x50] sm:$0xff] %v331
    %376 = vst [vmem:[#allocation2 + $0x58] sm:$0xff] %v333
    %377 = vst [vmem:[#allocation2 + $0x60] sm:$0xff] %v224
    %378 = vst [vmem:[#allocation2 + $0x68] sm:$0xff] %v226
    %379 = vst [vmem:[#allocation2 + $0x70] sm:$0xff] %v337
    %380 = vst [vmem:[#allocation2 + $0x78] sm:$0xff] %v339
    %381 = vst [vmem:[#allocation2 + $0x80] sm:$0xff] %v230
    %382 = vst [vmem:[#allocation2 + $0x88] sm:$0xff] %v232
    %383 = vst [vmem:[#allocation2 + $0x90] sm:$0xff] %v343
    %384 = vst [vmem:[#allocation2 + $0x98] sm:$0xff] %v345
    %385 = vst [vmem:[#allocation2 + $0xa0] sm:$0xff] %v236
    %386 = vst [vmem:[#allocation2 + $0xa8] sm:$0xff] %v238
    %387 = vst [vmem:[#allocation2 + $0xb0] sm:$0xff] %v349
    %388 = vst [vmem:[#allocation2 + $0xb8] sm:$0xff] %v351
    %389 = vst [vmem:[#allocation2 + $0xc0] sm:$0xff] %v242
    %390 = vst [vmem:[#allocation2 + $0xc8] sm:$0xff] %v244
    %391 = vst [vmem:[#allocation2 + $0xd0] sm:$0xff] %v355
    %392 = vst [vmem:[#allocation2 + $0xd8] sm:$0xff] %v357
    %393 = vst [vmem:[#allocation2 + $0xe0] sm:$0xff] %v248
    %394 = vst [vmem:[#allocation2 + $0xe8] sm:$0xff] %v250
    %395 = vst [vmem:[#allocation2 + $0xf0] sm:$0xff] %v361
    %396 = vst [vmem:[#allocation2 + $0xf8] sm:$0xff] %v363
    %v397 = vld [vmem:[#allocation2] sm:$0xff]
    %v398 = vld [vmem:[#allocation2 + $0x8] sm:$0xff]
    %v399 = vld [vmem:[#allocation2 + $0x10] sm:$0xff]
    %v400 = vld [vmem:[#allocation2 + $0x18] sm:$0xff]
    %v401 = vld [vmem:[#allocation4] sm:$0xff]
    %v402 = vld [vmem:[#allocation4 + $0x8] sm:$0xff]
    %v403 = vld [vmem:[#allocation4 + $0x10] sm:$0xff]
    %v404 = vld [vmem:[#allocation4 + $0x18] sm:$0xff]
    %v405 = vld [vmem:[#allocation4 + $0x20] sm:$0xff]
    %v406 = vld [vmem:[#allocation4 + $0x28] sm:$0xff]
    %v407 = vld [vmem:[#allocation4 + $0x30] sm:$0xff]
    %v408 = vld [vmem:[#allocation4 + $0x38] sm:$0xff]
    %v409 = vld [vmem:[#allocation4 + $0x40] sm:$0xff]
    %v410 = vld [vmem:[#allocation4 + $0x48] sm:$0xff]
    %v411 = vld [vmem:[#allocation4 + $0x50] sm:$0xff]
    %v412 = vld [vmem:[#allocation4 + $0x58] sm:$0xff]
    %v413 = vld [vmem:[#allocation4 + $0x60] sm:$0xff]
    %v414 = vld [vmem:[#allocation4 + $0x68] sm:$0xff]
    %v415 = vld [vmem:[#allocation4 + $0x70] sm:$0xff]
    %v416 = vld [vmem:[#allocation4 + $0x78] sm:$0xff]
    %v417 = vld [vmem:[#allocation4 + $0x80] sm:$0xff]
    %v418 = vld [vmem:[#allocation4 + $0x88] sm:$0xff]
    %v419 = vld [vmem:[#allocation4 + $0x90] sm:$0xff]
    %v420 = vld [vmem:[#allocation4 + $0x98] sm:$0xff]
    %v421 = vld [vmem:[#allocation4 + $0xa0] sm:$0xff]
    %v422 = vld [vmem:[#allocation4 + $0xa8] sm:$0xff]
    %v423 = vld [vmem:[#allocation4 + $0xb0] sm:$0xff]
    %v424 = vld [vmem:[#allocation4 + $0xb8] sm:$0xff]
    %v425 = vld [vmem:[#allocation4 + $0xc0] sm:$0xff]
    %v426 = vld [vmem:[#allocation4 + $0xc8] sm:$0xff]
    %v427 = vld [vmem:[#allocation4 + $0xd0] sm:$0xff]
    %v428 = vld [vmem:[#allocation4 + $0xd8] sm:$0xff]
    %v429 = vld [vmem:[#allocation4 + $0xe0] sm:$0xff]
    %v430 = vld [vmem:[#allocation4 + $0xe8] sm:$0xff]
    %v431 = vld [vmem:[#allocation4 + $0xf0] sm:$0xff]
    %v432 = vld [vmem:[#allocation4 + $0xf8] sm:$0xff]
    %v433 = vld [vmem:[#allocation4 + $0x100] sm:$0xff]
    %v434 = vld [vmem:[#allocation4 + $0x108] sm:$0xff]
    %v435 = vld [vmem:[#allocation4 + $0x110] sm:$0xff]
    %v436 = vld [vmem:[#allocation4 + $0x118] sm:$0xff]
    %v437 = vld [vmem:[#allocation4 + $0x120] sm:$0xff]
    %v438 = vld [vmem:[#allocation4 + $0x128] sm:$0xff]
    %v439 = vld [vmem:[#allocation4 + $0x130] sm:$0xff]
    %v440 = vld [vmem:[#allocation4 + $0x138] sm:$0xff]
    %v441 = vld [vmem:[#allocation4 + $0x140] sm:$0xff]
    %v442 = vld [vmem:[#allocation4 + $0x148] sm:$0xff]
    %v443 = vld [vmem:[#allocation4 + $0x150] sm:$0xff]
    %v444 = vld [vmem:[#allocation4 + $0x158] sm:$0xff]
    %v445 = vld [vmem:[#allocation4 + $0x160] sm:$0xff]
    %v446 = vld [vmem:[#allocation4 + $0x168] sm:$0xff]
    %v447 = vld [vmem:[#allocation4 + $0x170] sm:$0xff]
    %v448 = vld [vmem:[#allocation4 + $0x178] sm:$0xff]
    %v449 = vld [vmem:[#allocation4 + $0x180] sm:$0xff]
    %v450 = vld [vmem:[#allocation4 + $0x188] sm:$0xff]
    %v451 = vld [vmem:[#allocation4 + $0x190] sm:$0xff]
    %v452 = vld [vmem:[#allocation4 + $0x198] sm:$0xff]
    %v453 = vld [vmem:[#allocation4 + $0x1a0] sm:$0xff]
    %v454 = vld [vmem:[#allocation4 + $0x1a8] sm:$0xff]
    %v455 = vld [vmem:[#allocation4 + $0x1b0] sm:$0xff]
    %v456 = vld [vmem:[#allocation4 + $0x1b8] sm:$0xff]
    %v457 = vld [vmem:[#allocation4 + $0x1c0] sm:$0xff]
    %v458 = vld [vmem:[#allocation4 + $0x1c8] sm:$0xff]
    %v459 = vld [vmem:[#allocation4 + $0x1d0] sm:$0xff]
    %v460 = vld [vmem:[#allocation4 + $0x1d8] sm:$0xff]
    %v461 = vld [vmem:[#allocation4 + $0x1e0] sm:$0xff]
    %v462 = vld [vmem:[#allocation4 + $0x1e8] sm:$0xff]
    %v463 = vld [vmem:[#allocation4 + $0x1f0] sm:$0xff]
    %v464 = vld [vmem:[#allocation4 + $0x1f8] sm:$0xff]
    %465 = vmatprep.subr.mxu0 %v402
    %466 = vmatpush1.msra.mxu0 %v401
    %467 = vmatprep.subr.mxu0 %v406
    %468 = vmatpush1.msra.mxu0 %v405
    %469 = vmatprep.subr.mxu0 %v410
    %470 = vmatpush1.msra.mxu0 %v409
    %471 = vmatprep.subr.mxu0 %v414
    %472 = vmatpush1.msra.mxu0 %v413
    %473 = vmatprep.subr.mxu0 %v418
    %474 = vmatpush1.msra.mxu0 %v417
    %475 = vmatprep.subr.mxu0 %v422
    %476 = vmatpush1.msra.mxu0 %v421
    %477 = vmatprep.subr.mxu0 %v426
    %478 = vmatpush1.msra.mxu0 %v425
    %479 = vmatprep.subr.mxu0 %v430
    %480 = vmatpush1.msra.mxu0 %v429
    %481 = vmatprep.subr.mxu0 %v434
    %482 = vmatpush1.msra.mxu0 %v433
    %483 = vmatprep.subr.mxu0 %v438
    %484 = vmatpush1.msra.mxu0 %v437
    %485 = vmatprep.subr.mxu0 %v442
    %486 = vmatpush1.msra.mxu0 %v441
    %487 = vmatprep.subr.mxu0 %v446
    %488 = vmatpush1.msra.mxu0 %v445
    %489 = vmatprep.subr.mxu0 %v450
    %490 = vmatpush1.msra.mxu0 %v449
    %491 = vmatprep.subr.mxu0 %v454
    %492 = vmatpush1.msra.mxu0 %v453
    %493 = vmatprep.subr.mxu0 %v458
    %494 = vmatpush1.msra.mxu0 %v457
    %495 = vmatprep.subr.mxu0 %v462
    %496 = vmatpush1.msra.mxu0 %v461
    %497 = vmatprep.subr.mxu0 0.0
    %498 = vmatpush1.msra.mxu0 0.0
    %499 = vmatprep.subr.mxu0 0.0
    %500 = vmatpush1.msra.mxu0 0.0
    %501 = vmatprep.subr.mxu0 0.0
    %502 = vmatpush1.msra.mxu0 0.0
    %503 = vmatprep.subr.mxu0 0.0
    %504 = vmatpush1.msra.mxu0 0.0
    %505 = vmatprep.subr.mxu0 0.0
    %506 = vmatpush1.msra.mxu0 0.0
    %507 = vmatprep.subr.mxu0 0.0
    %508 = vmatpush1.msra.mxu0 0.0
    %509 = vmatprep.subr.mxu0 0.0
    %510 = vmatpush1.msra.mxu0 0.0
    %511 = vmatprep.subr.mxu0 0.0
    %512 = vmatpush1.msra.mxu0 0.0
    %513 = vmatprep.subr.mxu0 0.0
    %514 = vmatpush1.msra.mxu0 0.0
    %515 = vmatprep.subr.mxu0 0.0
    %516 = vmatpush1.msra.mxu0 0.0
    %517 = vmatprep.subr.mxu0 0.0
    %518 = vmatpush1.msra.mxu0 0.0
    %519 = vmatprep.subr.mxu0 0.0
    %520 = vmatpush1.msra.mxu0 0.0
    %521 = vmatprep.subr.mxu0 0.0
    %522 = vmatpush1.msra.mxu0 0.0
    %523 = vmatprep.subr.mxu0 0.0
    %524 = vmatpush1.msra.mxu0 0.0
    %525 = vmatprep.subr.mxu0 0.0
    %526 = vmatpush1.msra.mxu0 0.0
    %527 = vmatprep.subr.mxu0 0.0
    %528 = vmatpush1.msra.mxu0 0.0
    %529 = vmatprep.mubr.f32.mxu0 0.0
    %530 = vmatmul.mubr.f32.gmra.mrb[0].mxu0 0.0
    %v531 = vpop.f32.mrb[0].mxu0
    %v532 = vadd.f32 0.0, %v531
    %v533 = vpop.f32.mrb[0].mxu0
    %v534 = vadd.f32 0.0, %v533
    %535 = vdwg.mxu0
    %536 = vmatprep.subr.mxu0 %v404
    %537 = vmatpush1.msra.mxu0 %v403
    %538 = vmatprep.subr.mxu0 %v408
    %539 = vmatpush1.msra.mxu0 %v407
    %540 = vmatprep.subr.mxu0 %v412
    %541 = vmatpush1.msra.mxu0 %v411
    %542 = vmatprep.subr.mxu0 %v416
    %543 = vmatpush1.msra.mxu0 %v415
    %544 = vmatprep.subr.mxu0 %v420
    %545 = vmatpush1.msra.mxu0 %v419
    %546 = vmatprep.subr.mxu0 %v424
    %547 = vmatpush1.msra.mxu0 %v423
    %548 = vmatprep.subr.mxu0 %v428
    %549 = vmatpush1.msra.mxu0 %v427
    %550 = vmatprep.subr.mxu0 %v432
    %551 = vmatpush1.msra.mxu0 %v431
    %552 = vmatprep.subr.mxu0 %v436
    %553 = vmatpush1.msra.mxu0 %v435
    %554 = vmatprep.subr.mxu0 %v440
    %555 = vmatpush1.msra.mxu0 %v439
    %556 = vmatprep.subr.mxu0 %v444
    %557 = vmatpush1.msra.mxu0 %v443
    %558 = vmatprep.subr.mxu0 %v448
    %559 = vmatpush1.msra.mxu0 %v447
    %560 = vmatprep.subr.mxu0 %v452
    %561 = vmatpush1.msra.mxu0 %v451
    %562 = vmatprep.subr.mxu0 %v456
    %563 = vmatpush1.msra.mxu0 %v455
    %564 = vmatprep.subr.mxu0 %v460
    %565 = vmatpush1.msra.mxu0 %v459
    %566 = vmatprep.subr.mxu0 %v464
    %567 = vmatpush1.msra.mxu0 %v463
    %568 = vmatprep.subr.mxu0 0.0
    %569 = vmatpush1.msra.mxu0 0.0
    %570 = vmatprep.subr.mxu0 0.0
    %571 = vmatpush1.msra.mxu0 0.0
    %572 = vmatprep.subr.mxu0 0.0
    %573 = vmatpush1.msra.mxu0 0.0
    %574 = vmatprep.subr.mxu0 0.0
    %575 = vmatpush1.msra.mxu0 0.0
    %576 = vmatprep.subr.mxu0 0.0
    %577 = vmatpush1.msra.mxu0 0.0
    %578 = vmatprep.subr.mxu0 0.0
    %579 = vmatpush1.msra.mxu0 0.0
    %580 = vmatprep.subr.mxu0 0.0
    %581 = vmatpush1.msra.mxu0 0.0
    %582 = vmatprep.subr.mxu0 0.0
    %583 = vmatpush1.msra.mxu0 0.0
    %584 = vmatprep.subr.mxu0 0.0
    %585 = vmatpush1.msra.mxu0 0.0
    %586 = vmatprep.subr.mxu0 0.0
    %587 = vmatpush1.msra.mxu0 0.0
    %588 = vmatprep.subr.mxu0 0.0
    %589 = vmatpush1.msra.mxu0 0.0
    %590 = vmatprep.subr.mxu0 0.0
    %591 = vmatpush1.msra.mxu0 0.0
    %592 = vmatprep.subr.mxu0 0.0
    %593 = vmatpush1.msra.mxu0 0.0
    %594 = vmatprep.subr.mxu0 0.0
    %595 = vmatpush1.msra.mxu0 0.0
    %596 = vmatprep.subr.mxu0 0.0
    %597 = vmatpush1.msra.mxu0 0.0
    %598 = vmatprep.subr.mxu0 0.0
    %599 = vmatpush1.msra.mxu0 0.0
    %600 = vmatprep.mubr.f32.mxu0 0.0
    %601 = vmatmul.mubr.f32.gmra.mrb[0].mxu0 0.0
    %v602 = vpop.f32.mrb[0].mxu0
    %v603 = vadd.f32 0.0, %v602
    %v604 = vpop.f32.mrb[0].mxu0
    %v605 = vadd.f32 0.0, %v604
    %606 = vdwg.mxu0
    %v607 = vadd.f32 %v397, %v532
    %v608 = vadd.f32 %v398, %v534
    %v609 = vadd.f32 %v399, %v603
    %v610 = vadd.f32 %v400, %v605
    %v611 = vxor.u32 %v607, 2147483648
    %v612 = vmul.f32 %v611, 1.442695
    %v613 = vpow.pop %v612
    %v614 = vadd.f32 %v613, 1.0
    %v615 = vrcp.pop %v614
    %v616 = vmul.f32 1.0, %v615
    %v617 = vxor.u32 %v608, 2147483648
    %v618 = vmul.f32 %v617, 1.442695
    %v619 = vpow.pop %v618
    %v620 = vadd.f32 %v619, 1.0
    %v621 = vrcp.pop %v620
    %v622 = vmul.f32 1.0, %v621
    %v623 = vtanh.pop %v609
    %v624 = vxor.u32 %v610, 2147483648
    %v625 = vmul.f32 %v624, 1.442695
    %v626 = vpow.pop %v625
    %v627 = vadd.f32 %v626, 1.0
    %v628 = vrcp.pop %v627
    %v629 = vmul.f32 1.0, %v628
    %v630 = vmul.f32 %v622, 0.0
    %v631 = vmul.f32 %v616, %v623
    %v632 = vadd.f32 %v630, %v631
    %v633 = vtanh.pop %v632
    %v634 = vmul.f32 %v629, %v633
    %635 = vst [vmem:[#allocation3] sm:$0xff] %v634
    %v636 = vld [vmem:[#allocation2 + $0x20] sm:$0xff]
    %v637 = vld [vmem:[#allocation2 + $0x28] sm:$0xff]
    %v638 = vld [vmem:[#allocation2 + $0x30] sm:$0xff]
    %v639 = vld [vmem:[#allocation2 + $0x38] sm:$0xff]
    %v640 = vld [vmem:[#allocation4] sm:$0xff]
    %v641 = vld [vmem:[#allocation4 + $0x8] sm:$0xff]
    %v642 = vld [vmem:[#allocation4 + $0x10] sm:$0xff]
    %v643 = vld [vmem:[#allocation4 + $0x18] sm:$0xff]
    %v644 = vld [vmem:[#allocation4 + $0x20] sm:$0xff]
    %v645 = vld [vmem:[#allocation4 + $0x28] sm:$0xff]
    %v646 = vld [vmem:[#allocation4 + $0x30] sm:$0xff]
    %v647 = vld [vmem:[#allocation4 + $0x38] sm:$0xff]
    %v648 = vld [vmem:[#allocation4 + $0x40] sm:$0xff]
    %v649 = vld [vmem:[#allocation4 + $0x48] sm:$0xff]
    %v650 = vld [vmem:[#allocation4 + $0x50] sm:$0xff]
    %v651 = vld [vmem:[#allocation4 + $0x58] sm:$0xff]
    %v652 = vld [vmem:[#allocation4 + $0x60] sm:$0xff]
    %v653 = vld [vmem:[#allocation4 + $0x68] sm:$0xff]
    %v654 = vld [vmem:[#allocation4 + $0x70] sm:$0xff]
    %v655 = vld [vmem:[#allocation4 + $0x78] sm:$0xff]
    %v656 = vld [vmem:[#allocation4 + $0x80] sm:$0xff]
    %v657 = vld [vmem:[#allocation4 + $0x88] sm:$0xff]
    %v658 = vld [vmem:[#allocation4 + $0x90] sm:$0xff]
    %v659 = vld [vmem:[#allocation4 + $0x98] sm:$0xff]
    %v660 = vld [vmem:[#allocation4 + $0xa0] sm:$0xff]
    %v661 = vld [vmem:[#allocation4 + $0xa8] sm:$0xff]
    %v662 = vld [vmem:[#allocation4 + $0xb0] sm:$0xff]
    %v663 = vld [vmem:[#allocation4 + $0xb8] sm:$0xff]
    %v664 = vld [vmem:[#allocation4 + $0xc0] sm:$0xff]
    %v665 = vld [vmem:[#allocation4 + $0xc8] sm:$0xff]
    %v666 = vld [vmem:[#allocation4 + $0xd0] sm:$0xff]
    %v667 = vld [vmem:[#allocation4 + $0xd8] sm:$0xff]
    %v668 = vld [vmem:[#allocation4 + $0xe0] sm:$0xff]
    %v669 = vld [vmem:[#allocation4 + $0xe8] sm:$0xff]
    %v670 = vld [vmem:[#allocation4 + $0xf0] sm:$0xff]
    %v671 = vld [vmem:[#allocation4 + $0xf8] sm:$0xff]
    %v672 = vld [vmem:[#allocation4 + $0x100] sm:$0xff]
    %v673 = vld [vmem:[#allocation4 + $0x108] sm:$0xff]
    %v674 = vld [vmem:[#allocation4 + $0x110] sm:$0xff]
    %v675 = vld [vmem:[#allocation4 + $0x118] sm:$0xff]
    %v676 = vld [vmem:[#allocation4 + $0x120] sm:$0xff]
    %v677 = vld [vmem:[#allocation4 + $0x128] sm:$0xff]
    %v678 = vld [vmem:[#allocation4 + $0x130] sm:$0xff]
    %v679 = vld [vmem:[#allocation4 + $0x138] sm:$0xff]
    %v680 = vld [vmem:[#allocation4 + $0x140] sm:$0xff]
    %v681 = vld [vmem:[#allocation4 + $0x148] sm:$0xff]
    %v682 = vld [vmem:[#allocation4 + $0x150] sm:$0xff]
    %v683 = vld [vmem:[#allocation4 + $0x158] sm:$0xff]
    %v684 = vld [vmem:[#allocation4 + $0x160] sm:$0xff]
    %v685 = vld [vmem:[#allocation4 + $0x168] sm:$0xff]
    %v686 = vld [vmem:[#allocation4 + $0x170] sm:$0xff]
    %v687 = vld [vmem:[#allocation4 + $0x178] sm:$0xff]
    %v688 = vld [vmem:[#allocation4 + $0x180] sm:$0xff]
    %v689 = vld [vmem:[#allocation4 + $0x188] sm:$0xff]
    %v690 = vld [vmem:[#allocation4 + $0x190] sm:$0xff]
    %v691 = vld [vmem:[#allocation4 + $0x198] sm:$0xff]
    %v692 = vld [vmem:[#allocation4 + $0x1a0] sm:$0xff]
    %v693 = vld [vmem:[#allocation4 + $0x1a8] sm:$0xff]
    %v694 = vld [vmem:[#allocation4 + $0x1b0] sm:$0xff]
    %v695 = vld [vmem:[#allocation4 + $0x1b8] sm:$0xff]
    %v696 = vld [vmem:[#allocation4 + $0x1c0] sm:$0xff]
    %v697 = vld [vmem:[#allocation4 + $0x1c8] sm:$0xff]
    %v698 = vld [vmem:[#allocation4 + $0x1d0] sm:$0xff]
    %v699 = vld [vmem:[#allocation4 + $0x1d8] sm:$0xff]
    %v700 = vld [vmem:[#allocation4 + $0x1e0] sm:$0xff]
    %v701 = vld [vmem:[#allocation4 + $0x1e8] sm:$0xff]
    %v702 = vld [vmem:[#allocation4 + $0x1f0] sm:$0xff]
    %v703 = vld [vmem:[#allocation4 + $0x1f8] sm:$0xff]
    %704 = vmatprep.subr.mxu0 %v641
    %705 = vmatpush1.msra.mxu0 %v640
    %706 = vmatprep.subr.mxu0 %v645
    %707 = vmatpush1.msra.mxu0 %v644
    %708 = vmatprep.subr.mxu0 %v649
    %709 = vmatpush1.msra.mxu0 %v648
    %710 = vmatprep.subr.mxu0 %v653
    %711 = vmatpush1.msra.mxu0 %v652
    %712 = vmatprep.subr.mxu0 %v657
    %713 = vmatpush1.msra.mxu0 %v656
    %714 = vmatprep.subr.mxu0 %v661
    %715 = vmatpush1.msra.mxu0 %v660
    %716 = vmatprep.subr.mxu0 %v665
    %717 = vmatpush1.msra.mxu0 %v664
    %718 = vmatprep.subr.mxu0 %v669
    %719 = vmatpush1.msra.mxu0 %v668
    %720 = vmatprep.subr.mxu0 %v673
    %721 = vmatpush1.msra.mxu0 %v672
    %722 = vmatprep.subr.mxu0 %v677
    %723 = vmatpush1.msra.mxu0 %v676
    %724 = vmatprep.subr.mxu0 %v681
    %725 = vmatpush1.msra.mxu0 %v680
    %726 = vmatprep.subr.mxu0 %v685
    %727 = vmatpush1.msra.mxu0 %v684
    %728 = vmatprep.subr.mxu0 %v689
    %729 = vmatpush1.msra.mxu0 %v688
    %730 = vmatprep.subr.mxu0 %v693
    %731 = vmatpush1.msra.mxu0 %v692
    %732 = vmatprep.subr.mxu0 %v697
    %733 = vmatpush1.msra.mxu0 %v696
    %734 = vmatprep.subr.mxu0 %v701
    %735 = vmatpush1.msra.mxu0 %v700
    %736 = vmatprep.subr.mxu0 0.0
    %737 = vmatpush1.msra.mxu0 0.0
    %738 = vmatprep.subr.mxu0 0.0
    %739 = vmatpush1.msra.mxu0 0.0
    %740 = vmatprep.subr.mxu0 0.0
    %741 = vmatpush1.msra.mxu0 0.0
    %742 = vmatprep.subr.mxu0 0.0
    %743 = vmatpush1.msra.mxu0 0.0
    %744 = vmatprep.subr.mxu0 0.0
    %745 = vmatpush1.msra.mxu0 0.0
    %746 = vmatprep.subr.mxu0 0.0
    %747 = vmatpush1.msra.mxu0 0.0
    %748 = vmatprep.subr.mxu0 0.0
    %749 = vmatpush1.msra.mxu0 0.0
    %750 = vmatprep.subr.mxu0 0.0
    %751 = vmatpush1.msra.mxu0 0.0
    %752 = vmatprep.subr.mxu0 0.0
    %753 = vmatpush1.msra.mxu0 0.0
    %754 = vmatprep.subr.mxu0 0.0
    %755 = vmatpush1.msra.mxu0 0.0
    %756 = vmatprep.subr.mxu0 0.0
    %757 = vmatpush1.msra.mxu0 0.0
    %758 = vmatprep.subr.mxu0 0.0
    %759 = vmatpush1.msra.mxu0 0.0
    %760 = vmatprep.subr.mxu0 0.0
    %761 = vmatpush1.msra.mxu0 0.0
    %762 = vmatprep.subr.mxu0 0.0
    %763 = vmatpush1.msra.mxu0 0.0
    %764 = vmatprep.subr.mxu0 0.0
    %765 = vmatpush1.msra.mxu0 0.0
    %766 = vmatprep.subr.mxu0 0.0
    %767 = vmatpush1.msra.mxu0 0.0
    %768 = vmatprep.mubr.f32.mxu0 0.0
    %769 = vmatmul.mubr.f32.gmra.mrb[0].mxu0 %v634
    %v770 = vpop.f32.mrb[0].mxu0
    %v771 = vadd.f32 0.0, %v770
    %v772 = vpop.f32.mrb[0].mxu0
    %v773 = vadd.f32 0.0, %v772
    %774 = vdwg.mxu0
    %775 = vmatprep.subr.mxu0 %v643
    %776 = vmatpush1.msra.mxu0 %v642
    %777 = vmatprep.subr.mxu0 %v647
    %778 = vmatpush1.msra.mxu0 %v646
    %779 = vmatprep.subr.mxu0 %v651
    %780 = vmatpush1.msra.mxu0 %v650
    %781 = vmatprep.subr.mxu0 %v655
    %782 = vmatpush1.msra.mxu0 %v654
    %783 = vmatprep.subr.mxu0 %v659
    %784 = vmatpush1.msra.mxu0 %v658
    %785 = vmatprep.subr.mxu0 %v663
    %786 = vmatpush1.msra.mxu0 %v662
    %787 = vmatprep.subr.mxu0 %v667
    %788 = vmatpush1.msra.mxu0 %v666
    %789 = vmatprep.subr.mxu0 %v671
    %790 = vmatpush1.msra.mxu0 %v670
    %791 = vmatprep.subr.mxu0 %v675
    %792 = vmatpush1.msra.mxu0 %v674
    %793 = vmatprep.subr.mxu0 %v679
    %794 = vmatpush1.msra.mxu0 %v678
    %795 = vmatprep.subr.mxu0 %v683
    %796 = vmatpush1.msra.mxu0 %v682
    %797 = vmatprep.subr.mxu0 %v687
    %798 = vmatpush1.msra.mxu0 %v686
    %799 = vmatprep.subr.mxu0 %v691
    %800 = vmatpush1.msra.mxu0 %v690
    %801 = vmatprep.subr.mxu0 %v695
    %802 = vmatpush1.msra.mxu0 %v694
    %803 = vmatprep.subr.mxu0 %v699
    %804 = vmatpush1.msra.mxu0 %v698
    %805 = vmatprep.subr.mxu0 %v703
    %806 = vmatpush1.msra.mxu0 %v702
    %807 = vmatprep.subr.mxu0 0.0
    %808 = vmatpush1.msra.mxu0 0.0
    %809 = vmatprep.subr.mxu0 0.0
    %810 = vmatpush1.msra.mxu0 0.0
    %811 = vmatprep.subr.mxu0 0.0
    %812 = vmatpush1.msra.mxu0 0.0
    %813 = vmatprep.subr.mxu0 0.0
    %814 = vmatpush1.msra.mxu0 0.0
    %815 = vmatprep.subr.mxu0 0.0
    %816 = vmatpush1.msra.mxu0 0.0
    %817 = vmatprep.subr.mxu0 0.0
    %818 = vmatpush1.msra.mxu0 0.0
    %819 = vmatprep.subr.mxu0 0.0
    %820 = vmatpush1.msra.mxu0 0.0
    %821 = vmatprep.subr.mxu0 0.0
    %822 = vmatpush1.msra.mxu0 0.0
    %823 = vmatprep.subr.mxu0 0.0
    %824 = vmatpush1.msra.mxu0 0.0
    %825 = vmatprep.subr.mxu0 0.0
    %826 = vmatpush1.msra.mxu0 0.0
    %827 = vmatprep.subr.mxu0 0.0
    %828 = vmatpush1.msra.mxu0 0.0
    %829 = vmatprep.subr.mxu0 0.0
    %830 = vmatpush1.msra.mxu0 0.0
    %831 = vmatprep.subr.mxu0 0.0
    %832 = vmatpush1.msra.mxu0 0.0
    %833 = vmatprep.subr.mxu0 0.0
    %834 = vmatpush1.msra.mxu0 0.0
    %835 = vmatprep.subr.mxu0 0.0
    %836 = vmatpush1.msra.mxu0 0.0
    %837 = vmatprep.subr.mxu0 0.0
    %838 = vmatpush1.msra.mxu0 0.0
    %839 = vmatprep.mubr.f32.mxu0 0.0
    %840 = vmatmul.mubr.f32.gmra.mrb[0].mxu0 %v634
    %v841 = vpop.f32.mrb[0].mxu0
    %v842 = vadd.f32 0.0, %v841
    %v843 = vpop.f32.mrb[0].mxu0
    %v844 = vadd.f32 0.0, %v843
    %845 = vdwg.mxu0
    %v846 = vadd.f32 %v636, %v771
    %v847 = vadd.f32 %v637, %v773
    %v848 = vadd.f32 %v638, %v842
    %v849 = vadd.f32 %v639, %v844
    %v850 = vxor.u32 %v846, 2147483648
    %v851 = vmul.f32 %v850, 1.442695
    %v852 = vpow.pop %v851
    %v853 = vadd.f32 %v852, 1.0
    %v854 = vrcp.pop %v853
    %v855 = vmul.f32 1.0, %v854
    %v856 = vxor.u32 %v847, 2147483648
    %v857 = vmul.f32 %v856, 1.442695
    %v858 = vpow.pop %v857
    %v859 = vadd.f32 %v858, 1.0
    %v860 = vrcp.pop %v859
    %v861 = vmul.f32 1.0, %v860
    %v862 = vtanh.pop %v848
    %v863 = vxor.u32 %v849, 2147483648
    %v864 = vmul.f32 %v863, 1.442695
    %v865 = vpow.pop %v864
    %v866 = vadd.f32 %v865, 1.0
    %v867 = vrcp.pop %v866
    %v868 = vmul.f32 1.0, %v867
    %v869 = vmul.f32 %v861, %v632
    %v870 = vmul.f32 %v855, %v862
    %v871 = vadd.f32 %v869, %v870
    %v872 = vtanh.pop %v871
    %v873 = vmul.f32 %v868, %v872
    %874 = vst [vmem:[#allocation3 + $0x8] sm:$0xff] %v873
    %v875 = vld [vmem:[#allocation2 + $0x40] sm:$0xff]
    %v876 = vld [vmem:[#allocation2 + $0x48] sm:$0xff]
    %v877 = vld [vmem:[#allocation2 + $0x50] sm:$0xff]
    %v878 = vld [vmem:[#allocation2 + $0x58] sm:$0xff]
    %v879 = vld [vmem:[#allocation4] sm:$0xff]
    %v880 = vld [vmem:[#allocation4 + $0x8] sm:$0xff]
    %v881 = vld [vmem:[#allocation4 + $0x10] sm:$0xff]
    %v882 = vld [vmem:[#allocation4 + $0x18] sm:$0xff]
    %v883 = vld [vmem:[#allocation4 + $0x20] sm:$0xff]
    %v884 = vld [vmem:[#allocation4 + $0x28] sm:$0xff]
    %v885 = vld [vmem:[#allocation4 + $0x30] sm:$0xff]
    %v886 = vld [vmem:[#allocation4 + $0x38] sm:$0xff]
    %v887 = vld [vmem:[#allocation4 + $0x40] sm:$0xff]
    %v888 = vld [vmem:[#allocation4 + $0x48] sm:$0xff]
    %v889 = vld [vmem:[#allocation4 + $0x50] sm:$0xff]
    %v890 = vld [vmem:[#allocation4 + $0x58] sm:$0xff]
    %v891 = vld [vmem:[#allocation4 + $0x60] sm:$0xff]
    %v892 = vld [vmem:[#allocation4 + $0x68] sm:$0xff]
    %v893 = vld [vmem:[#allocation4 + $0x70] sm:$0xff]
    %v894 = vld [vmem:[#allocation4 + $0x78] sm:$0xff]
    %v895 = vld [vmem:[#allocation4 + $0x80] sm:$0xff]
    %v896 = vld [vmem:[#allocation4 + $0x88] sm:$0xff]
    %v897 = vld [vmem:[#allocation4 + $0x90] sm:$0xff]
    %v898 = vld [vmem:[#allocation4 + $0x98] sm:$0xff]
    %v899 = vld [vmem:[#allocation4 + $0xa0] sm:$0xff]
    %v900 = vld [vmem:[#allocation4 + $0xa8] sm:$0xff]
    %v901 = vld [vmem:[#allocation4 + $0xb0] sm:$0xff]
    %v902 = vld [vmem:[#allocation4 + $0xb8] sm:$0xff]
    %v903 = vld [vmem:[#allocation4 + $0xc0] sm:$0xff]
    %v904 = vld [vmem:[#allocation4 + $0xc8] sm:$0xff]
    %v905 = vld [vmem:[#allocation4 + $0xd0] sm:$0xff]
    %v906 = vld [vmem:[#allocation4 + $0xd8] sm:$0xff]
    %v907 = vld [vmem:[#allocation4 + $0xe0] sm:$0xff]
    %v908 = vld [vmem:[#allocation4 + $0xe8] sm:$0xff]
    %v909 = vld [vmem:[#allocation4 + $0xf0] sm:$0xff]
    %v910 = vld [vmem:[#allocation4 + $0xf8] sm:$0xff]
    %v911 = vld [vmem:[#allocation4 + $0x100] sm:$0xff]
    %v912 = vld [vmem:[#allocation4 + $0x108] sm:$0xff]
    %v913 = vld [vmem:[#allocation4 + $0x110] sm:$0xff]
    %v914 = vld [vmem:[#allocation4 + $0x118] sm:$0xff]
    %v915 = vld [vmem:[#allocation4 + $0x120] sm:$0xff]
    %v916 = vld [vmem:[#allocation4 + $0x128] sm:$0xff]
    %v917 = vld [vmem:[#allocation4 + $0x130] sm:$0xff]
    %v918 = vld [vmem:[#allocation4 + $0x138] sm:$0xff]
    %v919 = vld [vmem:[#allocation4 + $0x140] sm:$0xff]
    %v920 = vld [vmem:[#allocation4 + $0x148] sm:$0xff]
    %v921 = vld [vmem:[#allocation4 + $0x150] sm:$0xff]
    %v922 = vld [vmem:[#allocation4 + $0x158] sm:$0xff]
    %v923 = vld [vmem:[#allocation4 + $0x160] sm:$0xff]
    %v924 = vld [vmem:[#allocation4 + $0x168] sm:$0xff]
    %v925 = vld [vmem:[#allocation4 + $0x170] sm:$0xff]
    %v926 = vld [vmem:[#allocation4 + $0x178] sm:$0xff]
    %v927 = vld [vmem:[#allocation4 + $0x180] sm:$0xff]
    %v928 = vld [vmem:[#allocation4 + $0x188] sm:$0xff]
    %v929 = vld [vmem:[#allocation4 + $0x190] sm:$0xff]
    %v930 = vld [vmem:[#allocation4 + $0x198] sm:$0xff]
    %v931 = vld [vmem:[#allocation4 + $0x1a0] sm:$0xff]
    %v932 = vld [vmem:[#allocation4 + $0x1a8] sm:$0xff]
    %v933 = vld [vmem:[#allocation4 + $0x1b0] sm:$0xff]
    %v934 = vld [vmem:[#allocation4 + $0x1b8] sm:$0xff]
    %v935 = vld [vmem:[#allocation4 + $0x1c0] sm:$0xff]
    %v936 = vld [vmem:[#allocation4 + $0x1c8] sm:$0xff]
    %v937 = vld [vmem:[#allocation4 + $0x1d0] sm:$0xff]
    %v938 = vld [vmem:[#allocation4 + $0x1d8] sm:$0xff]
    %v939 = vld [vmem:[#allocation4 + $0x1e0] sm:$0xff]
    %v940 = vld [vmem:[#allocation4 + $0x1e8] sm:$0xff]
    %v941 = vld [vmem:[#allocation4 + $0x1f0] sm:$0xff]
    %v942 = vld [vmem:[#allocation4 + $0x1f8] sm:$0xff]
    %943 = vmatprep.subr.mxu0 %v880
    %944 = vmatpush1.msra.mxu0 %v879
    %945 = vmatprep.subr.mxu0 %v884
    %946 = vmatpush1.msra.mxu0 %v883
    %947 = vmatprep.subr.mxu0 %v888
    %948 = vmatpush1.msra.mxu0 %v887
    %949 = vmatprep.subr.mxu0 %v892
    %950 = vmatpush1.msra.mxu0 %v891
    %951 = vmatprep.subr.mxu0 %v896
    %952 = vmatpush1.msra.mxu0 %v895
    %953 = vmatprep.subr.mxu0 %v900
    %954 = vmatpush1.msra.mxu0 %v899
    %955 = vmatprep.subr.mxu0 %v904
    %956 = vmatpush1.msra.mxu0 %v903
    %957 = vmatprep.subr.mxu0 %v908
    %958 = vmatpush1.msra.mxu0 %v907
    %959 = vmatprep.subr.mxu0 %v912
    %960 = vmatpush1.msra.mxu0 %v911
    %961 = vmatprep.subr.mxu0 %v916
    %962 = vmatpush1.msra.mxu0 %v915
    %963 = vmatprep.subr.mxu0 %v920
    %964 = vmatpush1.msra.mxu0 %v919
    %965 = vmatprep.subr.mxu0 %v924
    %966 = vmatpush1.msra.mxu0 %v923
    %967 = vmatprep.subr.mxu0 %v928
    %968 = vmatpush1.msra.mxu0 %v927
    %969 = vmatprep.subr.mxu0 %v932
    %970 = vmatpush1.msra.mxu0 %v931
    %971 = vmatprep.subr.mxu0 %v936
    %972 = vmatpush1.msra.mxu0 %v935
    %973 = vmatprep.subr.mxu0 %v940
    %974 = vmatpush1.msra.mxu0 %v939
    %975 = vmatprep.subr.mxu0 0.0
    %976 = vmatpush1.msra.mxu0 0.0
    %977 = vmatprep.subr.mxu0 0.0
    %978 = vmatpush1.msra.mxu0 0.0
    %979 = vmatprep.subr.mxu0 0.0
    %980 = vmatpush1.msra.mxu0 0.0
    %981 = vmatprep.subr.mxu0 0.0
    %982 = vmatpush1.msra.mxu0 0.0
    %983 = vmatprep.subr.mxu0 0.0
    %984 = vmatpush1.msra.mxu0 0.0
    %985 = vmatprep.subr.mxu0 0.0
    %986 = vmatpush1.msra.mxu0 0.0
    %987 = vmatprep.subr.mxu0 0.0
    %988 = vmatpush1.msra.mxu0 0.0
    %989 = vmatprep.subr.mxu0 0.0
    %990 = vmatpush1.msra.mxu0 0.0
    %991 = vmatprep.subr.mxu0 0.0
    %992 = vmatpush1.msra.mxu0 0.0
    %993 = vmatprep.subr.mxu0 0.0
    %994 = vmatpush1.msra.mxu0 0.0
    %995 = vmatprep.subr.mxu0 0.0
    %996 = vmatpush1.msra.mxu0 0.0
    %997 = vmatprep.subr.mxu0 0.0
    %998 = vmatpush1.msra.mxu0 0.0
    %999 = vmatprep.subr.mxu0 0.0
    %1000 = vmatpush1.msra.mxu0 0.0
    %1001 = vmatprep.subr.mxu0 0.0
    %1002 = vmatpush1.msra.mxu0 0.0
    %1003 = vmatprep.subr.mxu0 0.0
    %1004 = vmatpush1.msra.mxu0 0.0
    %1005 = vmatprep.subr.mxu0 0.0
    %1006 = vmatpush1.msra.mxu0 0.0
    %1007 = vmatprep.mubr.f32.mxu0 0.0
    %1008 = vmatmul.mubr.f32.gmra.mrb[0].mxu0 %v873
    %v1009 = vpop.f32.mrb[0].mxu0
    %v1010 = vadd.f32 0.0, %v1009
    %v1011 = vpop.f32.mrb[0].mxu0
    %v1012 = vadd.f32 0.0, %v1011
    %1013 = vdwg.mxu0
    %1014 = vmatprep.subr.mxu0 %v882
    %1015 = vmatpush1.msra.mxu0 %v881
    %1016 = vmatprep.subr.mxu0 %v886
    %1017 = vmatpush1.msra.mxu0 %v885
    %1018 = vmatprep.subr.mxu0 %v890
    %1019 = vmatpush1.msra.mxu0 %v889
    %1020 = vmatprep.subr.mxu0 %v894
    %1021 = vmatpush1.msra.mxu0 %v893
    %1022 = vmatprep.subr.mxu0 %v898
    %1023 = vmatpush1.msra.mxu0 %v897
    %1024 = vmatprep.subr.mxu0 %v902
    %1025 = vmatpush1.msra.mxu0 %v901
    %1026 = vmatprep.subr.mxu0 %v906
    %1027 = vmatpush1.msra.mxu0 %v905
    %1028 = vmatprep.subr.mxu0 %v910
    %1029 = vmatpush1.msra.mxu0 %v909
    %1030 = vmatprep.subr.mxu0 %v914
    %1031 = vmatpush1.msra.mxu0 %v913
    %1032 = vmatprep.subr.mxu0 %v918
    %1033 = vmatpush1.msra.mxu0 %v917
    %1034 = vmatprep.subr.mxu0 %v922
    %1035 = vmatpush1.msra.mxu0 %v921
    %1036 = vmatprep.subr.mxu0 %v926
    %1037 = vmatpush1.msra.mxu0 %v925
    %1038 = vmatprep.subr.mxu0 %v930
    %1039 = vmatpush1.msra.mxu0 %v929
    %1040 = vmatprep.subr.mxu0 %v934
    %1041 = vmatpush1.msra.mxu0 %v933
    %1042 = vmatprep.subr.mxu0 %v938
    %1043 = vmatpush1.msra.mxu0 %v937
    %1044 = vmatprep.subr.mxu0 %v942
    %1045 = vmatpush1.msra.mxu0 %v941
    %1046 = vmatprep.subr.mxu0 0.0
    %1047 = vmatpush1.msra.mxu0 0.0
    %1048 = vmatprep.subr.mxu0 0.0
    %1049 = vmatpush1.msra.mxu0 0.0
    %1050 = vmatprep.subr.mxu0 0.0
    %1051 = vmatpush1.msra.mxu0 0.0
    %1052 = vmatprep.subr.mxu0 0.0
    %1053 = vmatpush1.msra.mxu0 0.0
    %1054 = vmatprep.subr.mxu0 0.0
    %1055 = vmatpush1.msra.mxu0 0.0
    %1056 = vmatprep.subr.mxu0 0.0
    %1057 = vmatpush1.msra.mxu0 0.0
    %1058 = vmatprep.subr.mxu0 0.0
    %1059 = vmatpush1.msra.mxu0 0.0
    %1060 = vmatprep.subr.mxu0 0.0
    %1061 = vmatpush1.msra.mxu0 0.0
    %1062 = vmatprep.subr.mxu0 0.0
    %1063 = vmatpush1.msra.mxu0 0.0
    %1064 = vmatprep.subr.mxu0 0.0
    %1065 = vmatpush1.msra.mxu0 0.0
    %1066 = vmatprep.subr.mxu0 0.0
    %1067 = vmatpush1.msra.mxu0 0.0
    %1068 = vmatprep.subr.mxu0 0.0
    %1069 = vmatpush1.msra.mxu0 0.0
    %1070 = vmatprep.subr.mxu0 0.0
    %1071 = vmatpush1.msra.mxu0 0.0
    %1072 = vmatprep.subr.mxu0 0.0
    %1073 = vmatpush1.msra.mxu0 0.0
    %1074 = vmatprep.subr.mxu0 0.0
    %1075 = vmatpush1.msra.mxu0 0.0
    %1076 = vmatprep.subr.mxu0 0.0
    %1077 = vmatpush1.msra.mxu0 0.0
    %1078 = vmatprep.mubr.f32.mxu0 0.0
    %1079 = vmatmul.mubr.f32.gmra.mrb[0].mxu0 %v873
    %v1080 = vpop.f32.mrb[0].mxu0
    %v1081 = vadd.f32 0.0, %v1080
    %v1082 = vpop.f32.mrb[0].mxu0
    %v1083 = vadd.f32 0.0, %v1082
    %1084 = vdwg.mxu0
    %v1085 = vadd.f32 %v875, %v1010
    %v1086 = vadd.f32 %v876, %v1012
    %v1087 = vadd.f32 %v877, %v1081
    %v1088 = vadd.f32 %v878, %v1083
    %v1089 = vxor.u32 %v1085, 2147483648
    %v1090 = vmul.f32 %v1089, 1.442695
    %v1091 = vpow.pop %v1090
    %v1092 = vadd.f32 %v1091, 1.0
    %v1093 = vrcp.pop %v1092
    %v1094 = vmul.f32 1.0, %v1093
    %v1095 = vxor.u32 %v1086, 2147483648
    %v1096 = vmul.f32 %v1095, 1.442695
    %v1097 = vpow.pop %v1096
    %v1098 = vadd.f32 %v1097, 1.0
    %v1099 = vrcp.pop %v1098
    %v1100 = vmul.f32 1.0, %v1099
    %v1101 = vtanh.pop %v1087
    %v1102 = vxor.u32 %v1088, 2147483648
    %v1103 = vmul.f32 %v1102, 1.442695
    %v1104 = vpow.pop %v1103
    %v1105 = vadd.f32 %v1104, 1.0
    %v1106 = vrcp.pop %v1105
    %v1107 = vmul.f32 1.0, %v1106
    %v1108 = vmul.f32 %v1100, %v871
    %v1109 = vmul.f32 %v1094, %v1101
    %v1110 = vadd.f32 %v1108, %v1109
    %v1111 = vtanh.pop %v1110
    %v1112 = vmul.f32 %v1107, %v1111
    %1113 = vst [vmem:[#allocation3 + $0x10] sm:$0xff] %v1112
    %v1114 = vld [vmem:[#allocation2 + $0x60] sm:$0xff]
    %v1115 = vld [vmem:[#allocation2 + $0x68] sm:$0xff]
    %v1116 = vld [vmem:[#allocation2 + $0x70] sm:$0xff]
    %v1117 = vld [vmem:[#allocation2 + $0x78] sm:$0xff]
    %v1118 = vld [vmem:[#allocation4] sm:$0xff]
    %v1119 = vld [vmem:[#allocation4 + $0x8] sm:$0xff]
    %v1120 = vld [vmem:[#allocation4 + $0x10] sm:$0xff]
    %v1121 = vld [vmem:[#allocation4 + $0x18] sm:$0xff]
    %v1122 = vld [vmem:[#allocation4 + $0x20] sm:$0xff]
    %v1123 = vld [vmem:[#allocation4 + $0x28] sm:$0xff]
    %v1124 = vld [vmem:[#allocation4 + $0x30] sm:$0xff]
    %v1125 = vld [vmem:[#allocation4 + $0x38] sm:$0xff]
    %v1126 = vld [vmem:[#allocation4 + $0x40] sm:$0xff]
    %v1127 = vld [vmem:[#allocation4 + $0x48] sm:$0xff]
    %v1128 = vld [vmem:[#allocation4 + $0x50] sm:$0xff]
    %v1129 = vld [vmem:[#allocation4 + $0x58] sm:$0xff]
    %v1130 = vld [vmem:[#allocation4 + $0x60] sm:$0xff]
    %v1131 = vld [vmem:[#allocation4 + $0x68] sm:$0xff]
    %v1132 = vld [vmem:[#allocation4 + $0x70] sm:$0xff]
    %v1133 = vld [vmem:[#allocation4 + $0x78] sm:$0xff]
    %v1134 = vld [vmem:[#allocation4 + $0x80] sm:$0xff]
    %v1135 = vld [vmem:[#allocation4 + $0x88] sm:$0xff]
    %v1136 = vld [vmem:[#allocation4 + $0x90] sm:$0xff]
    %v1137 = vld [vmem:[#allocation4 + $0x98] sm:$0xff]
    %v1138 = vld [vmem:[#allocation4 + $0xa0] sm:$0xff]
    %v1139 = vld [vmem:[#allocation4 + $0xa8] sm:$0xff]
    %v1140 = vld [vmem:[#allocation4 + $0xb0] sm:$0xff]
    %v1141 = vld [vmem:[#allocation4 + $0xb8] sm:$0xff]
    %v1142 = vld [vmem:[#allocation4 + $0xc0] sm:$0xff]
    %v1143 = vld [vmem:[#allocation4 + $0xc8] sm:$0xff]
    %v1144 = vld [vmem:[#allocation4 + $0xd0] sm:$0xff]
    %v1145 = vld [vmem:[#allocation4 + $0xd8] sm:$0xff]
    %v1146 = vld [vmem:[#allocation4 + $0xe0] sm:$0xff]
    %v1147 = vld [vmem:[#allocation4 + $0xe8] sm:$0xff]
    %v1148 = vld [vmem:[#allocation4 + $0xf0] sm:$0xff]
    %v1149 = vld [vmem:[#allocation4 + $0xf8] sm:$0xff]
    %v1150 = vld [vmem:[#allocation4 + $0x100] sm:$0xff]
    %v1151 = vld [vmem:[#allocation4 + $0x108] sm:$0xff]
    %v1152 = vld [vmem:[#allocation4 + $0x110] sm:$0xff]
    %v1153 = vld [vmem:[#allocation4 + $0x118] sm:$0xff]
    %v1154 = vld [vmem:[#allocation4 + $0x120] sm:$0xff]
    %v1155 = vld [vmem:[#allocation4 + $0x128] sm:$0xff]
    %v1156 = vld [vmem:[#allocation4 + $0x130] sm:$0xff]
    %v1157 = vld [vmem:[#allocation4 + $0x138] sm:$0xff]
    %v1158 = vld [vmem:[#allocation4 + $0x140] sm:$0xff]
    %v1159 = vld [vmem:[#allocation4 + $0x148] sm:$0xff]
    %v1160 = vld [vmem:[#allocation4 + $0x150] sm:$0xff]
    %v1161 = vld [vmem:[#allocation4 + $0x158] sm:$0xff]
    %v1162 = vld [vmem:[#allocation4 + $0x160] sm:$0xff]
    %v1163 = vld [vmem:[#allocation4 + $0x168] sm:$0xff]
    %v1164 = vld [vmem:[#allocation4 + $0x170] sm:$0xff]
    %v1165 = vld [vmem:[#allocation4 + $0x178] sm:$0xff]
    %v1166 = vld [vmem:[#allocation4 + $0x180] sm:$0xff]
    %v1167 = vld [vmem:[#allocation4 + $0x188] sm:$0xff]
    %v1168 = vld [vmem:[#allocation4 + $0x190] sm:$0xff]
    %v1169 = vld [vmem:[#allocation4 + $0x198] sm:$0xff]
    %v1170 = vld [vmem:[#allocation4 + $0x1a0] sm:$0xff]
    %v1171 = vld [vmem:[#allocation4 + $0x1a8] sm:$0xff]
    %v1172 = vld [vmem:[#allocation4 + $0x1b0] sm:$0xff]
    %v1173 = vld [vmem:[#allocation4 + $0x1b8] sm:$0xff]
    %v1174 = vld [vmem:[#allocation4 + $0x1c0] sm:$0xff]
    %v1175 = vld [vmem:[#allocation4 + $0x1c8] sm:$0xff]
    %v1176 = vld [vmem:[#allocation4 + $0x1d0] sm:$0xff]
    %v1177 = vld [vmem:[#allocation4 + $0x1d8] sm:$0xff]
    %v1178 = vld [vmem:[#allocation4 + $0x1e0] sm:$0xff]
    %v1179 = vld [vmem:[#allocation4 + $0x1e8] sm:$0xff]
    %v1180 = vld [vmem:[#allocation4 + $0x1f0] sm:$0xff]
    %v1181 = vld [vmem:[#allocation4 + $0x1f8] sm:$0xff]
    %1182 = vmatprep.subr.mxu0 %v1119
    %1183 = vmatpush1.msra.mxu0 %v1118
    %1184 = vmatprep.subr.mxu0 %v1123
    %1185 = vmatpush1.msra.mxu0 %v1122
    %1186 = vmatprep.subr.mxu0 %v1127
    %1187 = vmatpush1.msra.mxu0 %v1126
    %1188 = vmatprep.subr.mxu0 %v1131
    %1189 = vmatpush1.msra.mxu0 %v1130
    %1190 = vmatprep.subr.mxu0 %v1135
    %1191 = vmatpush1.msra.mxu0 %v1134
    %1192 = vmatprep.subr.mxu0 %v1139
    %1193 = vmatpush1.msra.mxu0 %v1138
    %1194 = vmatprep.subr.mxu0 %v1143
    %1195 = vmatpush1.msra.mxu0 %v1142
    %1196 = vmatprep.subr.mxu0 %v1147
    %1197 = vmatpush1.msra.mxu0 %v1146
    %1198 = vmatprep.subr.mxu0 %v1151
    %1199 = vmatpush1.msra.mxu0 %v1150
    %1200 = vmatprep.subr.mxu0 %v1155
    %1201 = vmatpush1.msra.mxu0 %v1154
    %1202 = vmatprep.subr.mxu0 %v1159
    %1203 = vmatpush1.msra.mxu0 %v1158
    %1204 = vmatprep.subr.mxu0 %v1163
    %1205 = vmatpush1.msra.mxu0 %v1162
    %1206 = vmatprep.subr.mxu0 %v1167
    %1207 = vmatpush1.msra.mxu0 %v1166
    %1208 = vmatprep.subr.mxu0 %v1171
    %1209 = vmatpush1.msra.mxu0 %v1170
    %1210 = vmatprep.subr.mxu0 %v1175
    %1211 = vmatpush1.msra.mxu0 %v1174
    %1212 = vmatprep.subr.mxu0 %v1179
    %1213 = vmatpush1.msra.mxu0 %v1178
    %1214 = vmatprep.subr.mxu0 0.0
    %1215 = vmatpush1.msra.mxu0 0.0
    %1216 = vmatprep.subr.mxu0 0.0
    %1217 = vmatpush1.msra.mxu0 0.0
    %1218 = vmatprep.subr.mxu0 0.0
    %1219 = vmatpush1.msra.mxu0 0.0
    %1220 = vmatprep.subr.mxu0 0.0
    %1221 = vmatpush1.msra.mxu0 0.0
    %1222 = vmatprep.subr.mxu0 0.0
    %1223 = vmatpush1.msra.mxu0 0.0
    %1224 = vmatprep.subr.mxu0 0.0
    %1225 = vmatpush1.msra.mxu0 0.0
    %1226 = vmatprep.subr.mxu0 0.0
    %1227 = vmatpush1.msra.mxu0 0.0
    %1228 = vmatprep.subr.mxu0 0.0
    %1229 = vmatpush1.msra.mxu0 0.0
    %1230 = vmatprep.subr.mxu0 0.0
    %1231 = vmatpush1.msra.mxu0 0.0
    %1232 = vmatprep.subr.mxu0 0.0
    %1233 = vmatpush1.msra.mxu0 0.0
    %1234 = vmatprep.subr.mxu0 0.0
    %1235 = vmatpush1.msra.mxu0 0.0
    %1236 = vmatprep.subr.mxu0 0.0
    %1237 = vmatpush1.msra.mxu0 0.0
    %1238 = vmatprep.subr.mxu0 0.0
    %1239 = vmatpush1.msra.mxu0 0.0
    %1240 = vmatprep.subr.mxu0 0.0
    %1241 = vmatpush1.msra.mxu0 0.0
    %1242 = vmatprep.subr.mxu0 0.0
    %1243 = vmatpush1.msra.mxu0 0.0
    %1244 = vmatprep.subr.mxu0 0.0
    %1245 = vmatpush1.msra.mxu0 0.0
    %1246 = vmatprep.mubr.f32.mxu0 0.0
    %1247 = vmatmul.mubr.f32.gmra.mrb[0].mxu0 %v1112
    %v1248 = vpop.f32.mrb[0].mxu0
    %v1249 = vadd.f32 0.0, %v1248
    %v1250 = vpop.f32.mrb[0].mxu0
    %v1251 = vadd.f32 0.0, %v1250
    %1252 = vdwg.mxu0
    %1253 = vmatprep.subr.mxu0 %v1121
    %1254 = vmatpush1.msra.mxu0 %v1120
    %1255 = vmatprep.subr.mxu0 %v1125
    %1256 = vmatpush1.msra.mxu0 %v1124
    %1257 = vmatprep.subr.mxu0 %v1129
    %1258 = vmatpush1.msra.mxu0 %v1128
    %1259 = vmatprep.subr.mxu0 %v1133
    %1260 = vmatpush1.msra.mxu0 %v1132
    %1261 = vmatprep.subr.mxu0 %v1137
    %1262 = vmatpush1.msra.mxu0 %v1136
    %1263 = vmatprep.subr.mxu0 %v1141
    %1264 = vmatpush1.msra.mxu0 %v1140
    %1265 = vmatprep.subr.mxu0 %v1145
    %1266 = vmatpush1.msra.mxu0 %v1144
    %1267 = vmatprep.subr.mxu0 %v1149
    %1268 = vmatpush1.msra.mxu0 %v1148
    %1269 = vmatprep.subr.mxu0 %v1153
    %1270 = vmatpush1.msra.mxu0 %v1152
    %1271 = vmatprep.subr.mxu0 %v1157
    %1272 = vmatpush1.msra.mxu0 %v1156
    %1273 = vmatprep.subr.mxu0 %v1161
    %1274 = vmatpush1.msra.mxu0 %v1160
    %1275 = vmatprep.subr.mxu0 %v1165
    %1276 = vmatpush1.msra.mxu0 %v1164
    %1277 = vmatprep.subr.mxu0 %v1169
    %1278 = vmatpush1.msra.mxu0 %v1168
    %1279 = vmatprep.subr.mxu0 %v1173
    %1280 = vmatpush1.msra.mxu0 %v1172
    %1281 = vmatprep.subr.mxu0 %v1177
    %1282 = vmatpush1.msra.mxu0 %v1176
    %1283 = vmatprep.subr.mxu0 %v1181
    %1284 = vmatpush1.msra.mxu0 %v1180
    %1285 = vmatprep.subr.mxu0 0.0
    %1286 = vmatpush1.msra.mxu0 0.0
    %1287 = vmatprep.subr.mxu0 0.0
    %1288 = vmatpush1.msra.mxu0 0.0
    %1289 = vmatprep.subr.mxu0 0.0
    %1290 = vmatpush1.msra.mxu0 0.0
    %1291 = vmatprep.subr.mxu0 0.0
    %1292 = vmatpush1.msra.mxu0 0.0
    %1293 = vmatprep.subr.mxu0 0.0
    %1294 = vmatpush1.msra.mxu0 0.0
    %1295 = vmatprep.subr.mxu0 0.0
    %1296 = vmatpush1.msra.mxu0 0.0
    %1297 = vmatprep.subr.mxu0 0.0
    %1298 = vmatpush1.msra.mxu0 0.0
    %1299 = vmatprep.subr.mxu0 0.0
    %1300 = vmatpush1.msra.mxu0 0.0
    %1301 = vmatprep.subr.mxu0 0.0
    %1302 = vmatpush1.msra.mxu0 0.0
    %1303 = vmatprep.subr.mxu0 0.0
    %1304 = vmatpush1.msra.mxu0 0.0
    %1305 = vmatprep.subr.mxu0 0.0
    %1306 = vmatpush1.msra.mxu0 0.0
    %1307 = vmatprep.subr.mxu0 0.0
    %1308 = vmatpush1.msra.mxu0 0.0
    %1309 = vmatprep.subr.mxu0 0.0
    %1310 = vmatpush1.msra.mxu0 0.0
    %1311 = vmatprep.subr.mxu0 0.0
    %1312 = vmatpush1.msra.mxu0 0.0
    %1313 = vmatprep.subr.mxu0 0.0
    %1314 = vmatpush1.msra.mxu0 0.0
    %1315 = vmatprep.subr.mxu0 0.0
    %1316 = vmatpush1.msra.mxu0 0.0
    %1317 = vmatprep.mubr.f32.mxu0 0.0
    %1318 = vmatmul.mubr.f32.gmra.mrb[0].mxu0 %v1112
    %v1319 = vpop.f32.mrb[0].mxu0
    %v1320 = vadd.f32 0.0, %v1319
    %v1321 = vpop.f32.mrb[0].mxu0
    %v1322 = vadd.f32 0.0, %v1321
    %1323 = vdwg.mxu0
    %v1324 = vadd.f32 %v1114, %v1249
    %v1325 = vadd.f32 %v1115, %v1251
    %v1326 = vadd.f32 %v1116, %v1320
    %v1327 = vadd.f32 %v1117, %v1322
    %v1328 = vxor.u32 %v1324, 2147483648
    %v1329 = vmul.f32 %v1328, 1.442695
    %v1330 = vpow.pop %v1329
    %v1331 = vadd.f32 %v1330, 1.0
    %v1332 = vrcp.pop %v1331
    %v1333 = vmul.f32 1.0, %v1332
    %v1334 = vxor.u32 %v1325, 2147483648
    %v1335 = vmul.f32 %v1334, 1.442695
    %v1336 = vpow.pop %v1335
    %v1337 = vadd.f32 %v1336, 1.0
    %v1338 = vrcp.pop %v1337
    %v1339 = vmul.f32 1.0, %v1338
    %v1340 = vtanh.pop %v1326
    %v1341 = vxor.u32 %v1327, 2147483648
    %v1342 = vmul.f32 %v1341, 1.442695
    %v1343 = vpow.pop %v1342
    %v1344 = vadd.f32 %v1343, 1.0
    %v1345 = vrcp.pop %v1344
    %v1346 = vmul.f32 1.0, %v1345
    %v1347 = vmul.f32 %v1339, %v1110
    %v1348 = vmul.f32 %v1333, %v1340
    %v1349 = vadd.f32 %v1347, %v1348
    %v1350 = vtanh.pop %v1349
    %v1351 = vmul.f32 %v1346, %v1350
    %1352 = vst [vmem:[#allocation3 + $0x18] sm:$0xff] %v1351
    %v1353 = vld [vmem:[#allocation2 + $0x80] sm:$0xff]
    %v1354 = vld [vmem:[#allocation2 + $0x88] sm:$0xff]
    %v1355 = vld [vmem:[#allocation2 + $0x90] sm:$0xff]
    %v1356 = vld [vmem:[#allocation2 + $0x98] sm:$0xff]
    %v1357 = vld [vmem:[#allocation4] sm:$0xff]
    %v1358 = vld [vmem:[#allocation4 + $0x8] sm:$0xff]
    %v1359 = vld [vmem:[#allocation4 + $0x10] sm:$0xff]
    %v1360 = vld [vmem:[#allocation4 + $0x18] sm:$0xff]
    %v1361 = vld [vmem:[#allocation4 + $0x20] sm:$0xff]
    %v1362 = vld [vmem:[#allocation4 + $0x28] sm:$0xff]
    %v1363 = vld [vmem:[#allocation4 + $0x30] sm:$0xff]
    %v1364 = vld [vmem:[#allocation4 + $0x38] sm:$0xff]
    %v1365 = vld [vmem:[#allocation4 + $0x40] sm:$0xff]
    %v1366 = vld [vmem:[#allocation4 + $0x48] sm:$0xff]
    %v1367 = vld [vmem:[#allocation4 + $0x50] sm:$0xff]
    %v1368 = vld [vmem:[#allocation4 + $0x58] sm:$0xff]
    %v1369 = vld [vmem:[#allocation4 + $0x60] sm:$0xff]
    %v1370 = vld [vmem:[#allocation4 + $0x68] sm:$0xff]
    %v1371 = vld [vmem:[#allocation4 + $0x70] sm:$0xff]
    %v1372 = vld [vmem:[#allocation4 + $0x78] sm:$0xff]
    %v1373 = vld [vmem:[#allocation4 + $0x80] sm:$0xff]
    %v1374 = vld [vmem:[#allocation4 + $0x88] sm:$0xff]
    %v1375 = vld [vmem:[#allocation4 + $0x90] sm:$0xff]
    %v1376 = vld [vmem:[#allocation4 + $0x98] sm:$0xff]
    %v1377 = vld [vmem:[#allocation4 + $0xa0] sm:$0xff]
    %v1378 = vld [vmem:[#allocation4 + $0xa8] sm:$0xff]
    %v1379 = vld [vmem:[#allocation4 + $0xb0] sm:$0xff]
    %v1380 = vld [vmem:[#allocation4 + $0xb8] sm:$0xff]
    %v1381 = vld [vmem:[#allocation4 + $0xc0] sm:$0xff]
    %v1382 = vld [vmem:[#allocation4 + $0xc8] sm:$0xff]
    %v1383 = vld [vmem:[#allocation4 + $0xd0] sm:$0xff]
    %v1384 = vld [vmem:[#allocation4 + $0xd8] sm:$0xff]
    %v1385 = vld [vmem:[#allocation4 + $0xe0] sm:$0xff]
    %v1386 = vld [vmem:[#allocation4 + $0xe8] sm:$0xff]
    %v1387 = vld [vmem:[#allocation4 + $0xf0] sm:$0xff]
    %v1388 = vld [vmem:[#allocation4 + $0xf8] sm:$0xff]
    %v1389 = vld [vmem:[#allocation4 + $0x100] sm:$0xff]
    %v1390 = vld [vmem:[#allocation4 + $0x108] sm:$0xff]
    %v1391 = vld [vmem:[#allocation4 + $0x110] sm:$0xff]
    %v1392 = vld [vmem:[#allocation4 + $0x118] sm:$0xff]
    %v1393 = vld [vmem:[#allocation4 + $0x120] sm:$0xff]
    %v1394 = vld [vmem:[#allocation4 + $0x128] sm:$0xff]
    %v1395 = vld [vmem:[#allocation4 + $0x130] sm:$0xff]
    %v1396 = vld [vmem:[#allocation4 + $0x138] sm:$0xff]
    %v1397 = vld [vmem:[#allocation4 + $0x140] sm:$0xff]
    %v1398 = vld [vmem:[#allocation4 + $0x148] sm:$0xff]
    %v1399 = vld [vmem:[#allocation4 + $0x150] sm:$0xff]
    %v1400 = vld [vmem:[#allocation4 + $0x158] sm:$0xff]
    %v1401 = vld [vmem:[#allocation4 + $0x160] sm:$0xff]
    %v1402 = vld [vmem:[#allocation4 + $0x168] sm:$0xff]
    %v1403 = vld [vmem:[#allocation4 + $0x170] sm:$0xff]
    %v1404 = vld [vmem:[#allocation4 + $0x178] sm:$0xff]
    %v1405 = vld [vmem:[#allocation4 + $0x180] sm:$0xff]
    %v1406 = vld [vmem:[#allocation4 + $0x188] sm:$0xff]
    %v1407 = vld [vmem:[#allocation4 + $0x190] sm:$0xff]
    %v1408 = vld [vmem:[#allocation4 + $0x198] sm:$0xff]
    %v1409 = vld [vmem:[#allocation4 + $0x1a0] sm:$0xff]
    %v1410 = vld [vmem:[#allocation4 + $0x1a8] sm:$0xff]
    %v1411 = vld [vmem:[#allocation4 + $0x1b0] sm:$0xff]
    %v1412 = vld [vmem:[#allocation4 + $0x1b8] sm:$0xff]
    %v1413 = vld [vmem:[#allocation4 + $0x1c0] sm:$0xff]
    %v1414 = vld [vmem:[#allocation4 + $0x1c8] sm:$0xff]
    %v1415 = vld [vmem:[#allocation4 + $0x1d0] sm:$0xff]
    %v1416 = vld [vmem:[#allocation4 + $0x1d8] sm:$0xff]
    %v1417 = vld [vmem:[#allocation4 + $0x1e0] sm:$0xff]
    %v1418 = vld [vmem:[#allocation4 + $0x1e8] sm:$0xff]
    %v1419 = vld [vmem:[#allocation4 + $0x1f0] sm:$0xff]
    %v1420 = vld [vmem:[#allocation4 + $0x1f8] sm:$0xff]
    %1421 = vmatprep.subr.mxu0 %v1358
    %1422 = vmatpush1.msra.mxu0 %v1357
    %1423 = vmatprep.subr.mxu0 %v1362
    %1424 = vmatpush1.msra.mxu0 %v1361
    %1425 = vmatprep.subr.mxu0 %v1366
    %1426 = vmatpush1.msra.mxu0 %v1365
    %1427 = vmatprep.subr.mxu0 %v1370
    %1428 = vmatpush1.msra.mxu0 %v1369
    %1429 = vmatprep.subr.mxu0 %v1374
    %1430 = vmatpush1.msra.mxu0 %v1373
    %1431 = vmatprep.subr.mxu0 %v1378
    %1432 = vmatpush1.msra.mxu0 %v1377
    %1433 = vmatprep.subr.mxu0 %v1382
    %1434 = vmatpush1.msra.mxu0 %v1381
    %1435 = vmatprep.subr.mxu0 %v1386
    %1436 = vmatpush1.msra.mxu0 %v1385
    %1437 = vmatprep.subr.mxu0 %v1390
    %1438 = vmatpush1.msra.mxu0 %v1389
    %1439 = vmatprep.subr.mxu0 %v1394
    %1440 = vmatpush1.msra.mxu0 %v1393
    %1441 = vmatprep.subr.mxu0 %v1398
    %1442 = vmatpush1.msra.mxu0 %v1397
    %1443 = vmatprep.subr.mxu0 %v1402
    %1444 = vmatpush1.msra.mxu0 %v1401
    %1445 = vmatprep.subr.mxu0 %v1406
    %1446 = vmatpush1.msra.mxu0 %v1405
    %1447 = vmatprep.subr.mxu0 %v1410
    %1448 = vmatpush1.msra.mxu0 %v1409
    %1449 = vmatprep.subr.mxu0 %v1414
    %1450 = vmatpush1.msra.mxu0 %v1413
    %1451 = vmatprep.subr.mxu0 %v1418
    %1452 = vmatpush1.msra.mxu0 %v1417
    %1453 = vmatprep.subr.mxu0 0.0
    %1454 = vmatpush1.msra.mxu0 0.0
    %1455 = vmatprep.subr.mxu0 0.0
    %1456 = vmatpush1.msra.mxu0 0.0
    %1457 = vmatprep.subr.mxu0 0.0
    %1458 = vmatpush1.msra.mxu0 0.0
    %1459 = vmatprep.subr.mxu0 0.0
    %1460 = vmatpush1.msra.mxu0 0.0
    %1461 = vmatprep.subr.mxu0 0.0
    %1462 = vmatpush1.msra.mxu0 0.0
    %1463 = vmatprep.subr.mxu0 0.0
    %1464 = vmatpush1.msra.mxu0 0.0
    %1465 = vmatprep.subr.mxu0 0.0
    %1466 = vmatpush1.msra.mxu0 0.0
    %1467 = vmatprep.subr.mxu0 0.0
    %1468 = vmatpush1.msra.mxu0 0.0
    %1469 = vmatprep.subr.mxu0 0.0
    %1470 = vmatpush1.msra.mxu0 0.0
    %1471 = vmatprep.subr.mxu0 0.0
    %1472 = vmatpush1.msra.mxu0 0.0
    %1473 = vmatprep.subr.mxu0 0.0
    %1474 = vmatpush1.msra.mxu0 0.0
    %1475 = vmatprep.subr.mxu0 0.0
    %1476 = vmatpush1.msra.mxu0 0.0
    %1477 = vmatprep.subr.mxu0 0.0
    %1478 = vmatpush1.msra.mxu0 0.0
    %1479 = vmatprep.subr.mxu0 0.0
    %1480 = vmatpush1.msra.mxu0 0.0
    %1481 = vmatprep.subr.mxu0 0.0
    %1482 = vmatpush1.msra.mxu0 0.0
    %1483 = vmatprep.subr.mxu0 0.0
    %1484 = vmatpush1.msra.mxu0 0.0
    %1485 = vmatprep.mubr.f32.mxu0 0.0
    %1486 = vmatmul.mubr.f32.gmra.mrb[0].mxu0 %v1351
    %v1487 = vpop.f32.mrb[0].mxu0
    %v1488 = vadd.f32 0.0, %v1487
    %v1489 = vpop.f32.mrb[0].mxu0
    %v1490 = vadd.f32 0.0, %v1489
    %1491 = vdwg.mxu0
    %1492 = vmatprep.subr.mxu0 %v1360
    %1493 = vmatpush1.msra.mxu0 %v1359
    %1494 = vmatprep.subr.mxu0 %v1364
    %1495 = vmatpush1.msra.mxu0 %v1363
    %1496 = vmatprep.subr.mxu0 %v1368
    %1497 = vmatpush1.msra.mxu0 %v1367
    %1498 = vmatprep.subr.mxu0 %v1372
    %1499 = vmatpush1.msra.mxu0 %v1371
    %1500 = vmatprep.subr.mxu0 %v1376
    %1501 = vmatpush1.msra.mxu0 %v1375
    %1502 = vmatprep.subr.mxu0 %v1380
    %1503 = vmatpush1.msra.mxu0 %v1379
    %1504 = vmatprep.subr.mxu0 %v1384
    %1505 = vmatpush1.msra.mxu0 %v1383
    %1506 = vmatprep.subr.mxu0 %v1388
    %1507 = vmatpush1.msra.mxu0 %v1387
    %1508 = vmatprep.subr.mxu0 %v1392
    %1509 = vmatpush1.msra.mxu0 %v1391
    %1510 = vmatprep.subr.mxu0 %v1396
    %1511 = vmatpush1.msra.mxu0 %v1395
    %1512 = vmatprep.subr.mxu0 %v1400
    %1513 = vmatpush1.msra.mxu0 %v1399
    %1514 = vmatprep.subr.mxu0 %v1404
    %1515 = vmatpush1.msra.mxu0 %v1403
    %1516 = vmatprep.subr.mxu0 %v1408
    %1517 = vmatpush1.msra.mxu0 %v1407
    %1518 = vmatprep.subr.mxu0 %v1412
    %1519 = vmatpush1.msra.mxu0 %v1411
    %1520 = vmatprep.subr.mxu0 %v1416
    %1521 = vmatpush1.msra.mxu0 %v1415
    %1522 = vmatprep.subr.mxu0 %v1420
    %1523 = vmatpush1.msra.mxu0 %v1419
    %1524 = vmatprep.subr.mxu0 0.0
    %1525 = vmatpush1.msra.mxu0 0.0
    %1526 = vmatprep.subr.mxu0 0.0
    %1527 = vmatpush1.msra.mxu0 0.0
    %1528 = vmatprep.subr.mxu0 0.0
    %1529 = vmatpush1.msra.mxu0 0.0
    %1530 = vmatprep.subr.mxu0 0.0
    %1531 = vmatpush1.msra.mxu0 0.0
    %1532 = vmatprep.subr.mxu0 0.0
    %1533 = vmatpush1.msra.mxu0 0.0
    %1534 = vmatprep.subr.mxu0 0.0
    %1535 = vmatpush1.msra.mxu0 0.0
    %1536 = vmatprep.subr.mxu0 0.0
    %1537 = vmatpush1.msra.mxu0 0.0
    %1538 = vmatprep.subr.mxu0 0.0
    %1539 = vmatpush1.msra.mxu0 0.0
    %1540 = vmatprep.subr.mxu0 0.0
    %1541 = vmatpush1.msra.mxu0 0.0
    %1542 = vmatprep.subr.mxu0 0.0
    %1543 = vmatpush1.msra.mxu0 0.0
    %1544 = vmatprep.subr.mxu0 0.0
    %1545 = vmatpush1.msra.mxu0 0.0
    %1546 = vmatprep.subr.mxu0 0.0
    %1547 = vmatpush1.msra.mxu0 0.0
    %1548 = vmatprep.subr.mxu0 0.0
    %1549 = vmatpush1.msra.mxu0 0.0
    %1550 = vmatprep.subr.mxu0 0.0
    %1551 = vmatpush1.msra.mxu0 0.0
    %1552 = vmatprep.subr.mxu0 0.0
    %1553 = vmatpush1.msra.mxu0 0.0
    %1554 = vmatprep.subr.mxu0 0.0
    %1555 = vmatpush1.msra.mxu0 0.0
    %1556 = vmatprep.mubr.f32.mxu0 0.0
    %1557 = vmatmul.mubr.f32.gmra.mrb[0].mxu0 %v1351
    %v1558 = vpop.f32.mrb[0].mxu0
    %v1559 = vadd.f32 0.0, %v1558
    %v1560 = vpop.f32.mrb[0].mxu0
    %v1561 = vadd.f32 0.0, %v1560
    %1562 = vdwg.mxu0
    %v1563 = vadd.f32 %v1353, %v1488
    %v1564 = vadd.f32 %v1354, %v1490
    %v1565 = vadd.f32 %v1355, %v1559
    %v1566 = vadd.f32 %v1356, %v1561
    %v1567 = vxor.u32 %v1563, 2147483648
    %v1568 = vmul.f32 %v1567, 1.442695
    %v1569 = vpow.pop %v1568
    %v1570 = vadd.f32 %v1569, 1.0
    %v1571 = vrcp.pop %v1570
    %v1572 = vmul.f32 1.0, %v1571
    %v1573 = vxor.u32 %v1564, 2147483648
    %v1574 = vmul.f32 %v1573, 1.442695
    %v1575 = vpow.pop %v1574
    %v1576 = vadd.f32 %v1575, 1.0
    %v1577 = vrcp.pop %v1576
    %v1578 = vmul.f32 1.0, %v1577
    %v1579 = vtanh.pop %v1565
    %v1580 = vxor.u32 %v1566, 2147483648
    %v1581 = vmul.f32 %v1580, 1.442695
    %v1582 = vpow.pop %v1581
    %v1583 = vadd.f32 %v1582, 1.0
    %v1584 = vrcp.pop %v1583
    %v1585 = vmul.f32 1.0, %v1584
    %v1586 = vmul.f32 %v1578, %v1349
    %v1587 = vmul.f32 %v1572, %v1579
    %v1588 = vadd.f32 %v1586, %v1587
    %v1589 = vtanh.pop %v1588
    %v1590 = vmul.f32 %v1585, %v1589
    %1591 = vst [vmem:[#allocation3 + $0x20] sm:$0xff] %v1590
    %v1592 = vld [vmem:[#allocation2 + $0xa0] sm:$0xff]
    %v1593 = vld [vmem:[#allocation2 + $0xa8] sm:$0xff]
    %v1594 = vld [vmem:[#allocation2 + $0xb0] sm:$0xff]
    %v1595 = vld [vmem:[#allocation2 + $0xb8] sm:$0xff]
    %v1596 = vld [vmem:[#allocation4] sm:$0xff]
    %v1597 = vld [vmem:[#allocation4 + $0x8] sm:$0xff]
    %v1598 = vld [vmem:[#allocation4 + $0x10] sm:$0xff]
    %v1599 = vld [vmem:[#allocation4 + $0x18] sm:$0xff]
    %v1600 = vld [vmem:[#allocation4 + $0x20] sm:$0xff]
    %v1601 = vld [vmem:[#allocation4 + $0x28] sm:$0xff]
    %v1602 = vld [vmem:[#allocation4 + $0x30] sm:$0xff]
    %v1603 = vld [vmem:[#allocation4 + $0x38] sm:$0xff]
    %v1604 = vld [vmem:[#allocation4 + $0x40] sm:$0xff]
    %v1605 = vld [vmem:[#allocation4 + $0x48] sm:$0xff]
    %v1606 = vld [vmem:[#allocation4 + $0x50] sm:$0xff]
    %v1607 = vld [vmem:[#allocation4 + $0x58] sm:$0xff]
    %v1608 = vld [vmem:[#allocation4 + $0x60] sm:$0xff]
    %v1609 = vld [vmem:[#allocation4 + $0x68] sm:$0xff]
    %v1610 = vld [vmem:[#allocation4 + $0x70] sm:$0xff]
    %v1611 = vld [vmem:[#allocation4 + $0x78] sm:$0xff]
    %v1612 = vld [vmem:[#allocation4 + $0x80] sm:$0xff]
    %v1613 = vld [vmem:[#allocation4 + $0x88] sm:$0xff]
    %v1614 = vld [vmem:[#allocation4 + $0x90] sm:$0xff]
    %v1615 = vld [vmem:[#allocation4 + $0x98] sm:$0xff]
    %v1616 = vld [vmem:[#allocation4 + $0xa0] sm:$0xff]
    %v1617 = vld [vmem:[#allocation4 + $0xa8] sm:$0xff]
    %v1618 = vld [vmem:[#allocation4 + $0xb0] sm:$0xff]
    %v1619 = vld [vmem:[#allocation4 + $0xb8] sm:$0xff]
    %v1620 = vld [vmem:[#allocation4 + $0xc0] sm:$0xff]
    %v1621 = vld [vmem:[#allocation4 + $0xc8] sm:$0xff]
    %v1622 = vld [vmem:[#allocation4 + $0xd0] sm:$0xff]
    %v1623 = vld [vmem:[#allocation4 + $0xd8] sm:$0xff]
    %v1624 = vld [vmem:[#allocation4 + $0xe0] sm:$0xff]
    %v1625 = vld [vmem:[#allocation4 + $0xe8] sm:$0xff]
    %v1626 = vld [vmem:[#allocation4 + $0xf0] sm:$0xff]
    %v1627 = vld [vmem:[#allocation4 + $0xf8] sm:$0xff]
    %v1628 = vld [vmem:[#allocation4 + $0x100] sm:$0xff]
    %v1629 = vld [vmem:[#allocation4 + $0x108] sm:$0xff]
    %v1630 = vld [vmem:[#allocation4 + $0x110] sm:$0xff]
    %v1631 = vld [vmem:[#allocation4 + $0x118] sm:$0xff]
    %v1632 = vld [vmem:[#allocation4 + $0x120] sm:$0xff]
    %v1633 = vld [vmem:[#allocation4 + $0x128] sm:$0xff]
    %v1634 = vld [vmem:[#allocation4 + $0x130] sm:$0xff]
    %v1635 = vld [vmem:[#allocation4 + $0x138] sm:$0xff]
    %v1636 = vld [vmem:[#allocation4 + $0x140] sm:$0xff]
    %v1637 = vld [vmem:[#allocation4 + $0x148] sm:$0xff]
    %v1638 = vld [vmem:[#allocation4 + $0x150] sm:$0xff]
    %v1639 = vld [vmem:[#allocation4 + $0x158] sm:$0xff]
    %v1640 = vld [vmem:[#allocation4 + $0x160] sm:$0xff]
    %v1641 = vld [vmem:[#allocation4 + $0x168] sm:$0xff]
    %v1642 = vld [vmem:[#allocation4 + $0x170] sm:$0xff]
    %v1643 = vld [vmem:[#allocation4 + $0x178] sm:$0xff]
    %v1644 = vld [vmem:[#allocation4 + $0x180] sm:$0xff]
    %v1645 = vld [vmem:[#allocation4 + $0x188] sm:$0xff]
    %v1646 = vld [vmem:[#allocation4 + $0x190] sm:$0xff]
    %v1647 = vld [vmem:[#allocation4 + $0x198] sm:$0xff]
    %v1648 = vld [vmem:[#allocation4 + $0x1a0] sm:$0xff]
    %v1649 = vld [vmem:[#allocation4 + $0x1a8] sm:$0xff]
    %v1650 = vld [vmem:[#allocation4 + $0x1b0] sm:$0xff]
    %v1651 = vld [vmem:[#allocation4 + $0x1b8] sm:$0xff]
    %v1652 = vld [vmem:[#allocation4 + $0x1c0] sm:$0xff]
    %v1653 = vld [vmem:[#allocation4 + $0x1c8] sm:$0xff]
    %v1654 = vld [vmem:[#allocation4 + $0x1d0] sm:$0xff]
    %v1655 = vld [vmem:[#allocation4 + $0x1d8] sm:$0xff]
    %v1656 = vld [vmem:[#allocation4 + $0x1e0] sm:$0xff]
    %v1657 = vld [vmem:[#allocation4 + $0x1e8] sm:$0xff]
    %v1658 = vld [vmem:[#allocation4 + $0x1f0] sm:$0xff]
    %v1659 = vld [vmem:[#allocation4 + $0x1f8] sm:$0xff]
    %1660 = vmatprep.subr.mxu0 %v1597
    %1661 = vmatpush1.msra.mxu0 %v1596
    %1662 = vmatprep.subr.mxu0 %v1601
    %1663 = vmatpush1.msra.mxu0 %v1600
    %1664 = vmatprep.subr.mxu0 %v1605
    %1665 = vmatpush1.msra.mxu0 %v1604
    %1666 = vmatprep.subr.mxu0 %v1609
    %1667 = vmatpush1.msra.mxu0 %v1608
    %1668 = vmatprep.subr.mxu0 %v1613
    %1669 = vmatpush1.msra.mxu0 %v1612
    %1670 = vmatprep.subr.mxu0 %v1617
    %1671 = vmatpush1.msra.mxu0 %v1616
    %1672 = vmatprep.subr.mxu0 %v1621
    %1673 = vmatpush1.msra.mxu0 %v1620
    %1674 = vmatprep.subr.mxu0 %v1625
    %1675 = vmatpush1.msra.mxu0 %v1624
    %1676 = vmatprep.subr.mxu0 %v1629
    %1677 = vmatpush1.msra.mxu0 %v1628
    %1678 = vmatprep.subr.mxu0 %v1633
    %1679 = vmatpush1.msra.mxu0 %v1632
    %1680 = vmatprep.subr.mxu0 %v1637
    %1681 = vmatpush1.msra.mxu0 %v1636
    %1682 = vmatprep.subr.mxu0 %v1641
    %1683 = vmatpush1.msra.mxu0 %v1640
    %1684 = vmatprep.subr.mxu0 %v1645
    %1685 = vmatpush1.msra.mxu0 %v1644
    %1686 = vmatprep.subr.mxu0 %v1649
    %1687 = vmatpush1.msra.mxu0 %v1648
    %1688 = vmatprep.subr.mxu0 %v1653
    %1689 = vmatpush1.msra.mxu0 %v1652
    %1690 = vmatprep.subr.mxu0 %v1657
    %1691 = vmatpush1.msra.mxu0 %v1656
    %1692 = vmatprep.subr.mxu0 0.0
    %1693 = vmatpush1.msra.mxu0 0.0
    %1694 = vmatprep.subr.mxu0 0.0
    %1695 = vmatpush1.msra.mxu0 0.0
    %1696 = vmatprep.subr.mxu0 0.0
    %1697 = vmatpush1.msra.mxu0 0.0
    %1698 = vmatprep.subr.mxu0 0.0
    %1699 = vmatpush1.msra.mxu0 0.0
    %1700 = vmatprep.subr.mxu0 0.0
    %1701 = vmatpush1.msra.mxu0 0.0
    %1702 = vmatprep.subr.mxu0 0.0
    %1703 = vmatpush1.msra.mxu0 0.0
    %1704 = vmatprep.subr.mxu0 0.0
    %1705 = vmatpush1.msra.mxu0 0.0
    %1706 = vmatprep.subr.mxu0 0.0
    %1707 = vmatpush1.msra.mxu0 0.0
    %1708 = vmatprep.subr.mxu0 0.0
    %1709 = vmatpush1.msra.mxu0 0.0
    %1710 = vmatprep.subr.mxu0 0.0
    %1711 = vmatpush1.msra.mxu0 0.0
    %1712 = vmatprep.subr.mxu0 0.0
    %1713 = vmatpush1.msra.mxu0 0.0
    %1714 = vmatprep.subr.mxu0 0.0
    %1715 = vmatpush1.msra.mxu0 0.0
    %1716 = vmatprep.subr.mxu0 0.0
    %1717 = vmatpush1.msra.mxu0 0.0
    %1718 = vmatprep.subr.mxu0 0.0
    %1719 = vmatpush1.msra.mxu0 0.0
    %1720 = vmatprep.subr.mxu0 0.0
    %1721 = vmatpush1.msra.mxu0 0.0
    %1722 = vmatprep.subr.mxu0 0.0
    %1723 = vmatpush1.msra.mxu0 0.0
    %1724 = vmatprep.mubr.f32.mxu0 0.0
    %1725 = vmatmul.mubr.f32.gmra.mrb[0].mxu0 %v1590
    %v1726 = vpop.f32.mrb[0].mxu0
    %v1727 = vadd.f32 0.0, %v1726
    %v1728 = vpop.f32.mrb[0].mxu0
    %v1729 = vadd.f32 0.0, %v1728
    %1730 = vdwg.mxu0
    %1731 = vmatprep.subr.mxu0 %v1599
    %1732 = vmatpush1.msra.mxu0 %v1598
    %1733 = vmatprep.subr.mxu0 %v1603
    %1734 = vmatpush1.msra.mxu0 %v1602
    %1735 = vmatprep.subr.mxu0 %v1607
    %1736 = vmatpush1.msra.mxu0 %v1606
    %1737 = vmatprep.subr.mxu0 %v1611
    %1738 = vmatpush1.msra.mxu0 %v1610
    %1739 = vmatprep.subr.mxu0 %v1615
    %1740 = vmatpush1.msra.mxu0 %v1614
    %1741 = vmatprep.subr.mxu0 %v1619
    %1742 = vmatpush1.msra.mxu0 %v1618
    %1743 = vmatprep.subr.mxu0 %v1623
    %1744 = vmatpush1.msra.mxu0 %v1622
    %1745 = vmatprep.subr.mxu0 %v1627
    %1746 = vmatpush1.msra.mxu0 %v1626
    %1747 = vmatprep.subr.mxu0 %v1631
    %1748 = vmatpush1.msra.mxu0 %v1630
    %1749 = vmatprep.subr.mxu0 %v1635
    %1750 = vmatpush1.msra.mxu0 %v1634
    %1751 = vmatprep.subr.mxu0 %v1639
    %1752 = vmatpush1.msra.mxu0 %v1638
    %1753 = vmatprep.subr.mxu0 %v1643
    %1754 = vmatpush1.msra.mxu0 %v1642
    %1755 = vmatprep.subr.mxu0 %v1647
    %1756 = vmatpush1.msra.mxu0 %v1646
    %1757 = vmatprep.subr.mxu0 %v1651
    %1758 = vmatpush1.msra.mxu0 %v1650
    %1759 = vmatprep.subr.mxu0 %v1655
    %1760 = vmatpush1.msra.mxu0 %v1654
    %1761 = vmatprep.subr.mxu0 %v1659
    %1762 = vmatpush1.msra.mxu0 %v1658
    %1763 = vmatprep.subr.mxu0 0.0
    %1764 = vmatpush1.msra.mxu0 0.0
    %1765 = vmatprep.subr.mxu0 0.0
    %1766 = vmatpush1.msra.mxu0 0.0
    %1767 = vmatprep.subr.mxu0 0.0
    %1768 = vmatpush1.msra.mxu0 0.0
    %1769 = vmatprep.subr.mxu0 0.0
    %1770 = vmatpush1.msra.mxu0 0.0
    %1771 = vmatprep.subr.mxu0 0.0
    %1772 = vmatpush1.msra.mxu0 0.0
    %1773 = vmatprep.subr.mxu0 0.0
    %1774 = vmatpush1.msra.mxu0 0.0
    %1775 = vmatprep.subr.mxu0 0.0
    %1776 = vmatpush1.msra.mxu0 0.0
    %1777 = vmatprep.subr.mxu0 0.0
    %1778 = vmatpush1.msra.mxu0 0.0
    %1779 = vmatprep.subr.mxu0 0.0
    %1780 = vmatpush1.msra.mxu0 0.0
    %1781 = vmatprep.subr.mxu0 0.0
    %1782 = vmatpush1.msra.mxu0 0.0
    %1783 = vmatprep.subr.mxu0 0.0
    %1784 = vmatpush1.msra.mxu0 0.0
    %1785 = vmatprep.subr.mxu0 0.0
    %1786 = vmatpush1.msra.mxu0 0.0
    %1787 = vmatprep.subr.mxu0 0.0
    %1788 = vmatpush1.msra.mxu0 0.0
    %1789 = vmatprep.subr.mxu0 0.0
    %1790 = vmatpush1.msra.mxu0 0.0
    %1791 = vmatprep.subr.mxu0 0.0
    %1792 = vmatpush1.msra.mxu0 0.0
    %1793 = vmatprep.subr.mxu0 0.0
    %1794 = vmatpush1.msra.mxu0 0.0
    %1795 = vmatprep.mubr.f32.mxu0 0.0
    %1796 = vmatmul.mubr.f32.gmra.mrb[0].mxu0 %v1590
    %v1797 = vpop.f32.mrb[0].mxu0
    %v1798 = vadd.f32 0.0, %v1797
    %v1799 = vpop.f32.mrb[0].mxu0
    %v1800 = vadd.f32 0.0, %v1799
    %1801 = vdwg.mxu0
    %v1802 = vadd.f32 %v1592, %v1727
    %v1803 = vadd.f32 %v1593, %v1729
    %v1804 = vadd.f32 %v1594, %v1798
    %v1805 = vadd.f32 %v1595, %v1800
    %v1806 = vxor.u32 %v1802, 2147483648
    %v1807 = vmul.f32 %v1806, 1.442695
    %v1808 = vpow.pop %v1807
    %v1809 = vadd.f32 %v1808, 1.0
    %v1810 = vrcp.pop %v1809
    %v1811 = vmul.f32 1.0, %v1810
    %v1812 = vxor.u32 %v1803, 2147483648
    %v1813 = vmul.f32 %v1812, 1.442695
    %v1814 = vpow.pop %v1813
    %v1815 = vadd.f32 %v1814, 1.0
    %v1816 = vrcp.pop %v1815
    %v1817 = vmul.f32 1.0, %v1816
    %v1818 = vtanh.pop %v1804
    %v1819 = vxor.u32 %v1805, 2147483648
    %v1820 = vmul.f32 %v1819, 1.442695
    %v1821 = vpow.pop %v1820
    %v1822 = vadd.f32 %v1821, 1.0
    %v1823 = vrcp.pop %v1822
    %v1824 = vmul.f32 1.0, %v1823
    %v1825 = vmul.f32 %v1817, %v1588
    %v1826 = vmul.f32 %v1811, %v1818
    %v1827 = vadd.f32 %v1825, %v1826
    %v1828 = vtanh.pop %v1827
    %v1829 = vmul.f32 %v1824, %v1828
    %1830 = vst [vmem:[#allocation3 + $0x28] sm:$0xff] %v1829
    %v1831 = vld [vmem:[#allocation2 + $0xc0] sm:$0xff]
    %v1832 = vld [vmem:[#allocation2 + $0xc8] sm:$0xff]
    %v1833 = vld [vmem:[#allocation2 + $0xd0] sm:$0xff]
    %v1834 = vld [vmem:[#allocation2 + $0xd8] sm:$0xff]
    %v1835 = vld [vmem:[#allocation4] sm:$0xff]
    %v1836 = vld [vmem:[#allocation4 + $0x8] sm:$0xff]
    %v1837 = vld [vmem:[#allocation4 + $0x10] sm:$0xff]
    %v1838 = vld [vmem:[#allocation4 + $0x18] sm:$0xff]
    %v1839 = vld [vmem:[#allocation4 + $0x20] sm:$0xff]
    %v1840 = vld [vmem:[#allocation4 + $0x28] sm:$0xff]
    %v1841 = vld [vmem:[#allocation4 + $0x30] sm:$0xff]
    %v1842 = vld [vmem:[#allocation4 + $0x38] sm:$0xff]
    %v1843 = vld [vmem:[#allocation4 + $0x40] sm:$0xff]
    %v1844 = vld [vmem:[#allocation4 + $0x48] sm:$0xff]
    %v1845 = vld [vmem:[#allocation4 + $0x50] sm:$0xff]
    %v1846 = vld [vmem:[#allocation4 + $0x58] sm:$0xff]
    %v1847 = vld [vmem:[#allocation4 + $0x60] sm:$0xff]
    %v1848 = vld [vmem:[#allocation4 + $0x68] sm:$0xff]
    %v1849 = vld [vmem:[#allocation4 + $0x70] sm:$0xff]
    %v1850 = vld [vmem:[#allocation4 + $0x78] sm:$0xff]
    %v1851 = vld [vmem:[#allocation4 + $0x80] sm:$0xff]
    %v1852 = vld [vmem:[#allocation4 + $0x88] sm:$0xff]
    %v1853 = vld [vmem:[#allocation4 + $0x90] sm:$0xff]
    %v1854 = vld [vmem:[#allocation4 + $0x98] sm:$0xff]
    %v1855 = vld [vmem:[#allocation4 + $0xa0] sm:$0xff]
    %v1856 = vld [vmem:[#allocation4 + $0xa8] sm:$0xff]
    %v1857 = vld [vmem:[#allocation4 + $0xb0] sm:$0xff]
    %v1858 = vld [vmem:[#allocation4 + $0xb8] sm:$0xff]
    %v1859 = vld [vmem:[#allocation4 + $0xc0] sm:$0xff]
    %v1860 = vld [vmem:[#allocation4 + $0xc8] sm:$0xff]
    %v1861 = vld [vmem:[#allocation4 + $0xd0] sm:$0xff]
    %v1862 = vld [vmem:[#allocation4 + $0xd8] sm:$0xff]
    %v1863 = vld [vmem:[#allocation4 + $0xe0] sm:$0xff]
    %v1864 = vld [vmem:[#allocation4 + $0xe8] sm:$0xff]
    %v1865 = vld [vmem:[#allocation4 + $0xf0] sm:$0xff]
    %v1866 = vld [vmem:[#allocation4 + $0xf8] sm:$0xff]
    %v1867 = vld [vmem:[#allocation4 + $0x100] sm:$0xff]
    %v1868 = vld [vmem:[#allocation4 + $0x108] sm:$0xff]
    %v1869 = vld [vmem:[#allocation4 + $0x110] sm:$0xff]
    %v1870 = vld [vmem:[#allocation4 + $0x118] sm:$0xff]
    %v1871 = vld [vmem:[#allocation4 + $0x120] sm:$0xff]
    %v1872 = vld [vmem:[#allocation4 + $0x128] sm:$0xff]
    %v1873 = vld [vmem:[#allocation4 + $0x130] sm:$0xff]
    %v1874 = vld [vmem:[#allocation4 + $0x138] sm:$0xff]
    %v1875 = vld [vmem:[#allocation4 + $0x140] sm:$0xff]
    %v1876 = vld [vmem:[#allocation4 + $0x148] sm:$0xff]
    %v1877 = vld [vmem:[#allocation4 + $0x150] sm:$0xff]
    %v1878 = vld [vmem:[#allocation4 + $0x158] sm:$0xff]
    %v1879 = vld [vmem:[#allocation4 + $0x160] sm:$0xff]
    %v1880 = vld [vmem:[#allocation4 + $0x168] sm:$0xff]
    %v1881 = vld [vmem:[#allocation4 + $0x170] sm:$0xff]
    %v1882 = vld [vmem:[#allocation4 + $0x178] sm:$0xff]
    %v1883 = vld [vmem:[#allocation4 + $0x180] sm:$0xff]
    %v1884 = vld [vmem:[#allocation4 + $0x188] sm:$0xff]
    %v1885 = vld [vmem:[#allocation4 + $0x190] sm:$0xff]
    %v1886 = vld [vmem:[#allocation4 + $0x198] sm:$0xff]
    %v1887 = vld [vmem:[#allocation4 + $0x1a0] sm:$0xff]
    %v1888 = vld [vmem:[#allocation4 + $0x1a8] sm:$0xff]
    %v1889 = vld [vmem:[#allocation4 + $0x1b0] sm:$0xff]
    %v1890 = vld [vmem:[#allocation4 + $0x1b8] sm:$0xff]
    %v1891 = vld [vmem:[#allocation4 + $0x1c0] sm:$0xff]
    %v1892 = vld [vmem:[#allocation4 + $0x1c8] sm:$0xff]
    %v1893 = vld [vmem:[#allocation4 + $0x1d0] sm:$0xff]
    %v1894 = vld [vmem:[#allocation4 + $0x1d8] sm:$0xff]
    %v1895 = vld [vmem:[#allocation4 + $0x1e0] sm:$0xff]
    %v1896 = vld [vmem:[#allocation4 + $0x1e8] sm:$0xff]
    %v1897 = vld [vmem:[#allocation4 + $0x1f0] sm:$0xff]
    %v1898 = vld [vmem:[#allocation4 + $0x1f8] sm:$0xff]
    %1899 = vmatprep.subr.mxu0 %v1836
    %1900 = vmatpush1.msra.mxu0 %v1835
    %1901 = vmatprep.subr.mxu0 %v1840
    %1902 = vmatpush1.msra.mxu0 %v1839
    %1903 = vmatprep.subr.mxu0 %v1844
    %1904 = vmatpush1.msra.mxu0 %v1843
    %1905 = vmatprep.subr.mxu0 %v1848
    %1906 = vmatpush1.msra.mxu0 %v1847
    %1907 = vmatprep.subr.mxu0 %v1852
    %1908 = vmatpush1.msra.mxu0 %v1851
    %1909 = vmatprep.subr.mxu0 %v1856
    %1910 = vmatpush1.msra.mxu0 %v1855
    %1911 = vmatprep.subr.mxu0 %v1860
    %1912 = vmatpush1.msra.mxu0 %v1859
    %1913 = vmatprep.subr.mxu0 %v1864
    %1914 = vmatpush1.msra.mxu0 %v1863
    %1915 = vmatprep.subr.mxu0 %v1868
    %1916 = vmatpush1.msra.mxu0 %v1867
    %1917 = vmatprep.subr.mxu0 %v1872
    %1918 = vmatpush1.msra.mxu0 %v1871
    %1919 = vmatprep.subr.mxu0 %v1876
    %1920 = vmatpush1.msra.mxu0 %v1875
    %1921 = vmatprep.subr.mxu0 %v1880
    %1922 = vmatpush1.msra.mxu0 %v1879
    %1923 = vmatprep.subr.mxu0 %v1884
    %1924 = vmatpush1.msra.mxu0 %v1883
    %1925 = vmatprep.subr.mxu0 %v1888
    %1926 = vmatpush1.msra.mxu0 %v1887
    %1927 = vmatprep.subr.mxu0 %v1892
    %1928 = vmatpush1.msra.mxu0 %v1891
    %1929 = vmatprep.subr.mxu0 %v1896
    %1930 = vmatpush1.msra.mxu0 %v1895
    %1931 = vmatprep.subr.mxu0 0.0
    %1932 = vmatpush1.msra.mxu0 0.0
    %1933 = vmatprep.subr.mxu0 0.0
    %1934 = vmatpush1.msra.mxu0 0.0
    %1935 = vmatprep.subr.mxu0 0.0
    %1936 = vmatpush1.msra.mxu0 0.0
    %1937 = vmatprep.subr.mxu0 0.0
    %1938 = vmatpush1.msra.mxu0 0.0
    %1939 = vmatprep.subr.mxu0 0.0
    %1940 = vmatpush1.msra.mxu0 0.0
    %1941 = vmatprep.subr.mxu0 0.0
    %1942 = vmatpush1.msra.mxu0 0.0
    %1943 = vmatprep.subr.mxu0 0.0
    %1944 = vmatpush1.msra.mxu0 0.0
    %1945 = vmatprep.subr.mxu0 0.0
    %1946 = vmatpush1.msra.mxu0 0.0
    %1947 = vmatprep.subr.mxu0 0.0
    %1948 = vmatpush1.msra.mxu0 0.0
    %1949 = vmatprep.subr.mxu0 0.0
    %1950 = vmatpush1.msra.mxu0 0.0
    %1951 = vmatprep.subr.mxu0 0.0
    %1952 = vmatpush1.msra.mxu0 0.0
    %1953 = vmatprep.subr.mxu0 0.0
    %1954 = vmatpush1.msra.mxu0 0.0
    %1955 = vmatprep.subr.mxu0 0.0
    %1956 = vmatpush1.msra.mxu0 0.0
    %1957 = vmatprep.subr.mxu0 0.0
    %1958 = vmatpush1.msra.mxu0 0.0
    %1959 = vmatprep.subr.mxu0 0.0
    %1960 = vmatpush1.msra.mxu0 0.0
    %1961 = vmatprep.subr.mxu0 0.0
    %1962 = vmatpush1.msra.mxu0 0.0
    %1963 = vmatprep.mubr.f32.mxu0 0.0
    %1964 = vmatmul.mubr.f32.gmra.mrb[0].mxu0 %v1829
    %v1965 = vpop.f32.mrb[0].mxu0
    %v1966 = vadd.f32 0.0, %v1965
    %v1967 = vpop.f32.mrb[0].mxu0
    %v1968 = vadd.f32 0.0, %v1967
    %1969 = vdwg.mxu0
    %1970 = vmatprep.subr.mxu0 %v1838
    %1971 = vmatpush1.msra.mxu0 %v1837
    %1972 = vmatprep.subr.mxu0 %v1842
    %1973 = vmatpush1.msra.mxu0 %v1841
    %1974 = vmatprep.subr.mxu0 %v1846
    %1975 = vmatpush1.msra.mxu0 %v1845
    %1976 = vmatprep.subr.mxu0 %v1850
    %1977 = vmatpush1.msra.mxu0 %v1849
    %1978 = vmatprep.subr.mxu0 %v1854
    %1979 = vmatpush1.msra.mxu0 %v1853
    %1980 = vmatprep.subr.mxu0 %v1858
    %1981 = vmatpush1.msra.mxu0 %v1857
    %1982 = vmatprep.subr.mxu0 %v1862
    %1983 = vmatpush1.msra.mxu0 %v1861
    %1984 = vmatprep.subr.mxu0 %v1866
    %1985 = vmatpush1.msra.mxu0 %v1865
    %1986 = vmatprep.subr.mxu0 %v1870
    %1987 = vmatpush1.msra.mxu0 %v1869
    %1988 = vmatprep.subr.mxu0 %v1874
    %1989 = vmatpush1.msra.mxu0 %v1873
    %1990 = vmatprep.subr.mxu0 %v1878
    %1991 = vmatpush1.msra.mxu0 %v1877
    %1992 = vmatprep.subr.mxu0 %v1882
    %1993 = vmatpush1.msra.mxu0 %v1881
    %1994 = vmatprep.subr.mxu0 %v1886
    %1995 = vmatpush1.msra.mxu0 %v1885
    %1996 = vmatprep.subr.mxu0 %v1890
    %1997 = vmatpush1.msra.mxu0 %v1889
    %1998 = vmatprep.subr.mxu0 %v1894
    %1999 = vmatpush1.msra.mxu0 %v1893
    %2000 = vmatprep.subr.mxu0 %v1898
    %2001 = vmatpush1.msra.mxu0 %v1897
    %2002 = vmatprep.subr.mxu0 0.0
    %2003 = vmatpush1.msra.mxu0 0.0
    %2004 = vmatprep.subr.mxu0 0.0
    %2005 = vmatpush1.msra.mxu0 0.0
    %2006 = vmatprep.subr.mxu0 0.0
    %2007 = vmatpush1.msra.mxu0 0.0
    %2008 = vmatprep.subr.mxu0 0.0
    %2009 = vmatpush1.msra.mxu0 0.0
    %2010 = vmatprep.subr.mxu0 0.0
    %2011 = vmatpush1.msra.mxu0 0.0
    %2012 = vmatprep.subr.mxu0 0.0
    %2013 = vmatpush1.msra.mxu0 0.0
    %2014 = vmatprep.subr.mxu0 0.0
    %2015 = vmatpush1.msra.mxu0 0.0
    %2016 = vmatprep.subr.mxu0 0.0
    %2017 = vmatpush1.msra.mxu0 0.0
    %2018 = vmatprep.subr.mxu0 0.0
    %2019 = vmatpush1.msra.mxu0 0.0
    %2020 = vmatprep.subr.mxu0 0.0
    %2021 = vmatpush1.msra.mxu0 0.0
    %2022 = vmatprep.subr.mxu0 0.0
    %2023 = vmatpush1.msra.mxu0 0.0
    %2024 = vmatprep.subr.mxu0 0.0
    %2025 = vmatpush1.msra.mxu0 0.0
    %2026 = vmatprep.subr.mxu0 0.0
    %2027 = vmatpush1.msra.mxu0 0.0
    %2028 = vmatprep.subr.mxu0 0.0
    %2029 = vmatpush1.msra.mxu0 0.0
    %2030 = vmatprep.subr.mxu0 0.0
    %2031 = vmatpush1.msra.mxu0 0.0
    %2032 = vmatprep.subr.mxu0 0.0
    %2033 = vmatpush1.msra.mxu0 0.0
    %2034 = vmatprep.mubr.f32.mxu0 0.0
    %2035 = vmatmul.mubr.f32.gmra.mrb[0].mxu0 %v1829
    %v2036 = vpop.f32.mrb[0].mxu0
    %v2037 = vadd.f32 0.0, %v2036
    %v2038 = vpop.f32.mrb[0].mxu0
    %v2039 = vadd.f32 0.0, %v2038
    %2040 = vdwg.mxu0
    %v2041 = vadd.f32 %v1831, %v1966
    %v2042 = vadd.f32 %v1832, %v1968
    %v2043 = vadd.f32 %v1833, %v2037
    %v2044 = vadd.f32 %v1834, %v2039
    %v2045 = vxor.u32 %v2041, 2147483648
    %v2046 = vmul.f32 %v2045, 1.442695
    %v2047 = vpow.pop %v2046
    %v2048 = vadd.f32 %v2047, 1.0
    %v2049 = vrcp.pop %v2048
    %v2050 = vmul.f32 1.0, %v2049
    %v2051 = vxor.u32 %v2042, 2147483648
    %v2052 = vmul.f32 %v2051, 1.442695
    %v2053 = vpow.pop %v2052
    %v2054 = vadd.f32 %v2053, 1.0
    %v2055 = vrcp.pop %v2054
    %v2056 = vmul.f32 1.0, %v2055
    %v2057 = vtanh.pop %v2043
    %v2058 = vxor.u32 %v2044, 2147483648
    %v2059 = vmul.f32 %v2058, 1.442695
    %v2060 = vpow.pop %v2059
    %v2061 = vadd.f32 %v2060, 1.0
    %v2062 = vrcp.pop %v2061
    %v2063 = vmul.f32 1.0, %v2062
    %v2064 = vmul.f32 %v2056, %v1827
    %v2065 = vmul.f32 %v2050, %v2057
    %v2066 = vadd.f32 %v2064, %v2065
    %v2067 = vtanh.pop %v2066
    %v2068 = vmul.f32 %v2063, %v2067
    %2069 = vst [vmem:[#allocation3 + $0x30] sm:$0xff] %v2068
    %v2070 = vld [vmem:[#allocation2 + $0xe0] sm:$0xff]
    %v2071 = vld [vmem:[#allocation2 + $0xe8] sm:$0xff]
    %v2072 = vld [vmem:[#allocation2 + $0xf0] sm:$0xff]
    %v2073 = vld [vmem:[#allocation2 + $0xf8] sm:$0xff]
    %v2074 = vld [vmem:[#allocation4] sm:$0xff]
    %v2075 = vld [vmem:[#allocation4 + $0x8] sm:$0xff]
    %v2076 = vld [vmem:[#allocation4 + $0x10] sm:$0xff]
    %v2077 = vld [vmem:[#allocation4 + $0x18] sm:$0xff]
    %v2078 = vld [vmem:[#allocation4 + $0x20] sm:$0xff]
    %v2079 = vld [vmem:[#allocation4 + $0x28] sm:$0xff]
    %v2080 = vld [vmem:[#allocation4 + $0x30] sm:$0xff]
    %v2081 = vld [vmem:[#allocation4 + $0x38] sm:$0xff]
    %v2082 = vld [vmem:[#allocation4 + $0x40] sm:$0xff]
    %v2083 = vld [vmem:[#allocation4 + $0x48] sm:$0xff]
    %v2084 = vld [vmem:[#allocation4 + $0x50] sm:$0xff]
    %v2085 = vld [vmem:[#allocation4 + $0x58] sm:$0xff]
    %v2086 = vld [vmem:[#allocation4 + $0x60] sm:$0xff]
    %v2087 = vld [vmem:[#allocation4 + $0x68] sm:$0xff]
    %v2088 = vld [vmem:[#allocation4 + $0x70] sm:$0xff]
    %v2089 = vld [vmem:[#allocation4 + $0x78] sm:$0xff]
    %v2090 = vld [vmem:[#allocation4 + $0x80] sm:$0xff]
    %v2091 = vld [vmem:[#allocation4 + $0x88] sm:$0xff]
    %v2092 = vld [vmem:[#allocation4 + $0x90] sm:$0xff]
    %v2093 = vld [vmem:[#allocation4 + $0x98] sm:$0xff]
    %v2094 = vld [vmem:[#allocation4 + $0xa0] sm:$0xff]
    %v2095 = vld [vmem:[#allocation4 + $0xa8] sm:$0xff]
    %v2096 = vld [vmem:[#allocation4 + $0xb0] sm:$0xff]
    %v2097 = vld [vmem:[#allocation4 + $0xb8] sm:$0xff]
    %v2098 = vld [vmem:[#allocation4 + $0xc0] sm:$0xff]
    %v2099 = vld [vmem:[#allocation4 + $0xc8] sm:$0xff]
    %v2100 = vld [vmem:[#allocation4 + $0xd0] sm:$0xff]
    %v2101 = vld [vmem:[#allocation4 + $0xd8] sm:$0xff]
    %v2102 = vld [vmem:[#allocation4 + $0xe0] sm:$0xff]
    %v2103 = vld [vmem:[#allocation4 + $0xe8] sm:$0xff]
    %v2104 = vld [vmem:[#allocation4 + $0xf0] sm:$0xff]
    %v2105 = vld [vmem:[#allocation4 + $0xf8] sm:$0xff]
    %v2106 = vld [vmem:[#allocation4 + $0x100] sm:$0xff]
    %v2107 = vld [vmem:[#allocation4 + $0x108] sm:$0xff]
    %v2108 = vld [vmem:[#allocation4 + $0x110] sm:$0xff]
    %v2109 = vld [vmem:[#allocation4 + $0x118] sm:$0xff]
    %v2110 = vld [vmem:[#allocation4 + $0x120] sm:$0xff]
    %v2111 = vld [vmem:[#allocation4 + $0x128] sm:$0xff]
    %v2112 = vld [vmem:[#allocation4 + $0x130] sm:$0xff]
    %v2113 = vld [vmem:[#allocation4 + $0x138] sm:$0xff]
    %v2114 = vld [vmem:[#allocation4 + $0x140] sm:$0xff]
    %v2115 = vld [vmem:[#allocation4 + $0x148] sm:$0xff]
    %v2116 = vld [vmem:[#allocation4 + $0x150] sm:$0xff]
    %v2117 = vld [vmem:[#allocation4 + $0x158] sm:$0xff]
    %v2118 = vld [vmem:[#allocation4 + $0x160] sm:$0xff]
    %v2119 = vld [vmem:[#allocation4 + $0x168] sm:$0xff]
    %v2120 = vld [vmem:[#allocation4 + $0x170] sm:$0xff]
    %v2121 = vld [vmem:[#allocation4 + $0x178] sm:$0xff]
    %v2122 = vld [vmem:[#allocation4 + $0x180] sm:$0xff]
    %v2123 = vld [vmem:[#allocation4 + $0x188] sm:$0xff]
    %v2124 = vld [vmem:[#allocation4 + $0x190] sm:$0xff]
    %v2125 = vld [vmem:[#allocation4 + $0x198] sm:$0xff]
    %v2126 = vld [vmem:[#allocation4 + $0x1a0] sm:$0xff]
    %v2127 = vld [vmem:[#allocation4 + $0x1a8] sm:$0xff]
    %v2128 = vld [vmem:[#allocation4 + $0x1b0] sm:$0xff]
    %v2129 = vld [vmem:[#allocation4 + $0x1b8] sm:$0xff]
    %v2130 = vld [vmem:[#allocation4 + $0x1c0] sm:$0xff]
    %v2131 = vld [vmem:[#allocation4 + $0x1c8] sm:$0xff]
    %v2132 = vld [vmem:[#allocation4 + $0x1d0] sm:$0xff]
    %v2133 = vld [vmem:[#allocation4 + $0x1d8] sm:$0xff]
    %v2134 = vld [vmem:[#allocation4 + $0x1e0] sm:$0xff]
    %v2135 = vld [vmem:[#allocation4 + $0x1e8] sm:$0xff]
    %v2136 = vld [vmem:[#allocation4 + $0x1f0] sm:$0xff]
    %v2137 = vld [vmem:[#allocation4 + $0x1f8] sm:$0xff]
    %2138 = vmatprep.subr.mxu0 %v2075
    %2139 = vmatpush1.msra.mxu0 %v2074
    %2140 = vmatprep.subr.mxu0 %v2079
    %2141 = vmatpush1.msra.mxu0 %v2078
    %2142 = vmatprep.subr.mxu0 %v2083
    %2143 = vmatpush1.msra.mxu0 %v2082
    %2144 = vmatprep.subr.mxu0 %v2087
    %2145 = vmatpush1.msra.mxu0 %v2086
    %2146 = vmatprep.subr.mxu0 %v2091
    %2147 = vmatpush1.msra.mxu0 %v2090
    %2148 = vmatprep.subr.mxu0 %v2095
    %2149 = vmatpush1.msra.mxu0 %v2094
    %2150 = vmatprep.subr.mxu0 %v2099
    %2151 = vmatpush1.msra.mxu0 %v2098
    %2152 = vmatprep.subr.mxu0 %v2103
    %2153 = vmatpush1.msra.mxu0 %v2102
    %2154 = vmatprep.subr.mxu0 %v2107
    %2155 = vmatpush1.msra.mxu0 %v2106
    %2156 = vmatprep.subr.mxu0 %v2111
    %2157 = vmatpush1.msra.mxu0 %v2110
    %2158 = vmatprep.subr.mxu0 %v2115
    %2159 = vmatpush1.msra.mxu0 %v2114
    %2160 = vmatprep.subr.mxu0 %v2119
    %2161 = vmatpush1.msra.mxu0 %v2118
    %2162 = vmatprep.subr.mxu0 %v2123
    %2163 = vmatpush1.msra.mxu0 %v2122
    %2164 = vmatprep.subr.mxu0 %v2127
    %2165 = vmatpush1.msra.mxu0 %v2126
    %2166 = vmatprep.subr.mxu0 %v2131
    %2167 = vmatpush1.msra.mxu0 %v2130
    %2168 = vmatprep.subr.mxu0 %v2135
    %2169 = vmatpush1.msra.mxu0 %v2134
    %2170 = vmatprep.subr.mxu0 0.0
    %2171 = vmatpush1.msra.mxu0 0.0
    %2172 = vmatprep.subr.mxu0 0.0
    %2173 = vmatpush1.msra.mxu0 0.0
    %2174 = vmatprep.subr.mxu0 0.0
    %2175 = vmatpush1.msra.mxu0 0.0
    %2176 = vmatprep.subr.mxu0 0.0
    %2177 = vmatpush1.msra.mxu0 0.0
    %2178 = vmatprep.subr.mxu0 0.0
    %2179 = vmatpush1.msra.mxu0 0.0
    %2180 = vmatprep.subr.mxu0 0.0
    %2181 = vmatpush1.msra.mxu0 0.0
    %2182 = vmatprep.subr.mxu0 0.0
    %2183 = vmatpush1.msra.mxu0 0.0
    %2184 = vmatprep.subr.mxu0 0.0
    %2185 = vmatpush1.msra.mxu0 0.0
    %2186 = vmatprep.subr.mxu0 0.0
    %2187 = vmatpush1.msra.mxu0 0.0
    %2188 = vmatprep.subr.mxu0 0.0
    %2189 = vmatpush1.msra.mxu0 0.0
    %2190 = vmatprep.subr.mxu0 0.0
    %2191 = vmatpush1.msra.mxu0 0.0
    %2192 = vmatprep.subr.mxu0 0.0
    %2193 = vmatpush1.msra.mxu0 0.0
    %2194 = vmatprep.subr.mxu0 0.0
    %2195 = vmatpush1.msra.mxu0 0.0
    %2196 = vmatprep.subr.mxu0 0.0
    %2197 = vmatpush1.msra.mxu0 0.0
    %2198 = vmatprep.subr.mxu0 0.0
    %2199 = vmatpush1.msra.mxu0 0.0
    %2200 = vmatprep.subr.mxu0 0.0
    %2201 = vmatpush1.msra.mxu0 0.0
    %2202 = vmatprep.mubr.f32.mxu0 0.0
    %2203 = vmatmul.mubr.f32.gmra.mrb[0].mxu0 %v2068
    %v2204 = vpop.f32.mrb[0].mxu0
    %v2205 = vadd.f32 0.0, %v2204
    %v2206 = vpop.f32.mrb[0].mxu0
    %v2207 = vadd.f32 0.0, %v2206
    %2208 = vdwg.mxu0
    %2209 = vmatprep.subr.mxu0 %v2077
    %2210 = vmatpush1.msra.mxu0 %v2076
    %2211 = vmatprep.subr.mxu0 %v2081
    %2212 = vmatpush1.msra.mxu0 %v2080
    %2213 = vmatprep.subr.mxu0 %v2085
    %2214 = vmatpush1.msra.mxu0 %v2084
    %2215 = vmatprep.subr.mxu0 %v2089
    %2216 = vmatpush1.msra.mxu0 %v2088
    %2217 = vmatprep.subr.mxu0 %v2093
    %2218 = vmatpush1.msra.mxu0 %v2092
    %2219 = vmatprep.subr.mxu0 %v2097
    %2220 = vmatpush1.msra.mxu0 %v2096
    %2221 = vmatprep.subr.mxu0 %v2101
    %2222 = vmatpush1.msra.mxu0 %v2100
    %2223 = vmatprep.subr.mxu0 %v2105
    %2224 = vmatpush1.msra.mxu0 %v2104
    %2225 = vmatprep.subr.mxu0 %v2109
    %2226 = vmatpush1.msra.mxu0 %v2108
    %2227 = vmatprep.subr.mxu0 %v2113
    %2228 = vmatpush1.msra.mxu0 %v2112
    %2229 = vmatprep.subr.mxu0 %v2117
    %2230 = vmatpush1.msra.mxu0 %v2116
    %2231 = vmatprep.subr.mxu0 %v2121
    %2232 = vmatpush1.msra.mxu0 %v2120
    %2233 = vmatprep.subr.mxu0 %v2125
    %2234 = vmatpush1.msra.mxu0 %v2124
    %2235 = vmatprep.subr.mxu0 %v2129
    %2236 = vmatpush1.msra.mxu0 %v2128
    %2237 = vmatprep.subr.mxu0 %v2133
    %2238 = vmatpush1.msra.mxu0 %v2132
    %2239 = vmatprep.subr.mxu0 %v2137
    %2240 = vmatpush1.msra.mxu0 %v2136
    %2241 = vmatprep.subr.mxu0 0.0
    %2242 = vmatpush1.msra.mxu0 0.0
    %2243 = vmatprep.subr.mxu0 0.0
    %2244 = vmatpush1.msra.mxu0 0.0
    %2245 = vmatprep.subr.mxu0 0.0
    %2246 = vmatpush1.msra.mxu0 0.0
    %2247 = vmatprep.subr.mxu0 0.0
    %2248 = vmatpush1.msra.mxu0 0.0
    %2249 = vmatprep.subr.mxu0 0.0
    %2250 = vmatpush1.msra.mxu0 0.0
    %2251 = vmatprep.subr.mxu0 0.0
    %2252 = vmatpush1.msra.mxu0 0.0
    %2253 = vmatprep.subr.mxu0 0.0
    %2254 = vmatpush1.msra.mxu0 0.0
    %2255 = vmatprep.subr.mxu0 0.0
    %2256 = vmatpush1.msra.mxu0 0.0
    %2257 = vmatprep.subr.mxu0 0.0
    %2258 = vmatpush1.msra.mxu0 0.0
    %2259 = vmatprep.subr.mxu0 0.0
    %2260 = vmatpush1.msra.mxu0 0.0
    %2261 = vmatprep.subr.mxu0 0.0
    %2262 = vmatpush1.msra.mxu0 0.0
    %2263 = vmatprep.subr.mxu0 0.0
    %2264 = vmatpush1.msra.mxu0 0.0
    %2265 = vmatprep.subr.mxu0 0.0
    %2266 = vmatpush1.msra.mxu0 0.0
    %2267 = vmatprep.subr.mxu0 0.0
    %2268 = vmatpush1.msra.mxu0 0.0
    %2269 = vmatprep.subr.mxu0 0.0
    %2270 = vmatpush1.msra.mxu0 0.0
    %2271 = vmatprep.subr.mxu0 0.0
    %2272 = vmatpush1.msra.mxu0 0.0
    %2273 = vmatprep.mubr.f32.mxu0 0.0
    %2274 = vmatmul.mubr.f32.gmra.mrb[0].mxu0 %v2068
    %v2275 = vpop.f32.mrb[0].mxu0
    %v2276 = vadd.f32 0.0, %v2275
    %v2277 = vpop.f32.mrb[0].mxu0
    %v2278 = vadd.f32 0.0, %v2277
    %2279 = vdwg.mxu0
    %v2280 = vadd.f32 %v2070, %v2205
    %v2281 = vadd.f32 %v2071, %v2207
    %v2282 = vadd.f32 %v2072, %v2276
    %v2283 = vadd.f32 %v2073, %v2278
    %v2284 = vxor.u32 %v2280, 2147483648
    %v2285 = vmul.f32 %v2284, 1.442695
    %v2286 = vpow.pop %v2285
    %v2287 = vadd.f32 %v2286, 1.0
    %v2288 = vrcp.pop %v2287
    %v2289 = vmul.f32 1.0, %v2288
    %v2290 = vxor.u32 %v2281, 2147483648
    %v2291 = vmul.f32 %v2290, 1.442695
    %v2292 = vpow.pop %v2291
    %v2293 = vadd.f32 %v2292, 1.0
    %v2294 = vrcp.pop %v2293
    %v2295 = vmul.f32 1.0, %v2294
    %v2296 = vtanh.pop %v2282
    %v2297 = vxor.u32 %v2283, 2147483648
    %v2298 = vmul.f32 %v2297, 1.442695
    %v2299 = vpow.pop %v2298
    %v2300 = vadd.f32 %v2299, 1.0
    %v2301 = vrcp.pop %v2300
    %v2302 = vmul.f32 1.0, %v2301
    %v2303 = vmul.f32 %v2295, %v2066
    %v2304 = vmul.f32 %v2289, %v2296
    %v2305 = vadd.f32 %v2303, %v2304
    %v2306 = vtanh.pop %v2305
    %v2307 = vmul.f32 %v2302, %v2306
    %2308 = vst [vmem:[#allocation3 + $0x38] sm:$0xff] %v2307
    %v2309 = vld [vmem:[#allocation3] sm:$0xff]
    %v2310 = vld [vmem:[#allocation3 + $0x8] sm:$0xff]
    %v2311 = vld [vmem:[#allocation3 + $0x10] sm:$0xff]
    %v2312 = vld [vmem:[#allocation3 + $0x18] sm:$0xff]
    %v2313 = vld [vmem:[#allocation3 + $0x20] sm:$0xff]
    %v2314 = vld [vmem:[#allocation3 + $0x28] sm:$0xff]
    %v2315 = vld [vmem:[#allocation3 + $0x30] sm:$0xff]
    %v2316 = vld [vmem:[#allocation3 + $0x38] sm:$0xff]
    %v2317 = vld [vmem:[#allocation6] sm:$0xff]
    %v2318 = vld [vmem:[#allocation6 + $0x8] sm:$0xff]
    %v2319 = vld [vmem:[#allocation6 + $0x10] sm:$0xff]
    %v2320 = vld [vmem:[#allocation6 + $0x18] sm:$0xff]
    %v2321 = vld [vmem:[#allocation6 + $0x20] sm:$0xff]
    %v2322 = vld [vmem:[#allocation6 + $0x28] sm:$0xff]
    %v2323 = vld [vmem:[#allocation6 + $0x30] sm:$0xff]
    %v2324 = vld [vmem:[#allocation6 + $0x38] sm:$0xff]
    %v2325 = vld [vmem:[#allocation6 + $0x40] sm:$0xff]
    %v2326 = vld [vmem:[#allocation6 + $0x48] sm:$0xff]
    %v2327 = vld [vmem:[#allocation6 + $0x50] sm:$0xff]
    %v2328 = vld [vmem:[#allocation6 + $0x58] sm:$0xff]
    %v2329 = vld [vmem:[#allocation6 + $0x60] sm:$0xff]
    %v2330 = vld [vmem:[#allocation6 + $0x68] sm:$0xff]
    %v2331 = vld [vmem:[#allocation6 + $0x70] sm:$0xff]
    %v2332 = vld [vmem:[#allocation6 + $0x78] sm:$0xff]
    %v2333 = vld [vmem:[#allocation6 + $0x80] sm:$0xff]
    %v2334 = vld [vmem:[#allocation6 + $0x88] sm:$0xff]
    %v2335 = vld [vmem:[#allocation6 + $0x90] sm:$0xff]
    %v2336 = vld [vmem:[#allocation6 + $0x98] sm:$0xff]
    %v2337 = vld [vmem:[#allocation6 + $0xa0] sm:$0xff]
    %v2338 = vld [vmem:[#allocation6 + $0xa8] sm:$0xff]
    %v2339 = vld [vmem:[#allocation6 + $0xb0] sm:$0xff]
    %v2340 = vld [vmem:[#allocation6 + $0xb8] sm:$0xff]
    %v2341 = vld [vmem:[#allocation6 + $0xc0] sm:$0xff]
    %v2342 = vld [vmem:[#allocation6 + $0xc8] sm:$0xff]
    %v2343 = vld [vmem:[#allocation6 + $0xd0] sm:$0xff]
    %v2344 = vld [vmem:[#allocation6 + $0xd8] sm:$0xff]
    %v2345 = vld [vmem:[#allocation6 + $0xe0] sm:$0xff]
    %v2346 = vld [vmem:[#allocation6 + $0xe8] sm:$0xff]
    %v2347 = vld [vmem:[#allocation6 + $0xf0] sm:$0xff]
    %v2348 = vld [vmem:[#allocation6 + $0xf8] sm:$0xff]
    %v2349 = vld [vmem:[#allocation6 + $0x100] sm:$0xff]
    %v2350 = vld [vmem:[#allocation6 + $0x108] sm:$0xff]
    %v2351 = vld [vmem:[#allocation6 + $0x110] sm:$0xff]
    %v2352 = vld [vmem:[#allocation6 + $0x118] sm:$0xff]
    %v2353 = vld [vmem:[#allocation6 + $0x120] sm:$0xff]
    %v2354 = vld [vmem:[#allocation6 + $0x128] sm:$0xff]
    %v2355 = vld [vmem:[#allocation6 + $0x130] sm:$0xff]
    %v2356 = vld [vmem:[#allocation6 + $0x138] sm:$0xff]
    %v2357 = vld [vmem:[#allocation6 + $0x140] sm:$0xff]
    %v2358 = vld [vmem:[#allocation6 + $0x148] sm:$0xff]
    %v2359 = vld [vmem:[#allocation6 + $0x150] sm:$0xff]
    %v2360 = vld [vmem:[#allocation6 + $0x158] sm:$0xff]
    %v2361 = vld [vmem:[#allocation6 + $0x160] sm:$0xff]
    %v2362 = vld [vmem:[#allocation6 + $0x168] sm:$0xff]
    %v2363 = vld [vmem:[#allocation6 + $0x170] sm:$0xff]
    %v2364 = vld [vmem:[#allocation6 + $0x178] sm:$0xff]
    %v2365 = vld [vmem:[#allocation6 + $0x180] sm:$0xff]
    %v2366 = vld [vmem:[#allocation6 + $0x188] sm:$0xff]
    %v2367 = vld [vmem:[#allocation6 + $0x190] sm:$0xff]
    %v2368 = vld [vmem:[#allocation6 + $0x198] sm:$0xff]
    %v2369 = vld [vmem:[#allocation6 + $0x1a0] sm:$0xff]
    %v2370 = vld [vmem:[#allocation6 + $0x1a8] sm:$0xff]
    %v2371 = vld [vmem:[#allocation6 + $0x1b0] sm:$0xff]
    %v2372 = vld [vmem:[#allocation6 + $0x1b8] sm:$0xff]
    %v2373 = vld [vmem:[#allocation6 + $0x1c0] sm:$0xff]
    %v2374 = vld [vmem:[#allocation6 + $0x1c8] sm:$0xff]
    %v2375 = vld [vmem:[#allocation6 + $0x1d0] sm:$0xff]
    %v2376 = vld [vmem:[#allocation6 + $0x1d8] sm:$0xff]
    %v2377 = vld [vmem:[#allocation6 + $0x1e0] sm:$0xff]
    %v2378 = vld [vmem:[#allocation6 + $0x1e8] sm:$0xff]
    %v2379 = vld [vmem:[#allocation6 + $0x1f0] sm:$0xff]
    %v2380 = vld [vmem:[#allocation6 + $0x1f8] sm:$0xff]
    %v2381 = vld [vmem:[%s7] sm:$0xf]
    %v2383 = vlaneseq
    %v2384 = vshrl.u32 %v2383, 7
    %v2385 = vsub.s32 0, %v2384
    %v2386 = vrot.slane %v2381, %v2385
    %v2387 = vlaneseq
    %v2388 = vshrl.u32 %v2387, 7
    %v2389 = vsub.s32 1, %v2388
    %v2390 = vrot.slane %v2381, %v2389
    %v2391 = vlaneseq
    %v2392 = vshrl.u32 %v2391, 7
    %v2393 = vsub.s32 2, %v2392
    %v2394 = vrot.slane %v2381, %v2393
    %v2395 = vlaneseq
    %v2396 = vshrl.u32 %v2395, 7
    %v2397 = vsub.s32 3, %v2396
    %v2398 = vrot.slane %v2381, %v2397
    %2403 = vmatprep.subr.mxu0 %v2318
    %2404 = vmatpush1.msra.mxu0 %v2317
    %2405 = vmatprep.subr.mxu0 %v2322
    %2406 = vmatpush1.msra.mxu0 %v2321
    %2407 = vmatprep.subr.mxu0 %v2326
    %2408 = vmatpush1.msra.mxu0 %v2325
    %2409 = vmatprep.subr.mxu0 %v2330
    %2410 = vmatpush1.msra.mxu0 %v2329
    %2411 = vmatprep.subr.mxu0 %v2334
    %2412 = vmatpush1.msra.mxu0 %v2333
    %2413 = vmatprep.subr.mxu0 %v2338
    %2414 = vmatpush1.msra.mxu0 %v2337
    %2415 = vmatprep.subr.mxu0 %v2342
    %2416 = vmatpush1.msra.mxu0 %v2341
    %2417 = vmatprep.subr.mxu0 %v2346
    %2418 = vmatpush1.msra.mxu0 %v2345
    %2419 = vmatprep.subr.mxu0 %v2350
    %2420 = vmatpush1.msra.mxu0 %v2349
    %2421 = vmatprep.subr.mxu0 %v2354
    %2422 = vmatpush1.msra.mxu0 %v2353
    %2423 = vmatprep.subr.mxu0 %v2358
    %2424 = vmatpush1.msra.mxu0 %v2357
    %2425 = vmatprep.subr.mxu0 %v2362
    %2426 = vmatpush1.msra.mxu0 %v2361
    %2427 = vmatprep.subr.mxu0 %v2366
    %2428 = vmatpush1.msra.mxu0 %v2365
    %2429 = vmatprep.subr.mxu0 %v2370
    %2430 = vmatpush1.msra.mxu0 %v2369
    %2431 = vmatprep.subr.mxu0 %v2374
    %2432 = vmatpush1.msra.mxu0 %v2373
    %2433 = vmatprep.subr.mxu0 %v2378
    %2434 = vmatpush1.msra.mxu0 %v2377
    %2435 = vmatprep.subr.mxu0 0.0
    %2436 = vmatpush1.msra.mxu0 0.0
    %2437 = vmatprep.subr.mxu0 0.0
    %2438 = vmatpush1.msra.mxu0 0.0
    %2439 = vmatprep.subr.mxu0 0.0
    %2440 = vmatpush1.msra.mxu0 0.0
    %2441 = vmatprep.subr.mxu0 0.0
    %2442 = vmatpush1.msra.mxu0 0.0
    %2443 = vmatprep.subr.mxu0 0.0
    %2444 = vmatpush1.msra.mxu0 0.0
    %2445 = vmatprep.subr.mxu0 0.0
    %2446 = vmatpush1.msra.mxu0 0.0
    %2447 = vmatprep.subr.mxu0 0.0
    %2448 = vmatpush1.msra.mxu0 0.0
    %2449 = vmatprep.subr.mxu0 0.0
    %2450 = vmatpush1.msra.mxu0 0.0
    %2451 = vmatprep.subr.mxu0 0.0
    %2452 = vmatpush1.msra.mxu0 0.0
    %2453 = vmatprep.subr.mxu0 0.0
    %2454 = vmatpush1.msra.mxu0 0.0
    %2455 = vmatprep.subr.mxu0 0.0
    %2456 = vmatpush1.msra.mxu0 0.0
    %2457 = vmatprep.subr.mxu0 0.0
    %2458 = vmatpush1.msra.mxu0 0.0
    %2459 = vmatprep.subr.mxu0 0.0
    %2460 = vmatpush1.msra.mxu0 0.0
    %2461 = vmatprep.subr.mxu0 0.0
    %2462 = vmatpush1.msra.mxu0 0.0
    %2463 = vmatprep.subr.mxu0 0.0
    %2464 = vmatpush1.msra.mxu0 0.0
    %2465 = vmatprep.subr.mxu0 0.0
    %2466 = vmatpush1.msra.mxu0 0.0
    %2467 = vmatprep.mubr.f32.mxu0 0.0
    %2468 = vmatmul.mubr.f32.gmra.mrb[0].mxu0 %v2309
    %v2469 = vpop.f32.mrb[0].mxu0
    %v2470 = vadd.f32 %v2386, %v2469
    %v2471 = vpop.f32.mrb[0].mxu0
    %v2472 = vadd.f32 %v2390, %v2471
    %2473 = vmatprep.mubr.f32.mxu0 0.0
    %2474 = vmatmul.mubr.f32.gmra.mrb[0].mxu0 %v2310
    %v2475 = vpop.f32.mrb[0].mxu0
    %v2476 = vadd.f32 %v2386, %v2475
    %v2477 = vpop.f32.mrb[0].mxu0
    %v2478 = vadd.f32 %v2390, %v2477
    %2479 = vmatprep.mubr.f32.mxu0 0.0
    %2480 = vmatmul.mubr.f32.gmra.mrb[0].mxu0 %v2311
    %v2481 = vpop.f32.mrb[0].mxu0
    %v2482 = vadd.f32 %v2386, %v2481
    %v2483 = vpop.f32.mrb[0].mxu0
    %v2484 = vadd.f32 %v2390, %v2483
    %2485 = vmatprep.mubr.f32.mxu0 0.0
    %2486 = vmatmul.mubr.f32.gmra.mrb[0].mxu0 %v2312
    %v2487 = vpop.f32.mrb[0].mxu0
    %v2488 = vadd.f32 %v2386, %v2487
    %v2489 = vpop.f32.mrb[0].mxu0
    %v2490 = vadd.f32 %v2390, %v2489
    %2491 = vmatprep.mubr.f32.mxu0 0.0
    %2492 = vmatmul.mubr.f32.gmra.mrb[0].mxu0 %v2313
    %v2493 = vpop.f32.mrb[0].mxu0
    %v2494 = vadd.f32 %v2386, %v2493
    %v2495 = vpop.f32.mrb[0].mxu0
    %v2496 = vadd.f32 %v2390, %v2495
    %2497 = vmatprep.mubr.f32.mxu0 0.0
    %2498 = vmatmul.mubr.f32.gmra.mrb[0].mxu0 %v2314
    %v2499 = vpop.f32.mrb[0].mxu0
    %v2500 = vadd.f32 %v2386, %v2499
    %v2501 = vpop.f32.mrb[0].mxu0
    %v2502 = vadd.f32 %v2390, %v2501
    %2503 = vmatprep.mubr.f32.mxu0 0.0
    %2504 = vmatmul.mubr.f32.gmra.mrb[0].mxu0 %v2315
    %v2505 = vpop.f32.mrb[0].mxu0
    %v2506 = vadd.f32 %v2386, %v2505
    %v2507 = vpop.f32.mrb[0].mxu0
    %v2508 = vadd.f32 %v2390, %v2507
    %2509 = vmatprep.mubr.f32.mxu0 0.0
    %2510 = vmatmul.mubr.f32.gmra.mrb[0].mxu0 %v2316
    %v2511 = vpop.f32.mrb[0].mxu0
    %v2512 = vadd.f32 %v2386, %v2511
    %v2513 = vpop.f32.mrb[0].mxu0
    %v2514 = vadd.f32 %v2390, %v2513
    %2515 = vdwg.mxu0
    %2516 = vmatprep.subr.mxu0 %v2320
    %2517 = vmatpush1.msra.mxu0 %v2319
    %2518 = vmatprep.subr.mxu0 %v2324
    %2519 = vmatpush1.msra.mxu0 %v2323
    %2520 = vmatprep.subr.mxu0 %v2328
    %2521 = vmatpush1.msra.mxu0 %v2327
    %2522 = vmatprep.subr.mxu0 %v2332
    %2523 = vmatpush1.msra.mxu0 %v2331
    %2524 = vmatprep.subr.mxu0 %v2336
    %2525 = vmatpush1.msra.mxu0 %v2335
    %2526 = vmatprep.subr.mxu0 %v2340
    %2527 = vmatpush1.msra.mxu0 %v2339
    %2528 = vmatprep.subr.mxu0 %v2344
    %2529 = vmatpush1.msra.mxu0 %v2343
    %2530 = vmatprep.subr.mxu0 %v2348
    %2531 = vmatpush1.msra.mxu0 %v2347
    %2532 = vmatprep.subr.mxu0 %v2352
    %2533 = vmatpush1.msra.mxu0 %v2351
    %2534 = vmatprep.subr.mxu0 %v2356
    %2535 = vmatpush1.msra.mxu0 %v2355
    %2536 = vmatprep.subr.mxu0 %v2360
    %2537 = vmatpush1.msra.mxu0 %v2359
    %2538 = vmatprep.subr.mxu0 %v2364
    %2539 = vmatpush1.msra.mxu0 %v2363
    %2540 = vmatprep.subr.mxu0 %v2368
    %2541 = vmatpush1.msra.mxu0 %v2367
    %2542 = vmatprep.subr.mxu0 %v2372
    %2543 = vmatpush1.msra.mxu0 %v2371
    %2544 = vmatprep.subr.mxu0 %v2376
    %2545 = vmatpush1.msra.mxu0 %v2375
    %2546 = vmatprep.subr.mxu0 %v2380
    %2547 = vmatpush1.msra.mxu0 %v2379
    %2548 = vmatprep.subr.mxu0 0.0
    %2549 = vmatpush1.msra.mxu0 0.0
    %2550 = vmatprep.subr.mxu0 0.0
    %2551 = vmatpush1.msra.mxu0 0.0
    %2552 = vmatprep.subr.mxu0 0.0
    %2553 = vmatpush1.msra.mxu0 0.0
    %2554 = vmatprep.subr.mxu0 0.0
    %2555 = vmatpush1.msra.mxu0 0.0
    %2556 = vmatprep.subr.mxu0 0.0
    %2557 = vmatpush1.msra.mxu0 0.0
    %2558 = vmatprep.subr.mxu0 0.0
    %2559 = vmatpush1.msra.mxu0 0.0
    %2560 = vmatprep.subr.mxu0 0.0
    %2561 = vmatpush1.msra.mxu0 0.0
    %2562 = vmatprep.subr.mxu0 0.0
    %2563 = vmatpush1.msra.mxu0 0.0
    %2564 = vmatprep.subr.mxu0 0.0
    %2565 = vmatpush1.msra.mxu0 0.0
    %2566 = vmatprep.subr.mxu0 0.0
    %2567 = vmatpush1.msra.mxu0 0.0
    %2568 = vmatprep.subr.mxu0 0.0
    %2569 = vmatpush1.msra.mxu0 0.0
    %2570 = vmatprep.subr.mxu0 0.0
    %2571 = vmatpush1.msra.mxu0 0.0
    %2572 = vmatprep.subr.mxu0 0.0
    %2573 = vmatpush1.msra.mxu0 0.0
    %2574 = vmatprep.subr.mxu0 0.0
    %2575 = vmatpush1.msra.mxu0 0.0
    %2576 = vmatprep.subr.mxu0 0.0
    %2577 = vmatpush1.msra.mxu0 0.0
    %2578 = vmatprep.subr.mxu0 0.0
    %2579 = vmatpush1.msra.mxu0 0.0
    %2580 = vmatprep.mubr.f32.mxu0 0.0
    %2581 = vmatmul.mubr.f32.gmra.mrb[0].mxu0 %v2309
    %v2582 = vpop.f32.mrb[0].mxu0
    %v2583 = vadd.f32 %v2394, %v2582
    %v2584 = vpop.f32.mrb[0].mxu0
    %v2585 = vadd.f32 %v2398, %v2584
    %2586 = vmatprep.mubr.f32.mxu0 0.0
    %2587 = vmatmul.mubr.f32.gmra.mrb[0].mxu0 %v2310
    %v2588 = vpop.f32.mrb[0].mxu0
    %v2589 = vadd.f32 %v2394, %v2588
    %v2590 = vpop.f32.mrb[0].mxu0
    %v2591 = vadd.f32 %v2398, %v2590
    %2592 = vmatprep.mubr.f32.mxu0 0.0
    %2593 = vmatmul.mubr.f32.gmra.mrb[0].mxu0 %v2311
    %v2594 = vpop.f32.mrb[0].mxu0
    %v2595 = vadd.f32 %v2394, %v2594
    %v2596 = vpop.f32.mrb[0].mxu0
    %v2597 = vadd.f32 %v2398, %v2596
    %2598 = vmatprep.mubr.f32.mxu0 0.0
    %2599 = vmatmul.mubr.f32.gmra.mrb[0].mxu0 %v2312
    %v2600 = vpop.f32.mrb[0].mxu0
    %v2601 = vadd.f32 %v2394, %v2600
    %v2602 = vpop.f32.mrb[0].mxu0
    %v2603 = vadd.f32 %v2398, %v2602
    %2604 = vmatprep.mubr.f32.mxu0 0.0
    %2605 = vmatmul.mubr.f32.gmra.mrb[0].mxu0 %v2313
    %v2606 = vpop.f32.mrb[0].mxu0
    %v2607 = vadd.f32 %v2394, %v2606
    %v2608 = vpop.f32.mrb[0].mxu0
    %v2609 = vadd.f32 %v2398, %v2608
    %2610 = vmatprep.mubr.f32.mxu0 0.0
    %2611 = vmatmul.mubr.f32.gmra.mrb[0].mxu0 %v2314
    %v2612 = vpop.f32.mrb[0].mxu0
    %v2613 = vadd.f32 %v2394, %v2612
    %v2614 = vpop.f32.mrb[0].mxu0
    %v2615 = vadd.f32 %v2398, %v2614
    %2616 = vmatprep.mubr.f32.mxu0 0.0
    %2617 = vmatmul.mubr.f32.gmra.mrb[0].mxu0 %v2315
    %v2618 = vpop.f32.mrb[0].mxu0
    %v2619 = vadd.f32 %v2394, %v2618
    %v2620 = vpop.f32.mrb[0].mxu0
    %v2621 = vadd.f32 %v2398, %v2620
    %2622 = vmatprep.mubr.f32.mxu0 0.0
    %2623 = vmatmul.mubr.f32.gmra.mrb[0].mxu0 %v2316
    %v2624 = vpop.f32.mrb[0].mxu0
    %v2625 = vadd.f32 %v2394, %v2624
    %v2626 = vpop.f32.mrb[0].mxu0
    %v2627 = vadd.f32 %v2398, %v2626
    %2628 = vdwg.mxu0
    %2629 = vst [vmem:[#allocation2] sm:$0xff] %v2470
    %2630 = vst [vmem:[#allocation2 + $0x8] sm:$0xff] %v2472
    %2631 = vst [vmem:[#allocation2 + $0x10] sm:$0xff] %v2583
    %2632 = vst [vmem:[#allocation2 + $0x18] sm:$0xff] %v2585
    %2633 = vst [vmem:[#allocation2 + $0x20] sm:$0xff] %v2476
    %2634 = vst [vmem:[#allocation2 + $0x28] sm:$0xff] %v2478
    %2635 = vst [vmem:[#allocation2 + $0x30] sm:$0xff] %v2589
    %2636 = vst [vmem:[#allocation2 + $0x38] sm:$0xff] %v2591
    %2637 = vst [vmem:[#allocation2 + $0x40] sm:$0xff] %v2482
    %2638 = vst [vmem:[#allocation2 + $0x48] sm:$0xff] %v2484
    %2639 = vst [vmem:[#allocation2 + $0x50] sm:$0xff] %v2595
    %2640 = vst [vmem:[#allocation2 + $0x58] sm:$0xff] %v2597
    %2641 = vst [vmem:[#allocation2 + $0x60] sm:$0xff] %v2488
    %2642 = vst [vmem:[#allocation2 + $0x68] sm:$0xff] %v2490
    %2643 = vst [vmem:[#allocation2 + $0x70] sm:$0xff] %v2601
    %2644 = vst [vmem:[#allocation2 + $0x78] sm:$0xff] %v2603
    %2645 = vst [vmem:[#allocation2 + $0x80] sm:$0xff] %v2494
    %2646 = vst [vmem:[#allocation2 + $0x88] sm:$0xff] %v2496
    %2647 = vst [vmem:[#allocation2 + $0x90] sm:$0xff] %v2607
    %2648 = vst [vmem:[#allocation2 + $0x98] sm:$0xff] %v2609
    %2649 = vst [vmem:[#allocation2 + $0xa0] sm:$0xff] %v2500
    %2650 = vst [vmem:[#allocation2 + $0xa8] sm:$0xff] %v2502
    %2651 = vst [vmem:[#allocation2 + $0xb0] sm:$0xff] %v2613
    %2652 = vst [vmem:[#allocation2 + $0xb8] sm:$0xff] %v2615
    %2653 = vst [vmem:[#allocation2 + $0xc0] sm:$0xff] %v2506
    %2654 = vst [vmem:[#allocation2 + $0xc8] sm:$0xff] %v2508
    %2655 = vst [vmem:[#allocation2 + $0xd0] sm:$0xff] %v2619
    %2656 = vst [vmem:[#allocation2 + $0xd8] sm:$0xff] %v2621
    %2657 = vst [vmem:[#allocation2 + $0xe0] sm:$0xff] %v2512
    %2658 = vst [vmem:[#allocation2 + $0xe8] sm:$0xff] %v2514
    %2659 = vst [vmem:[#allocation2 + $0xf0] sm:$0xff] %v2625
    %2660 = vst [vmem:[#allocation2 + $0xf8] sm:$0xff] %v2627
    %v2661 = vld [vmem:[#allocation2] sm:$0xff]
    %v2662 = vld [vmem:[#allocation2 + $0x8] sm:$0xff]
    %v2663 = vld [vmem:[#allocation2 + $0x10] sm:$0xff]
    %v2664 = vld [vmem:[#allocation2 + $0x18] sm:$0xff]
    %v2665 = vld [vmem:[#allocation8] sm:$0xff]
    %v2666 = vld [vmem:[#allocation8 + $0x8] sm:$0xff]
    %v2667 = vld [vmem:[#allocation8 + $0x10] sm:$0xff]
    %v2668 = vld [vmem:[#allocation8 + $0x18] sm:$0xff]
    %v2669 = vld [vmem:[#allocation8 + $0x20] sm:$0xff]
    %v2670 = vld [vmem:[#allocation8 + $0x28] sm:$0xff]
    %v2671 = vld [vmem:[#allocation8 + $0x30] sm:$0xff]
    %v2672 = vld [vmem:[#allocation8 + $0x38] sm:$0xff]
    %v2673 = vld [vmem:[#allocation8 + $0x40] sm:$0xff]
    %v2674 = vld [vmem:[#allocation8 + $0x48] sm:$0xff]
    %v2675 = vld [vmem:[#allocation8 + $0x50] sm:$0xff]
    %v2676 = vld [vmem:[#allocation8 + $0x58] sm:$0xff]
    %v2677 = vld [vmem:[#allocation8 + $0x60] sm:$0xff]
    %v2678 = vld [vmem:[#allocation8 + $0x68] sm:$0xff]
    %v2679 = vld [vmem:[#allocation8 + $0x70] sm:$0xff]
    %v2680 = vld [vmem:[#allocation8 + $0x78] sm:$0xff]
    %v2681 = vld [vmem:[#allocation8 + $0x80] sm:$0xff]
    %v2682 = vld [vmem:[#allocation8 + $0x88] sm:$0xff]
    %v2683 = vld [vmem:[#allocation8 + $0x90] sm:$0xff]
    %v2684 = vld [vmem:[#allocation8 + $0x98] sm:$0xff]
    %v2685 = vld [vmem:[#allocation8 + $0xa0] sm:$0xff]
    %v2686 = vld [vmem:[#allocation8 + $0xa8] sm:$0xff]
    %v2687 = vld [vmem:[#allocation8 + $0xb0] sm:$0xff]
    %v2688 = vld [vmem:[#allocation8 + $0xb8] sm:$0xff]
    %v2689 = vld [vmem:[#allocation8 + $0xc0] sm:$0xff]
    %v2690 = vld [vmem:[#allocation8 + $0xc8] sm:$0xff]
    %v2691 = vld [vmem:[#allocation8 + $0xd0] sm:$0xff]
    %v2692 = vld [vmem:[#allocation8 + $0xd8] sm:$0xff]
    %v2693 = vld [vmem:[#allocation8 + $0xe0] sm:$0xff]
    %v2694 = vld [vmem:[#allocation8 + $0xe8] sm:$0xff]
    %v2695 = vld [vmem:[#allocation8 + $0xf0] sm:$0xff]
    %v2696 = vld [vmem:[#allocation8 + $0xf8] sm:$0xff]
    %v2697 = vld [vmem:[#allocation8 + $0x100] sm:$0xff]
    %v2698 = vld [vmem:[#allocation8 + $0x108] sm:$0xff]
    %v2699 = vld [vmem:[#allocation8 + $0x110] sm:$0xff]
    %v2700 = vld [vmem:[#allocation8 + $0x118] sm:$0xff]
    %v2701 = vld [vmem:[#allocation8 + $0x120] sm:$0xff]
    %v2702 = vld [vmem:[#allocation8 + $0x128] sm:$0xff]
    %v2703 = vld [vmem:[#allocation8 + $0x130] sm:$0xff]
    %v2704 = vld [vmem:[#allocation8 + $0x138] sm:$0xff]
    %v2705 = vld [vmem:[#allocation8 + $0x140] sm:$0xff]
    %v2706 = vld [vmem:[#allocation8 + $0x148] sm:$0xff]
    %v2707 = vld [vmem:[#allocation8 + $0x150] sm:$0xff]
    %v2708 = vld [vmem:[#allocation8 + $0x158] sm:$0xff]
    %v2709 = vld [vmem:[#allocation8 + $0x160] sm:$0xff]
    %v2710 = vld [vmem:[#allocation8 + $0x168] sm:$0xff]
    %v2711 = vld [vmem:[#allocation8 + $0x170] sm:$0xff]
    %v2712 = vld [vmem:[#allocation8 + $0x178] sm:$0xff]
    %v2713 = vld [vmem:[#allocation8 + $0x180] sm:$0xff]
    %v2714 = vld [vmem:[#allocation8 + $0x188] sm:$0xff]
    %v2715 = vld [vmem:[#allocation8 + $0x190] sm:$0xff]
    %v2716 = vld [vmem:[#allocation8 + $0x198] sm:$0xff]
    %v2717 = vld [vmem:[#allocation8 + $0x1a0] sm:$0xff]
    %v2718 = vld [vmem:[#allocation8 + $0x1a8] sm:$0xff]
    %v2719 = vld [vmem:[#allocation8 + $0x1b0] sm:$0xff]
    %v2720 = vld [vmem:[#allocation8 + $0x1b8] sm:$0xff]
    %v2721 = vld [vmem:[#allocation8 + $0x1c0] sm:$0xff]
    %v2722 = vld [vmem:[#allocation8 + $0x1c8] sm:$0xff]
    %v2723 = vld [vmem:[#allocation8 + $0x1d0] sm:$0xff]
    %v2724 = vld [vmem:[#allocation8 + $0x1d8] sm:$0xff]
    %v2725 = vld [vmem:[#allocation8 + $0x1e0] sm:$0xff]
    %v2726 = vld [vmem:[#allocation8 + $0x1e8] sm:$0xff]
    %v2727 = vld [vmem:[#allocation8 + $0x1f0] sm:$0xff]
    %v2728 = vld [vmem:[#allocation8 + $0x1f8] sm:$0xff]
    %2729 = vmatprep.subr.mxu0 %v2666
    %2730 = vmatpush1.msra.mxu0 %v2665
    %2731 = vmatprep.subr.mxu0 %v2670
    %2732 = vmatpush1.msra.mxu0 %v2669
    %2733 = vmatprep.subr.mxu0 %v2674
    %2734 = vmatpush1.msra.mxu0 %v2673
    %2735 = vmatprep.subr.mxu0 %v2678
    %2736 = vmatpush1.msra.mxu0 %v2677
    %2737 = vmatprep.subr.mxu0 %v2682
    %2738 = vmatpush1.msra.mxu0 %v2681
    %2739 = vmatprep.subr.mxu0 %v2686
    %2740 = vmatpush1.msra.mxu0 %v2685
    %2741 = vmatprep.subr.mxu0 %v2690
    %2742 = vmatpush1.msra.mxu0 %v2689
    %2743 = vmatprep.subr.mxu0 %v2694
    %2744 = vmatpush1.msra.mxu0 %v2693
    %2745 = vmatprep.subr.mxu0 %v2698
    %2746 = vmatpush1.msra.mxu0 %v2697
    %2747 = vmatprep.subr.mxu0 %v2702
    %2748 = vmatpush1.msra.mxu0 %v2701
    %2749 = vmatprep.subr.mxu0 %v2706
    %2750 = vmatpush1.msra.mxu0 %v2705
    %2751 = vmatprep.subr.mxu0 %v2710
    %2752 = vmatpush1.msra.mxu0 %v2709
    %2753 = vmatprep.subr.mxu0 %v2714
    %2754 = vmatpush1.msra.mxu0 %v2713
    %2755 = vmatprep.subr.mxu0 %v2718
    %2756 = vmatpush1.msra.mxu0 %v2717
    %2757 = vmatprep.subr.mxu0 %v2722
    %2758 = vmatpush1.msra.mxu0 %v2721
    %2759 = vmatprep.subr.mxu0 %v2726
    %2760 = vmatpush1.msra.mxu0 %v2725
    %2761 = vmatprep.subr.mxu0 0.0
    %2762 = vmatpush1.msra.mxu0 0.0
    %2763 = vmatprep.subr.mxu0 0.0
    %2764 = vmatpush1.msra.mxu0 0.0
    %2765 = vmatprep.subr.mxu0 0.0
    %2766 = vmatpush1.msra.mxu0 0.0
    %2767 = vmatprep.subr.mxu0 0.0
    %2768 = vmatpush1.msra.mxu0 0.0
    %2769 = vmatprep.subr.mxu0 0.0
    %2770 = vmatpush1.msra.mxu0 0.0
    %2771 = vmatprep.subr.mxu0 0.0
    %2772 = vmatpush1.msra.mxu0 0.0
    %2773 = vmatprep.subr.mxu0 0.0
    %2774 = vmatpush1.msra.mxu0 0.0
    %2775 = vmatprep.subr.mxu0 0.0
    %2776 = vmatpush1.msra.mxu0 0.0
    %2777 = vmatprep.subr.mxu0 0.0
    %2778 = vmatpush1.msra.mxu0 0.0
    %2779 = vmatprep.subr.mxu0 0.0
    %2780 = vmatpush1.msra.mxu0 0.0
    %2781 = vmatprep.subr.mxu0 0.0
    %2782 = vmatpush1.msra.mxu0 0.0
    %2783 = vmatprep.subr.mxu0 0.0
    %2784 = vmatpush1.msra.mxu0 0.0
    %2785 = vmatprep.subr.mxu0 0.0
    %2786 = vmatpush1.msra.mxu0 0.0
    %2787 = vmatprep.subr.mxu0 0.0
    %2788 = vmatpush1.msra.mxu0 0.0
    %2789 = vmatprep.subr.mxu0 0.0
    %2790 = vmatpush1.msra.mxu0 0.0
    %2791 = vmatprep.subr.mxu0 0.0
    %2792 = vmatpush1.msra.mxu0 0.0
    %2793 = vmatprep.mubr.f32.mxu0 0.0
    %2794 = vmatmul.mubr.f32.gmra.mrb[0].mxu0 0.0
    %v2795 = vpop.f32.mrb[0].mxu0
    %v2796 = vadd.f32 0.0, %v2795
    %v2797 = vpop.f32.mrb[0].mxu0
    %v2798 = vadd.f32 0.0, %v2797
    %2799 = vdwg.mxu0
    %2800 = vmatprep.subr.mxu0 %v2668
    %2801 = vmatpush1.msra.mxu0 %v2667
    %2802 = vmatprep.subr.mxu0 %v2672
    %2803 = vmatpush1.msra.mxu0 %v2671
    %2804 = vmatprep.subr.mxu0 %v2676
    %2805 = vmatpush1.msra.mxu0 %v2675
    %2806 = vmatprep.subr.mxu0 %v2680
    %2807 = vmatpush1.msra.mxu0 %v2679
    %2808 = vmatprep.subr.mxu0 %v2684
    %2809 = vmatpush1.msra.mxu0 %v2683
    %2810 = vmatprep.subr.mxu0 %v2688
    %2811 = vmatpush1.msra.mxu0 %v2687
    %2812 = vmatprep.subr.mxu0 %v2692
    %2813 = vmatpush1.msra.mxu0 %v2691
    %2814 = vmatprep.subr.mxu0 %v2696
    %2815 = vmatpush1.msra.mxu0 %v2695
    %2816 = vmatprep.subr.mxu0 %v2700
    %2817 = vmatpush1.msra.mxu0 %v2699
    %2818 = vmatprep.subr.mxu0 %v2704
    %2819 = vmatpush1.msra.mxu0 %v2703
    %2820 = vmatprep.subr.mxu0 %v2708
    %2821 = vmatpush1.msra.mxu0 %v2707
    %2822 = vmatprep.subr.mxu0 %v2712
    %2823 = vmatpush1.msra.mxu0 %v2711
    %2824 = vmatprep.subr.mxu0 %v2716
    %2825 = vmatpush1.msra.mxu0 %v2715
    %2826 = vmatprep.subr.mxu0 %v2720
    %2827 = vmatpush1.msra.mxu0 %v2719
    %2828 = vmatprep.subr.mxu0 %v2724
    %2829 = vmatpush1.msra.mxu0 %v2723
    %2830 = vmatprep.subr.mxu0 %v2728
    %2831 = vmatpush1.msra.mxu0 %v2727
    %2832 = vmatprep.subr.mxu0 0.0
    %2833 = vmatpush1.msra.mxu0 0.0
    %2834 = vmatprep.subr.mxu0 0.0
    %2835 = vmatpush1.msra.mxu0 0.0
    %2836 = vmatprep.subr.mxu0 0.0
    %2837 = vmatpush1.msra.mxu0 0.0
    %2838 = vmatprep.subr.mxu0 0.0
    %2839 = vmatpush1.msra.mxu0 0.0
    %2840 = vmatprep.subr.mxu0 0.0
    %2841 = vmatpush1.msra.mxu0 0.0
    %2842 = vmatprep.subr.mxu0 0.0
    %2843 = vmatpush1.msra.mxu0 0.0
    %2844 = vmatprep.subr.mxu0 0.0
    %2845 = vmatpush1.msra.mxu0 0.0
    %2846 = vmatprep.subr.mxu0 0.0
    %2847 = vmatpush1.msra.mxu0 0.0
    %2848 = vmatprep.subr.mxu0 0.0
    %2849 = vmatpush1.msra.mxu0 0.0
    %2850 = vmatprep.subr.mxu0 0.0
    %2851 = vmatpush1.msra.mxu0 0.0
    %2852 = vmatprep.subr.mxu0 0.0
    %2853 = vmatpush1.msra.mxu0 0.0
    %2854 = vmatprep.subr.mxu0 0.0
    %2855 = vmatpush1.msra.mxu0 0.0
    %2856 = vmatprep.subr.mxu0 0.0
    %2857 = vmatpush1.msra.mxu0 0.0
    %2858 = vmatprep.subr.mxu0 0.0
    %2859 = vmatpush1.msra.mxu0 0.0
    %2860 = vmatprep.subr.mxu0 0.0
    %2861 = vmatpush1.msra.mxu0 0.0
    %2862 = vmatprep.subr.mxu0 0.0
    %2863 = vmatpush1.msra.mxu0 0.0
    %2864 = vmatprep.mubr.f32.mxu0 0.0
    %2865 = vmatmul.mubr.f32.gmra.mrb[0].mxu0 0.0
    %v2866 = vpop.f32.mrb[0].mxu0
    %v2867 = vadd.f32 0.0, %v2866
    %v2868 = vpop.f32.mrb[0].mxu0
    %v2869 = vadd.f32 0.0, %v2868
    %2870 = vdwg.mxu0
    %v2871 = vadd.f32 %v2661, %v2796
    %v2872 = vadd.f32 %v2662, %v2798
    %v2873 = vadd.f32 %v2663, %v2867
    %v2874 = vadd.f32 %v2664, %v2869
    %v2875 = vxor.u32 %v2871, 2147483648
    %v2876 = vmul.f32 %v2875, 1.442695
    %v2877 = vpow.pop %v2876
    %v2878 = vadd.f32 %v2877, 1.0
    %v2879 = vrcp.pop %v2878
    %v2880 = vmul.f32 1.0, %v2879
    %v2881 = vxor.u32 %v2872, 2147483648
    %v2882 = vmul.f32 %v2881, 1.442695
    %v2883 = vpow.pop %v2882
    %v2884 = vadd.f32 %v2883, 1.0
    %v2885 = vrcp.pop %v2884
    %v2886 = vmul.f32 1.0, %v2885
    %v2887 = vtanh.pop %v2873
    %v2888 = vxor.u32 %v2874, 2147483648
    %v2889 = vmul.f32 %v2888, 1.442695
    %v2890 = vpow.pop %v2889
    %v2891 = vadd.f32 %v2890, 1.0
    %v2892 = vrcp.pop %v2891
    %v2893 = vmul.f32 1.0, %v2892
    %v2894 = vmul.f32 %v2886, 0.0
    %v2895 = vmul.f32 %v2880, %v2887
    %v2896 = vadd.f32 %v2894, %v2895
    %v2897 = vtanh.pop %v2896
    %v2898 = vmul.f32 %v2893, %v2897
    %2899 = vst [vmem:[#allocation3] sm:$0xff] %v2898
    %v2900 = vld [vmem:[#allocation2 + $0x20] sm:$0xff]
    %v2901 = vld [vmem:[#allocation2 + $0x28] sm:$0xff]
    %v2902 = vld [vmem:[#allocation2 + $0x30] sm:$0xff]
    %v2903 = vld [vmem:[#allocation2 + $0x38] sm:$0xff]
    %v2904 = vld [vmem:[#allocation8] sm:$0xff]
    %v2905 = vld [vmem:[#allocation8 + $0x8] sm:$0xff]
    %v2906 = vld [vmem:[#allocation8 + $0x10] sm:$0xff]
    %v2907 = vld [vmem:[#allocation8 + $0x18] sm:$0xff]
    %v2908 = vld [vmem:[#allocation8 + $0x20] sm:$0xff]
    %v2909 = vld [vmem:[#allocation8 + $0x28] sm:$0xff]
    %v2910 = vld [vmem:[#allocation8 + $0x30] sm:$0xff]
    %v2911 = vld [vmem:[#allocation8 + $0x38] sm:$0xff]
    %v2912 = vld [vmem:[#allocation8 + $0x40] sm:$0xff]
    %v2913 = vld [vmem:[#allocation8 + $0x48] sm:$0xff]
    %v2914 = vld [vmem:[#allocation8 + $0x50] sm:$0xff]
    %v2915 = vld [vmem:[#allocation8 + $0x58] sm:$0xff]
    %v2916 = vld [vmem:[#allocation8 + $0x60] sm:$0xff]
    %v2917 = vld [vmem:[#allocation8 + $0x68] sm:$0xff]
    %v2918 = vld [vmem:[#allocation8 + $0x70] sm:$0xff]
    %v2919 = vld [vmem:[#allocation8 + $0x78] sm:$0xff]
    %v2920 = vld [vmem:[#allocation8 + $0x80] sm:$0xff]
    %v2921 = vld [vmem:[#allocation8 + $0x88] sm:$0xff]
    %v2922 = vld [vmem:[#allocation8 + $0x90] sm:$0xff]
    %v2923 = vld [vmem:[#allocation8 + $0x98] sm:$0xff]
    %v2924 = vld [vmem:[#allocation8 + $0xa0] sm:$0xff]
    %v2925 = vld [vmem:[#allocation8 + $0xa8] sm:$0xff]
    %v2926 = vld [vmem:[#allocation8 + $0xb0] sm:$0xff]
    %v2927 = vld [vmem:[#allocation8 + $0xb8] sm:$0xff]
    %v2928 = vld [vmem:[#allocation8 + $0xc0] sm:$0xff]
    %v2929 = vld [vmem:[#allocation8 + $0xc8] sm:$0xff]
    %v2930 = vld [vmem:[#allocation8 + $0xd0] sm:$0xff]
    %v2931 = vld [vmem:[#allocation8 + $0xd8] sm:$0xff]
    %v2932 = vld [vmem:[#allocation8 + $0xe0] sm:$0xff]
    %v2933 = vld [vmem:[#allocation8 + $0xe8] sm:$0xff]
    %v2934 = vld [vmem:[#allocation8 + $0xf0] sm:$0xff]
    %v2935 = vld [vmem:[#allocation8 + $0xf8] sm:$0xff]
    %v2936 = vld [vmem:[#allocation8 + $0x100] sm:$0xff]
    %v2937 = vld [vmem:[#allocation8 + $0x108] sm:$0xff]
    %v2938 = vld [vmem:[#allocation8 + $0x110] sm:$0xff]
    %v2939 = vld [vmem:[#allocation8 + $0x118] sm:$0xff]
    %v2940 = vld [vmem:[#allocation8 + $0x120] sm:$0xff]
    %v2941 = vld [vmem:[#allocation8 + $0x128] sm:$0xff]
    %v2942 = vld [vmem:[#allocation8 + $0x130] sm:$0xff]
    %v2943 = vld [vmem:[#allocation8 + $0x138] sm:$0xff]
    %v2944 = vld [vmem:[#allocation8 + $0x140] sm:$0xff]
    %v2945 = vld [vmem:[#allocation8 + $0x148] sm:$0xff]
    %v2946 = vld [vmem:[#allocation8 + $0x150] sm:$0xff]
    %v2947 = vld [vmem:[#allocation8 + $0x158] sm:$0xff]
    %v2948 = vld [vmem:[#allocation8 + $0x160] sm:$0xff]
    %v2949 = vld [vmem:[#allocation8 + $0x168] sm:$0xff]
    %v2950 = vld [vmem:[#allocation8 + $0x170] sm:$0xff]
    %v2951 = vld [vmem:[#allocation8 + $0x178] sm:$0xff]
    %v2952 = vld [vmem:[#allocation8 + $0x180] sm:$0xff]
    %v2953 = vld [vmem:[#allocation8 + $0x188] sm:$0xff]
    %v2954 = vld [vmem:[#allocation8 + $0x190] sm:$0xff]
    %v2955 = vld [vmem:[#allocation8 + $0x198] sm:$0xff]
    %v2956 = vld [vmem:[#allocation8 + $0x1a0] sm:$0xff]
    %v2957 = vld [vmem:[#allocation8 + $0x1a8] sm:$0xff]
    %v2958 = vld [vmem:[#allocation8 + $0x1b0] sm:$0xff]
    %v2959 = vld [vmem:[#allocation8 + $0x1b8] sm:$0xff]
    %v2960 = vld [vmem:[#allocation8 + $0x1c0] sm:$0xff]
    %v2961 = vld [vmem:[#allocation8 + $0x1c8] sm:$0xff]
    %v2962 = vld [vmem:[#allocation8 + $0x1d0] sm:$0xff]
    %v2963 = vld [vmem:[#allocation8 + $0x1d8] sm:$0xff]
    %v2964 = vld [vmem:[#allocation8 + $0x1e0] sm:$0xff]
    %v2965 = vld [vmem:[#allocation8 + $0x1e8] sm:$0xff]
    %v2966 = vld [vmem:[#allocation8 + $0x1f0] sm:$0xff]
    %v2967 = vld [vmem:[#allocation8 + $0x1f8] sm:$0xff]
    %2968 = vmatprep.subr.mxu0 %v2905
    %2969 = vmatpush1.msra.mxu0 %v2904
    %2970 = vmatprep.subr.mxu0 %v2909
    %2971 = vmatpush1.msra.mxu0 %v2908
    %2972 = vmatprep.subr.mxu0 %v2913
    %2973 = vmatpush1.msra.mxu0 %v2912
    %2974 = vmatprep.subr.mxu0 %v2917
    %2975 = vmatpush1.msra.mxu0 %v2916
    %2976 = vmatprep.subr.mxu0 %v2921
    %2977 = vmatpush1.msra.mxu0 %v2920
    %2978 = vmatprep.subr.mxu0 %v2925
    %2979 = vmatpush1.msra.mxu0 %v2924
    %2980 = vmatprep.subr.mxu0 %v2929
    %2981 = vmatpush1.msra.mxu0 %v2928
    %2982 = vmatprep.subr.mxu0 %v2933
    %2983 = vmatpush1.msra.mxu0 %v2932
    %2984 = vmatprep.subr.mxu0 %v2937
    %2985 = vmatpush1.msra.mxu0 %v2936
    %2986 = vmatprep.subr.mxu0 %v2941
    %2987 = vmatpush1.msra.mxu0 %v2940
    %2988 = vmatprep.subr.mxu0 %v2945
    %2989 = vmatpush1.msra.mxu0 %v2944
    %2990 = vmatprep.subr.mxu0 %v2949
    %2991 = vmatpush1.msra.mxu0 %v2948
    %2992 = vmatprep.subr.mxu0 %v2953
    %2993 = vmatpush1.msra.mxu0 %v2952
    %2994 = vmatprep.subr.mxu0 %v2957
    %2995 = vmatpush1.msra.mxu0 %v2956
    %2996 = vmatprep.subr.mxu0 %v2961
    %2997 = vmatpush1.msra.mxu0 %v2960
    %2998 = vmatprep.subr.mxu0 %v2965
    %2999 = vmatpush1.msra.mxu0 %v2964
    %3000 = vmatprep.subr.mxu0 0.0
    %3001 = vmatpush1.msra.mxu0 0.0
    %3002 = vmatprep.subr.mxu0 0.0
    %3003 = vmatpush1.msra.mxu0 0.0
    %3004 = vmatprep.subr.mxu0 0.0
    %3005 = vmatpush1.msra.mxu0 0.0
    %3006 = vmatprep.subr.mxu0 0.0
    %3007 = vmatpush1.msra.mxu0 0.0
    %3008 = vmatprep.subr.mxu0 0.0
    %3009 = vmatpush1.msra.mxu0 0.0
    %3010 = vmatprep.subr.mxu0 0.0
    %3011 = vmatpush1.msra.mxu0 0.0
    %3012 = vmatprep.subr.mxu0 0.0
    %3013 = vmatpush1.msra.mxu0 0.0
    %3014 = vmatprep.subr.mxu0 0.0
    %3015 = vmatpush1.msra.mxu0 0.0
    %3016 = vmatprep.subr.mxu0 0.0
    %3017 = vmatpush1.msra.mxu0 0.0
    %3018 = vmatprep.subr.mxu0 0.0
    %3019 = vmatpush1.msra.mxu0 0.0
    %3020 = vmatprep.subr.mxu0 0.0
    %3021 = vmatpush1.msra.mxu0 0.0
    %3022 = vmatprep.subr.mxu0 0.0
    %3023 = vmatpush1.msra.mxu0 0.0
    %3024 = vmatprep.subr.mxu0 0.0
    %3025 = vmatpush1.msra.mxu0 0.0
    %3026 = vmatprep.subr.mxu0 0.0
    %3027 = vmatpush1.msra.mxu0 0.0
    %3028 = vmatprep.subr.mxu0 0.0
    %3029 = vmatpush1.msra.mxu0 0.0
    %3030 = vmatprep.subr.mxu0 0.0
    %3031 = vmatpush1.msra.mxu0 0.0
    %3032 = vmatprep.mubr.f32.mxu0 0.0
    %3033 = vmatmul.mubr.f32.gmra.mrb[0].mxu0 %v2898
    %v3034 = vpop.f32.mrb[0].mxu0
    %v3035 = vadd.f32 0.0, %v3034
    %v3036 = vpop.f32.mrb[0].mxu0
    %v3037 = vadd.f32 0.0, %v3036
    %3038 = vdwg.mxu0
    %3039 = vmatprep.subr.mxu0 %v2907
    %3040 = vmatpush1.msra.mxu0 %v2906
    %3041 = vmatprep.subr.mxu0 %v2911
    %3042 = vmatpush1.msra.mxu0 %v2910
    %3043 = vmatprep.subr.mxu0 %v2915
    %3044 = vmatpush1.msra.mxu0 %v2914
    %3045 = vmatprep.subr.mxu0 %v2919
    %3046 = vmatpush1.msra.mxu0 %v2918
    %3047 = vmatprep.subr.mxu0 %v2923
    %3048 = vmatpush1.msra.mxu0 %v2922
    %3049 = vmatprep.subr.mxu0 %v2927
    %3050 = vmatpush1.msra.mxu0 %v2926
    %3051 = vmatprep.subr.mxu0 %v2931
    %3052 = vmatpush1.msra.mxu0 %v2930
    %3053 = vmatprep.subr.mxu0 %v2935
    %3054 = vmatpush1.msra.mxu0 %v2934
    %3055 = vmatprep.subr.mxu0 %v2939
    %3056 = vmatpush1.msra.mxu0 %v2938
    %3057 = vmatprep.subr.mxu0 %v2943
    %3058 = vmatpush1.msra.mxu0 %v2942
    %3059 = vmatprep.subr.mxu0 %v2947
    %3060 = vmatpush1.msra.mxu0 %v2946
    %3061 = vmatprep.subr.mxu0 %v2951
    %3062 = vmatpush1.msra.mxu0 %v2950
    %3063 = vmatprep.subr.mxu0 %v2955
    %3064 = vmatpush1.msra.mxu0 %v2954
    %3065 = vmatprep.subr.mxu0 %v2959
    %3066 = vmatpush1.msra.mxu0 %v2958
    %3067 = vmatprep.subr.mxu0 %v2963
    %3068 = vmatpush1.msra.mxu0 %v2962
    %3069 = vmatprep.subr.mxu0 %v2967
    %3070 = vmatpush1.msra.mxu0 %v2966
    %3071 = vmatprep.subr.mxu0 0.0
    %3072 = vmatpush1.msra.mxu0 0.0
    %3073 = vmatprep.subr.mxu0 0.0
    %3074 = vmatpush1.msra.mxu0 0.0
    %3075 = vmatprep.subr.mxu0 0.0
    %3076 = vmatpush1.msra.mxu0 0.0
    %3077 = vmatprep.subr.mxu0 0.0
    %3078 = vmatpush1.msra.mxu0 0.0
    %3079 = vmatprep.subr.mxu0 0.0
    %3080 = vmatpush1.msra.mxu0 0.0
    %3081 = vmatprep.subr.mxu0 0.0
    %3082 = vmatpush1.msra.mxu0 0.0
    %3083 = vmatprep.subr.mxu0 0.0
    %3084 = vmatpush1.msra.mxu0 0.0
    %3085 = vmatprep.subr.mxu0 0.0
    %3086 = vmatpush1.msra.mxu0 0.0
    %3087 = vmatprep.subr.mxu0 0.0
    %3088 = vmatpush1.msra.mxu0 0.0
    %3089 = vmatprep.subr.mxu0 0.0
    %3090 = vmatpush1.msra.mxu0 0.0
    %3091 = vmatprep.subr.mxu0 0.0
    %3092 = vmatpush1.msra.mxu0 0.0
    %3093 = vmatprep.subr.mxu0 0.0
    %3094 = vmatpush1.msra.mxu0 0.0
    %3095 = vmatprep.subr.mxu0 0.0
    %3096 = vmatpush1.msra.mxu0 0.0
    %3097 = vmatprep.subr.mxu0 0.0
    %3098 = vmatpush1.msra.mxu0 0.0
    %3099 = vmatprep.subr.mxu0 0.0
    %3100 = vmatpush1.msra.mxu0 0.0
    %3101 = vmatprep.subr.mxu0 0.0
    %3102 = vmatpush1.msra.mxu0 0.0
    %3103 = vmatprep.mubr.f32.mxu0 0.0
    %3104 = vmatmul.mubr.f32.gmra.mrb[0].mxu0 %v2898
    %v3105 = vpop.f32.mrb[0].mxu0
    %v3106 = vadd.f32 0.0, %v3105
    %v3107 = vpop.f32.mrb[0].mxu0
    %v3108 = vadd.f32 0.0, %v3107
    %3109 = vdwg.mxu0
    %v3110 = vadd.f32 %v2900, %v3035
    %v3111 = vadd.f32 %v2901, %v3037
    %v3112 = vadd.f32 %v2902, %v3106
    %v3113 = vadd.f32 %v2903, %v3108
    %v3114 = vxor.u32 %v3110, 2147483648
    %v3115 = vmul.f32 %v3114, 1.442695
    %v3116 = vpow.pop %v3115
    %v3117 = vadd.f32 %v3116, 1.0
    %v3118 = vrcp.pop %v3117
    %v3119 = vmul.f32 1.0, %v3118
    %v3120 = vxor.u32 %v3111, 2147483648
    %v3121 = vmul.f32 %v3120, 1.442695
    %v3122 = vpow.pop %v3121
    %v3123 = vadd.f32 %v3122, 1.0
    %v3124 = vrcp.pop %v3123
    %v3125 = vmul.f32 1.0, %v3124
    %v3126 = vtanh.pop %v3112
    %v3127 = vxor.u32 %v3113, 2147483648
    %v3128 = vmul.f32 %v3127, 1.442695
    %v3129 = vpow.pop %v3128
    %v3130 = vadd.f32 %v3129, 1.0
    %v3131 = vrcp.pop %v3130
    %v3132 = vmul.f32 1.0, %v3131
    %v3133 = vmul.f32 %v3125, %v2896
    %v3134 = vmul.f32 %v3119, %v3126
    %v3135 = vadd.f32 %v3133, %v3134
    %v3136 = vtanh.pop %v3135
    %v3137 = vmul.f32 %v3132, %v3136
    %3138 = vst [vmem:[#allocation3 + $0x8] sm:$0xff] %v3137
    %v3139 = vld [vmem:[#allocation2 + $0x40] sm:$0xff]
    %v3140 = vld [vmem:[#allocation2 + $0x48] sm:$0xff]
    %v3141 = vld [vmem:[#allocation2 + $0x50] sm:$0xff]
    %v3142 = vld [vmem:[#allocation2 + $0x58] sm:$0xff]
    %v3143 = vld [vmem:[#allocation8] sm:$0xff]
    %v3144 = vld [vmem:[#allocation8 + $0x8] sm:$0xff]
    %v3145 = vld [vmem:[#allocation8 + $0x10] sm:$0xff]
    %v3146 = vld [vmem:[#allocation8 + $0x18] sm:$0xff]
    %v3147 = vld [vmem:[#allocation8 + $0x20] sm:$0xff]
    %v3148 = vld [vmem:[#allocation8 + $0x28] sm:$0xff]
    %v3149 = vld [vmem:[#allocation8 + $0x30] sm:$0xff]
    %v3150 = vld [vmem:[#allocation8 + $0x38] sm:$0xff]
    %v3151 = vld [vmem:[#allocation8 + $0x40] sm:$0xff]
    %v3152 = vld [vmem:[#allocation8 + $0x48] sm:$0xff]
    %v3153 = vld [vmem:[#allocation8 + $0x50] sm:$0xff]
    %v3154 = vld [vmem:[#allocation8 + $0x58] sm:$0xff]
    %v3155 = vld [vmem:[#allocation8 + $0x60] sm:$0xff]
    %v3156 = vld [vmem:[#allocation8 + $0x68] sm:$0xff]
    %v3157 = vld [vmem:[#allocation8 + $0x70] sm:$0xff]
    %v3158 = vld [vmem:[#allocation8 + $0x78] sm:$0xff]
    %v3159 = vld [vmem:[#allocation8 + $0x80] sm:$0xff]
    %v3160 = vld [vmem:[#allocation8 + $0x88] sm:$0xff]
    %v3161 = vld [vmem:[#allocation8 + $0x90] sm:$0xff]
    %v3162 = vld [vmem:[#allocation8 + $0x98] sm:$0xff]
    %v3163 = vld [vmem:[#allocation8 + $0xa0] sm:$0xff]
    %v3164 = vld [vmem:[#allocation8 + $0xa8] sm:$0xff]
    %v3165 = vld [vmem:[#allocation8 + $0xb0] sm:$0xff]
    %v3166 = vld [vmem:[#allocation8 + $0xb8] sm:$0xff]
    %v3167 = vld [vmem:[#allocation8 + $0xc0] sm:$0xff]
    %v3168 = vld [vmem:[#allocation8 + $0xc8] sm:$0xff]
    %v3169 = vld [vmem:[#allocation8 + $0xd0] sm:$0xff]
    %v3170 = vld [vmem:[#allocation8 + $0xd8] sm:$0xff]
    %v3171 = vld [vmem:[#allocation8 + $0xe0] sm:$0xff]
    %v3172 = vld [vmem:[#allocation8 + $0xe8] sm:$0xff]
    %v3173 = vld [vmem:[#allocation8 + $0xf0] sm:$0xff]
    %v3174 = vld [vmem:[#allocation8 + $0xf8] sm:$0xff]
    %v3175 = vld [vmem:[#allocation8 + $0x100] sm:$0xff]
    %v3176 = vld [vmem:[#allocation8 + $0x108] sm:$0xff]
    %v3177 = vld [vmem:[#allocation8 + $0x110] sm:$0xff]
    %v3178 = vld [vmem:[#allocation8 + $0x118] sm:$0xff]
    %v3179 = vld [vmem:[#allocation8 + $0x120] sm:$0xff]
    %v3180 = vld [vmem:[#allocation8 + $0x128] sm:$0xff]
    %v3181 = vld [vmem:[#allocation8 + $0x130] sm:$0xff]
    %v3182 = vld [vmem:[#allocation8 + $0x138] sm:$0xff]
    %v3183 = vld [vmem:[#allocation8 + $0x140] sm:$0xff]
    %v3184 = vld [vmem:[#allocation8 + $0x148] sm:$0xff]
    %v3185 = vld [vmem:[#allocation8 + $0x150] sm:$0xff]
    %v3186 = vld [vmem:[#allocation8 + $0x158] sm:$0xff]
    %v3187 = vld [vmem:[#allocation8 + $0x160] sm:$0xff]
    %v3188 = vld [vmem:[#allocation8 + $0x168] sm:$0xff]
    %v3189 = vld [vmem:[#allocation8 + $0x170] sm:$0xff]
    %v3190 = vld [vmem:[#allocation8 + $0x178] sm:$0xff]
    %v3191 = vld [vmem:[#allocation8 + $0x180] sm:$0xff]
    %v3192 = vld [vmem:[#allocation8 + $0x188] sm:$0xff]
    %v3193 = vld [vmem:[#allocation8 + $0x190] sm:$0xff]
    %v3194 = vld [vmem:[#allocation8 + $0x198] sm:$0xff]
    %v3195 = vld [vmem:[#allocation8 + $0x1a0] sm:$0xff]
    %v3196 = vld [vmem:[#allocation8 + $0x1a8] sm:$0xff]
    %v3197 = vld [vmem:[#allocation8 + $0x1b0] sm:$0xff]
    %v3198 = vld [vmem:[#allocation8 + $0x1b8] sm:$0xff]
    %v3199 = vld [vmem:[#allocation8 + $0x1c0] sm:$0xff]
    %v3200 = vld [vmem:[#allocation8 + $0x1c8] sm:$0xff]
    %v3201 = vld [vmem:[#allocation8 + $0x1d0] sm:$0xff]
    %v3202 = vld [vmem:[#allocation8 + $0x1d8] sm:$0xff]
    %v3203 = vld [vmem:[#allocation8 + $0x1e0] sm:$0xff]
    %v3204 = vld [vmem:[#allocation8 + $0x1e8] sm:$0xff]
    %v3205 = vld [vmem:[#allocation8 + $0x1f0] sm:$0xff]
    %v3206 = vld [vmem:[#allocation8 + $0x1f8] sm:$0xff]
    %3207 = vmatprep.subr.mxu0 %v3144
    %3208 = vmatpush1.msra.mxu0 %v3143
    %3209 = vmatprep.subr.mxu0 %v3148
    %3210 = vmatpush1.msra.mxu0 %v3147
    %3211 = vmatprep.subr.mxu0 %v3152
    %3212 = vmatpush1.msra.mxu0 %v3151
    %3213 = vmatprep.subr.mxu0 %v3156
    %3214 = vmatpush1.msra.mxu0 %v3155
    %3215 = vmatprep.subr.mxu0 %v3160
    %3216 = vmatpush1.msra.mxu0 %v3159
    %3217 = vmatprep.subr.mxu0 %v3164
    %3218 = vmatpush1.msra.mxu0 %v3163
    %3219 = vmatprep.subr.mxu0 %v3168
    %3220 = vmatpush1.msra.mxu0 %v3167
    %3221 = vmatprep.subr.mxu0 %v3172
    %3222 = vmatpush1.msra.mxu0 %v3171
    %3223 = vmatprep.subr.mxu0 %v3176
    %3224 = vmatpush1.msra.mxu0 %v3175
    %3225 = vmatprep.subr.mxu0 %v3180
    %3226 = vmatpush1.msra.mxu0 %v3179
    %3227 = vmatprep.subr.mxu0 %v3184
    %3228 = vmatpush1.msra.mxu0 %v3183
    %3229 = vmatprep.subr.mxu0 %v3188
    %3230 = vmatpush1.msra.mxu0 %v3187
    %3231 = vmatprep.subr.mxu0 %v3192
    %3232 = vmatpush1.msra.mxu0 %v3191
    %3233 = vmatprep.subr.mxu0 %v3196
    %3234 = vmatpush1.msra.mxu0 %v3195
    %3235 = vmatprep.subr.mxu0 %v3200
    %3236 = vmatpush1.msra.mxu0 %v3199
    %3237 = vmatprep.subr.mxu0 %v3204
    %3238 = vmatpush1.msra.mxu0 %v3203
    %3239 = vmatprep.subr.mxu0 0.0
    %3240 = vmatpush1.msra.mxu0 0.0
    %3241 = vmatprep.subr.mxu0 0.0
    %3242 = vmatpush1.msra.mxu0 0.0
    %3243 = vmatprep.subr.mxu0 0.0
    %3244 = vmatpush1.msra.mxu0 0.0
    %3245 = vmatprep.subr.mxu0 0.0
    %3246 = vmatpush1.msra.mxu0 0.0
    %3247 = vmatprep.subr.mxu0 0.0
    %3248 = vmatpush1.msra.mxu0 0.0
    %3249 = vmatprep.subr.mxu0 0.0
    %3250 = vmatpush1.msra.mxu0 0.0
    %3251 = vmatprep.subr.mxu0 0.0
    %3252 = vmatpush1.msra.mxu0 0.0
    %3253 = vmatprep.subr.mxu0 0.0
    %3254 = vmatpush1.msra.mxu0 0.0
    %3255 = vmatprep.subr.mxu0 0.0
    %3256 = vmatpush1.msra.mxu0 0.0
    %3257 = vmatprep.subr.mxu0 0.0
    %3258 = vmatpush1.msra.mxu0 0.0
    %3259 = vmatprep.subr.mxu0 0.0
    %3260 = vmatpush1.msra.mxu0 0.0
    %3261 = vmatprep.subr.mxu0 0.0
    %3262 = vmatpush1.msra.mxu0 0.0
    %3263 = vmatprep.subr.mxu0 0.0
    %3264 = vmatpush1.msra.mxu0 0.0
    %3265 = vmatprep.subr.mxu0 0.0
    %3266 = vmatpush1.msra.mxu0 0.0
    %3267 = vmatprep.subr.mxu0 0.0
    %3268 = vmatpush1.msra.mxu0 0.0
    %3269 = vmatprep.subr.mxu0 0.0
    %3270 = vmatpush1.msra.mxu0 0.0
    %3271 = vmatprep.mubr.f32.mxu0 0.0
    %3272 = vmatmul.mubr.f32.gmra.mrb[0].mxu0 %v3137
    %v3273 = vpop.f32.mrb[0].mxu0
    %v3274 = vadd.f32 0.0, %v3273
    %v3275 = vpop.f32.mrb[0].mxu0
    %v3276 = vadd.f32 0.0, %v3275
    %3277 = vdwg.mxu0
    %3278 = vmatprep.subr.mxu0 %v3146
    %3279 = vmatpush1.msra.mxu0 %v3145
    %3280 = vmatprep.subr.mxu0 %v3150
    %3281 = vmatpush1.msra.mxu0 %v3149
    %3282 = vmatprep.subr.mxu0 %v3154
    %3283 = vmatpush1.msra.mxu0 %v3153
    %3284 = vmatprep.subr.mxu0 %v3158
    %3285 = vmatpush1.msra.mxu0 %v3157
    %3286 = vmatprep.subr.mxu0 %v3162
    %3287 = vmatpush1.msra.mxu0 %v3161
    %3288 = vmatprep.subr.mxu0 %v3166
    %3289 = vmatpush1.msra.mxu0 %v3165
    %3290 = vmatprep.subr.mxu0 %v3170
    %3291 = vmatpush1.msra.mxu0 %v3169
    %3292 = vmatprep.subr.mxu0 %v3174
    %3293 = vmatpush1.msra.mxu0 %v3173
    %3294 = vmatprep.subr.mxu0 %v3178
    %3295 = vmatpush1.msra.mxu0 %v3177
    %3296 = vmatprep.subr.mxu0 %v3182
    %3297 = vmatpush1.msra.mxu0 %v3181
    %3298 = vmatprep.subr.mxu0 %v3186
    %3299 = vmatpush1.msra.mxu0 %v3185
    %3300 = vmatprep.subr.mxu0 %v3190
    %3301 = vmatpush1.msra.mxu0 %v3189
    %3302 = vmatprep.subr.mxu0 %v3194
    %3303 = vmatpush1.msra.mxu0 %v3193
    %3304 = vmatprep.subr.mxu0 %v3198
    %3305 = vmatpush1.msra.mxu0 %v3197
    %3306 = vmatprep.subr.mxu0 %v3202
    %3307 = vmatpush1.msra.mxu0 %v3201
    %3308 = vmatprep.subr.mxu0 %v3206
    %3309 = vmatpush1.msra.mxu0 %v3205
    %3310 = vmatprep.subr.mxu0 0.0
    %3311 = vmatpush1.msra.mxu0 0.0
    %3312 = vmatprep.subr.mxu0 0.0
    %3313 = vmatpush1.msra.mxu0 0.0
    %3314 = vmatprep.subr.mxu0 0.0
    %3315 = vmatpush1.msra.mxu0 0.0
    %3316 = vmatprep.subr.mxu0 0.0
    %3317 = vmatpush1.msra.mxu0 0.0
    %3318 = vmatprep.subr.mxu0 0.0
    %3319 = vmatpush1.msra.mxu0 0.0
    %3320 = vmatprep.subr.mxu0 0.0
    %3321 = vmatpush1.msra.mxu0 0.0
    %3322 = vmatprep.subr.mxu0 0.0
    %3323 = vmatpush1.msra.mxu0 0.0
    %3324 = vmatprep.subr.mxu0 0.0
    %3325 = vmatpush1.msra.mxu0 0.0
    %3326 = vmatprep.subr.mxu0 0.0
    %3327 = vmatpush1.msra.mxu0 0.0
    %3328 = vmatprep.subr.mxu0 0.0
    %3329 = vmatpush1.msra.mxu0 0.0
    %3330 = vmatprep.subr.mxu0 0.0
    %3331 = vmatpush1.msra.mxu0 0.0
    %3332 = vmatprep.subr.mxu0 0.0
    %3333 = vmatpush1.msra.mxu0 0.0
    %3334 = vmatprep.subr.mxu0 0.0
    %3335 = vmatpush1.msra.mxu0 0.0
    %3336 = vmatprep.subr.mxu0 0.0
    %3337 = vmatpush1.msra.mxu0 0.0
    %3338 = vmatprep.subr.mxu0 0.0
    %3339 = vmatpush1.msra.mxu0 0.0
    %3340 = vmatprep.subr.mxu0 0.0
    %3341 = vmatpush1.msra.mxu0 0.0
    %3342 = vmatprep.mubr.f32.mxu0 0.0
    %3343 = vmatmul.mubr.f32.gmra.mrb[0].mxu0 %v3137
    %v3344 = vpop.f32.mrb[0].mxu0
    %v3345 = vadd.f32 0.0, %v3344
    %v3346 = vpop.f32.mrb[0].mxu0
    %v3347 = vadd.f32 0.0, %v3346
    %3348 = vdwg.mxu0
    %v3349 = vadd.f32 %v3139, %v3274
    %v3350 = vadd.f32 %v3140, %v3276
    %v3351 = vadd.f32 %v3141, %v3345
    %v3352 = vadd.f32 %v3142, %v3347
    %v3353 = vxor.u32 %v3349, 2147483648
    %v3354 = vmul.f32 %v3353, 1.442695
    %v3355 = vpow.pop %v3354
    %v3356 = vadd.f32 %v3355, 1.0
    %v3357 = vrcp.pop %v3356
    %v3358 = vmul.f32 1.0, %v3357
    %v3359 = vxor.u32 %v3350, 2147483648
    %v3360 = vmul.f32 %v3359, 1.442695
    %v3361 = vpow.pop %v3360
    %v3362 = vadd.f32 %v3361, 1.0
    %v3363 = vrcp.pop %v3362
    %v3364 = vmul.f32 1.0, %v3363
    %v3365 = vtanh.pop %v3351
    %v3366 = vxor.u32 %v3352, 2147483648
    %v3367 = vmul.f32 %v3366, 1.442695
    %v3368 = vpow.pop %v3367
    %v3369 = vadd.f32 %v3368, 1.0
    %v3370 = vrcp.pop %v3369
    %v3371 = vmul.f32 1.0, %v3370
    %v3372 = vmul.f32 %v3364, %v3135
    %v3373 = vmul.f32 %v3358, %v3365
    %v3374 = vadd.f32 %v3372, %v3373
    %v3375 = vtanh.pop %v3374
    %v3376 = vmul.f32 %v3371, %v3375
    %3377 = vst [vmem:[#allocation3 + $0x10] sm:$0xff] %v3376
    %v3378 = vld [vmem:[#allocation2 + $0x60] sm:$0xff]
    %v3379 = vld [vmem:[#allocation2 + $0x68] sm:$0xff]
    %v3380 = vld [vmem:[#allocation2 + $0x70] sm:$0xff]
    %v3381 = vld [vmem:[#allocation2 + $0x78] sm:$0xff]
    %v3382 = vld [vmem:[#allocation8] sm:$0xff]
    %v3383 = vld [vmem:[#allocation8 + $0x8] sm:$0xff]
    %v3384 = vld [vmem:[#allocation8 + $0x10] sm:$0xff]
    %v3385 = vld [vmem:[#allocation8 + $0x18] sm:$0xff]
    %v3386 = vld [vmem:[#allocation8 + $0x20] sm:$0xff]
    %v3387 = vld [vmem:[#allocation8 + $0x28] sm:$0xff]
    %v3388 = vld [vmem:[#allocation8 + $0x30] sm:$0xff]
    %v3389 = vld [vmem:[#allocation8 + $0x38] sm:$0xff]
    %v3390 = vld [vmem:[#allocation8 + $0x40] sm:$0xff]
    %v3391 = vld [vmem:[#allocation8 + $0x48] sm:$0xff]
    %v3392 = vld [vmem:[#allocation8 + $0x50] sm:$0xff]
    %v3393 = vld [vmem:[#allocation8 + $0x58] sm:$0xff]
    %v3394 = vld [vmem:[#allocation8 + $0x60] sm:$0xff]
    %v3395 = vld [vmem:[#allocation8 + $0x68] sm:$0xff]
    %v3396 = vld [vmem:[#allocation8 + $0x70] sm:$0xff]
    %v3397 = vld [vmem:[#allocation8 + $0x78] sm:$0xff]
    %v3398 = vld [vmem:[#allocation8 + $0x80] sm:$0xff]
    %v3399 = vld [vmem:[#allocation8 + $0x88] sm:$0xff]
    %v3400 = vld [vmem:[#allocation8 + $0x90] sm:$0xff]
    %v3401 = vld [vmem:[#allocation8 + $0x98] sm:$0xff]
    %v3402 = vld [vmem:[#allocation8 + $0xa0] sm:$0xff]
    %v3403 = vld [vmem:[#allocation8 + $0xa8] sm:$0xff]
    %v3404 = vld [vmem:[#allocation8 + $0xb0] sm:$0xff]
    %v3405 = vld [vmem:[#allocation8 + $0xb8] sm:$0xff]
    %v3406 = vld [vmem:[#allocation8 + $0xc0] sm:$0xff]
    %v3407 = vld [vmem:[#allocation8 + $0xc8] sm:$0xff]
    %v3408 = vld [vmem:[#allocation8 + $0xd0] sm:$0xff]
    %v3409 = vld [vmem:[#allocation8 + $0xd8] sm:$0xff]
    %v3410 = vld [vmem:[#allocation8 + $0xe0] sm:$0xff]
    %v3411 = vld [vmem:[#allocation8 + $0xe8] sm:$0xff]
    %v3412 = vld [vmem:[#allocation8 + $0xf0] sm:$0xff]
    %v3413 = vld [vmem:[#allocation8 + $0xf8] sm:$0xff]
    %v3414 = vld [vmem:[#allocation8 + $0x100] sm:$0xff]
    %v3415 = vld [vmem:[#allocation8 + $0x108] sm:$0xff]
    %v3416 = vld [vmem:[#allocation8 + $0x110] sm:$0xff]
    %v3417 = vld [vmem:[#allocation8 + $0x118] sm:$0xff]
    %v3418 = vld [vmem:[#allocation8 + $0x120] sm:$0xff]
    %v3419 = vld [vmem:[#allocation8 + $0x128] sm:$0xff]
    %v3420 = vld [vmem:[#allocation8 + $0x130] sm:$0xff]
    %v3421 = vld [vmem:[#allocation8 + $0x138] sm:$0xff]
    %v3422 = vld [vmem:[#allocation8 + $0x140] sm:$0xff]
    %v3423 = vld [vmem:[#allocation8 + $0x148] sm:$0xff]
    %v3424 = vld [vmem:[#allocation8 + $0x150] sm:$0xff]
    %v3425 = vld [vmem:[#allocation8 + $0x158] sm:$0xff]
    %v3426 = vld [vmem:[#allocation8 + $0x160] sm:$0xff]
    %v3427 = vld [vmem:[#allocation8 + $0x168] sm:$0xff]
    %v3428 = vld [vmem:[#allocation8 + $0x170] sm:$0xff]
    %v3429 = vld [vmem:[#allocation8 + $0x178] sm:$0xff]
    %v3430 = vld [vmem:[#allocation8 + $0x180] sm:$0xff]
    %v3431 = vld [vmem:[#allocation8 + $0x188] sm:$0xff]
    %v3432 = vld [vmem:[#allocation8 + $0x190] sm:$0xff]
    %v3433 = vld [vmem:[#allocation8 + $0x198] sm:$0xff]
    %v3434 = vld [vmem:[#allocation8 + $0x1a0] sm:$0xff]
    %v3435 = vld [vmem:[#allocation8 + $0x1a8] sm:$0xff]
    %v3436 = vld [vmem:[#allocation8 + $0x1b0] sm:$0xff]
    %v3437 = vld [vmem:[#allocation8 + $0x1b8] sm:$0xff]
    %v3438 = vld [vmem:[#allocation8 + $0x1c0] sm:$0xff]
    %v3439 = vld [vmem:[#allocation8 + $0x1c8] sm:$0xff]
    %v3440 = vld [vmem:[#allocation8 + $0x1d0] sm:$0xff]
    %v3441 = vld [vmem:[#allocation8 + $0x1d8] sm:$0xff]
    %v3442 = vld [vmem:[#allocation8 + $0x1e0] sm:$0xff]
    %v3443 = vld [vmem:[#allocation8 + $0x1e8] sm:$0xff]
    %v3444 = vld [vmem:[#allocation8 + $0x1f0] sm:$0xff]
    %v3445 = vld [vmem:[#allocation8 + $0x1f8] sm:$0xff]
    %3446 = vmatprep.subr.mxu0 %v3383
    %3447 = vmatpush1.msra.mxu0 %v3382
    %3448 = vmatprep.subr.mxu0 %v3387
    %3449 = vmatpush1.msra.mxu0 %v3386
    %3450 = vmatprep.subr.mxu0 %v3391
    %3451 = vmatpush1.msra.mxu0 %v3390
    %3452 = vmatprep.subr.mxu0 %v3395
    %3453 = vmatpush1.msra.mxu0 %v3394
    %3454 = vmatprep.subr.mxu0 %v3399
    %3455 = vmatpush1.msra.mxu0 %v3398
    %3456 = vmatprep.subr.mxu0 %v3403
    %3457 = vmatpush1.msra.mxu0 %v3402
    %3458 = vmatprep.subr.mxu0 %v3407
    %3459 = vmatpush1.msra.mxu0 %v3406
    %3460 = vmatprep.subr.mxu0 %v3411
    %3461 = vmatpush1.msra.mxu0 %v3410
    %3462 = vmatprep.subr.mxu0 %v3415
    %3463 = vmatpush1.msra.mxu0 %v3414
    %3464 = vmatprep.subr.mxu0 %v3419
    %3465 = vmatpush1.msra.mxu0 %v3418
    %3466 = vmatprep.subr.mxu0 %v3423
    %3467 = vmatpush1.msra.mxu0 %v3422
    %3468 = vmatprep.subr.mxu0 %v3427
    %3469 = vmatpush1.msra.mxu0 %v3426
    %3470 = vmatprep.subr.mxu0 %v3431
    %3471 = vmatpush1.msra.mxu0 %v3430
    %3472 = vmatprep.subr.mxu0 %v3435
    %3473 = vmatpush1.msra.mxu0 %v3434
    %3474 = vmatprep.subr.mxu0 %v3439
    %3475 = vmatpush1.msra.mxu0 %v3438
    %3476 = vmatprep.subr.mxu0 %v3443
    %3477 = vmatpush1.msra.mxu0 %v3442
    %3478 = vmatprep.subr.mxu0 0.0
    %3479 = vmatpush1.msra.mxu0 0.0
    %3480 = vmatprep.subr.mxu0 0.0
    %3481 = vmatpush1.msra.mxu0 0.0
    %3482 = vmatprep.subr.mxu0 0.0
    %3483 = vmatpush1.msra.mxu0 0.0
    %3484 = vmatprep.subr.mxu0 0.0
    %3485 = vmatpush1.msra.mxu0 0.0
    %3486 = vmatprep.subr.mxu0 0.0
    %3487 = vmatpush1.msra.mxu0 0.0
    %3488 = vmatprep.subr.mxu0 0.0
    %3489 = vmatpush1.msra.mxu0 0.0
    %3490 = vmatprep.subr.mxu0 0.0
    %3491 = vmatpush1.msra.mxu0 0.0
    %3492 = vmatprep.subr.mxu0 0.0
    %3493 = vmatpush1.msra.mxu0 0.0
    %3494 = vmatprep.subr.mxu0 0.0
    %3495 = vmatpush1.msra.mxu0 0.0
    %3496 = vmatprep.subr.mxu0 0.0
    %3497 = vmatpush1.msra.mxu0 0.0
    %3498 = vmatprep.subr.mxu0 0.0
    %3499 = vmatpush1.msra.mxu0 0.0
    %3500 = vmatprep.subr.mxu0 0.0
    %3501 = vmatpush1.msra.mxu0 0.0
    %3502 = vmatprep.subr.mxu0 0.0
    %3503 = vmatpush1.msra.mxu0 0.0
    %3504 = vmatprep.subr.mxu0 0.0
    %3505 = vmatpush1.msra.mxu0 0.0
    %3506 = vmatprep.subr.mxu0 0.0
    %3507 = vmatpush1.msra.mxu0 0.0
    %3508 = vmatprep.subr.mxu0 0.0
    %3509 = vmatpush1.msra.mxu0 0.0
    %3510 = vmatprep.mubr.f32.mxu0 0.0
    %3511 = vmatmul.mubr.f32.gmra.mrb[0].mxu0 %v3376
    %v3512 = vpop.f32.mrb[0].mxu0
    %v3513 = vadd.f32 0.0, %v3512
    %v3514 = vpop.f32.mrb[0].mxu0
    %v3515 = vadd.f32 0.0, %v3514
    %3516 = vdwg.mxu0
    %3517 = vmatprep.subr.mxu0 %v3385
    %3518 = vmatpush1.msra.mxu0 %v3384
    %3519 = vmatprep.subr.mxu0 %v3389
    %3520 = vmatpush1.msra.mxu0 %v3388
    %3521 = vmatprep.subr.mxu0 %v3393
    %3522 = vmatpush1.msra.mxu0 %v3392
    %3523 = vmatprep.subr.mxu0 %v3397
    %3524 = vmatpush1.msra.mxu0 %v3396
    %3525 = vmatprep.subr.mxu0 %v3401
    %3526 = vmatpush1.msra.mxu0 %v3400
    %3527 = vmatprep.subr.mxu0 %v3405
    %3528 = vmatpush1.msra.mxu0 %v3404
    %3529 = vmatprep.subr.mxu0 %v3409
    %3530 = vmatpush1.msra.mxu0 %v3408
    %3531 = vmatprep.subr.mxu0 %v3413
    %3532 = vmatpush1.msra.mxu0 %v3412
    %3533 = vmatprep.subr.mxu0 %v3417
    %3534 = vmatpush1.msra.mxu0 %v3416
    %3535 = vmatprep.subr.mxu0 %v3421
    %3536 = vmatpush1.msra.mxu0 %v3420
    %3537 = vmatprep.subr.mxu0 %v3425
    %3538 = vmatpush1.msra.mxu0 %v3424
    %3539 = vmatprep.subr.mxu0 %v3429
    %3540 = vmatpush1.msra.mxu0 %v3428
    %3541 = vmatprep.subr.mxu0 %v3433
    %3542 = vmatpush1.msra.mxu0 %v3432
    %3543 = vmatprep.subr.mxu0 %v3437
    %3544 = vmatpush1.msra.mxu0 %v3436
    %3545 = vmatprep.subr.mxu0 %v3441
    %3546 = vmatpush1.msra.mxu0 %v3440
    %3547 = vmatprep.subr.mxu0 %v3445
    %3548 = vmatpush1.msra.mxu0 %v3444
    %3549 = vmatprep.subr.mxu0 0.0
    %3550 = vmatpush1.msra.mxu0 0.0
    %3551 = vmatprep.subr.mxu0 0.0
    %3552 = vmatpush1.msra.mxu0 0.0
    %3553 = vmatprep.subr.mxu0 0.0
    %3554 = vmatpush1.msra.mxu0 0.0
    %3555 = vmatprep.subr.mxu0 0.0
    %3556 = vmatpush1.msra.mxu0 0.0
    %3557 = vmatprep.subr.mxu0 0.0
    %3558 = vmatpush1.msra.mxu0 0.0
    %3559 = vmatprep.subr.mxu0 0.0
    %3560 = vmatpush1.msra.mxu0 0.0
    %3561 = vmatprep.subr.mxu0 0.0
    %3562 = vmatpush1.msra.mxu0 0.0
    %3563 = vmatprep.subr.mxu0 0.0
    %3564 = vmatpush1.msra.mxu0 0.0
    %3565 = vmatprep.subr.mxu0 0.0
    %3566 = vmatpush1.msra.mxu0 0.0
    %3567 = vmatprep.subr.mxu0 0.0
    %3568 = vmatpush1.msra.mxu0 0.0
    %3569 = vmatprep.subr.mxu0 0.0
    %3570 = vmatpush1.msra.mxu0 0.0
    %3571 = vmatprep.subr.mxu0 0.0
    %3572 = vmatpush1.msra.mxu0 0.0
    %3573 = vmatprep.subr.mxu0 0.0
    %3574 = vmatpush1.msra.mxu0 0.0
    %3575 = vmatprep.subr.mxu0 0.0
    %3576 = vmatpush1.msra.mxu0 0.0
    %3577 = vmatprep.subr.mxu0 0.0
    %3578 = vmatpush1.msra.mxu0 0.0
    %3579 = vmatprep.subr.mxu0 0.0
    %3580 = vmatpush1.msra.mxu0 0.0
    %3581 = vmatprep.mubr.f32.mxu0 0.0
    %3582 = vmatmul.mubr.f32.gmra.mrb[0].mxu0 %v3376
    %v3583 = vpop.f32.mrb[0].mxu0
    %v3584 = vadd.f32 0.0, %v3583
    %v3585 = vpop.f32.mrb[0].mxu0
    %v3586 = vadd.f32 0.0, %v3585
    %3587 = vdwg.mxu0
    %v3588 = vadd.f32 %v3378, %v3513
    %v3589 = vadd.f32 %v3379, %v3515
    %v3590 = vadd.f32 %v3380, %v3584
    %v3591 = vadd.f32 %v3381, %v3586
    %v3592 = vxor.u32 %v3588, 2147483648
    %v3593 = vmul.f32 %v3592, 1.442695
    %v3594 = vpow.pop %v3593
    %v3595 = vadd.f32 %v3594, 1.0
    %v3596 = vrcp.pop %v3595
    %v3597 = vmul.f32 1.0, %v3596
    %v3598 = vxor.u32 %v3589, 2147483648
    %v3599 = vmul.f32 %v3598, 1.442695
    %v3600 = vpow.pop %v3599
    %v3601 = vadd.f32 %v3600, 1.0
    %v3602 = vrcp.pop %v3601
    %v3603 = vmul.f32 1.0, %v3602
    %v3604 = vtanh.pop %v3590
    %v3605 = vxor.u32 %v3591, 2147483648
    %v3606 = vmul.f32 %v3605, 1.442695
    %v3607 = vpow.pop %v3606
    %v3608 = vadd.f32 %v3607, 1.0
    %v3609 = vrcp.pop %v3608
    %v3610 = vmul.f32 1.0, %v3609
    %v3611 = vmul.f32 %v3603, %v3374
    %v3612 = vmul.f32 %v3597, %v3604
    %v3613 = vadd.f32 %v3611, %v3612
    %v3614 = vtanh.pop %v3613
    %v3615 = vmul.f32 %v3610, %v3614
    %3616 = vst [vmem:[#allocation3 + $0x18] sm:$0xff] %v3615
    %v3617 = vld [vmem:[#allocation2 + $0x80] sm:$0xff]
    %v3618 = vld [vmem:[#allocation2 + $0x88] sm:$0xff]
    %v3619 = vld [vmem:[#allocation2 + $0x90] sm:$0xff]
    %v3620 = vld [vmem:[#allocation2 + $0x98] sm:$0xff]
    %v3621 = vld [vmem:[#allocation8] sm:$0xff]
    %v3622 = vld [vmem:[#allocation8 + $0x8] sm:$0xff]
    %v3623 = vld [vmem:[#allocation8 + $0x10] sm:$0xff]
    %v3624 = vld [vmem:[#allocation8 + $0x18] sm:$0xff]
    %v3625 = vld [vmem:[#allocation8 + $0x20] sm:$0xff]
    %v3626 = vld [vmem:[#allocation8 + $0x28] sm:$0xff]
    %v3627 = vld [vmem:[#allocation8 + $0x30] sm:$0xff]
    %v3628 = vld [vmem:[#allocation8 + $0x38] sm:$0xff]
    %v3629 = vld [vmem:[#allocation8 + $0x40] sm:$0xff]
    %v3630 = vld [vmem:[#allocation8 + $0x48] sm:$0xff]
    %v3631 = vld [vmem:[#allocation8 + $0x50] sm:$0xff]
    %v3632 = vld [vmem:[#allocation8 + $0x58] sm:$0xff]
    %v3633 = vld [vmem:[#allocation8 + $0x60] sm:$0xff]
    %v3634 = vld [vmem:[#allocation8 + $0x68] sm:$0xff]
    %v3635 = vld [vmem:[#allocation8 + $0x70] sm:$0xff]
    %v3636 = vld [vmem:[#allocation8 + $0x78] sm:$0xff]
    %v3637 = vld [vmem:[#allocation8 + $0x80] sm:$0xff]
    %v3638 = vld [vmem:[#allocation8 + $0x88] sm:$0xff]
    %v3639 = vld [vmem:[#allocation8 + $0x90] sm:$0xff]
    %v3640 = vld [vmem:[#allocation8 + $0x98] sm:$0xff]
    %v3641 = vld [vmem:[#allocation8 + $0xa0] sm:$0xff]
    %v3642 = vld [vmem:[#allocation8 + $0xa8] sm:$0xff]
    %v3643 = vld [vmem:[#allocation8 + $0xb0] sm:$0xff]
    %v3644 = vld [vmem:[#allocation8 + $0xb8] sm:$0xff]
    %v3645 = vld [vmem:[#allocation8 + $0xc0] sm:$0xff]
    %v3646 = vld [vmem:[#allocation8 + $0xc8] sm:$0xff]
    %v3647 = vld [vmem:[#allocation8 + $0xd0] sm:$0xff]
    %v3648 = vld [vmem:[#allocation8 + $0xd8] sm:$0xff]
    %v3649 = vld [vmem:[#allocation8 + $0xe0] sm:$0xff]
    %v3650 = vld [vmem:[#allocation8 + $0xe8] sm:$0xff]
    %v3651 = vld [vmem:[#allocation8 + $0xf0] sm:$0xff]
    %v3652 = vld [vmem:[#allocation8 + $0xf8] sm:$0xff]
    %v3653 = vld [vmem:[#allocation8 + $0x100] sm:$0xff]
    %v3654 = vld [vmem:[#allocation8 + $0x108] sm:$0xff]
    %v3655 = vld [vmem:[#allocation8 + $0x110] sm:$0xff]
    %v3656 = vld [vmem:[#allocation8 + $0x118] sm:$0xff]
    %v3657 = vld [vmem:[#allocation8 + $0x120] sm:$0xff]
    %v3658 = vld [vmem:[#allocation8 + $0x128] sm:$0xff]
    %v3659 = vld [vmem:[#allocation8 + $0x130] sm:$0xff]
    %v3660 = vld [vmem:[#allocation8 + $0x138] sm:$0xff]
    %v3661 = vld [vmem:[#allocation8 + $0x140] sm:$0xff]
    %v3662 = vld [vmem:[#allocation8 + $0x148] sm:$0xff]
    %v3663 = vld [vmem:[#allocation8 + $0x150] sm:$0xff]
    %v3664 = vld [vmem:[#allocation8 + $0x158] sm:$0xff]
    %v3665 = vld [vmem:[#allocation8 + $0x160] sm:$0xff]
    %v3666 = vld [vmem:[#allocation8 + $0x168] sm:$0xff]
    %v3667 = vld [vmem:[#allocation8 + $0x170] sm:$0xff]
    %v3668 = vld [vmem:[#allocation8 + $0x178] sm:$0xff]
    %v3669 = vld [vmem:[#allocation8 + $0x180] sm:$0xff]
    %v3670 = vld [vmem:[#allocation8 + $0x188] sm:$0xff]
    %v3671 = vld [vmem:[#allocation8 + $0x190] sm:$0xff]
    %v3672 = vld [vmem:[#allocation8 + $0x198] sm:$0xff]
    %v3673 = vld [vmem:[#allocation8 + $0x1a0] sm:$0xff]
    %v3674 = vld [vmem:[#allocation8 + $0x1a8] sm:$0xff]
    %v3675 = vld [vmem:[#allocation8 + $0x1b0] sm:$0xff]
    %v3676 = vld [vmem:[#allocation8 + $0x1b8] sm:$0xff]
    %v3677 = vld [vmem:[#allocation8 + $0x1c0] sm:$0xff]
    %v3678 = vld [vmem:[#allocation8 + $0x1c8] sm:$0xff]
    %v3679 = vld [vmem:[#allocation8 + $0x1d0] sm:$0xff]
    %v3680 = vld [vmem:[#allocation8 + $0x1d8] sm:$0xff]
    %v3681 = vld [vmem:[#allocation8 + $0x1e0] sm:$0xff]
    %v3682 = vld [vmem:[#allocation8 + $0x1e8] sm:$0xff]
    %v3683 = vld [vmem:[#allocation8 + $0x1f0] sm:$0xff]
    %v3684 = vld [vmem:[#allocation8 + $0x1f8] sm:$0xff]
    %3685 = vmatprep.subr.mxu0 %v3622
    %3686 = vmatpush1.msra.mxu0 %v3621
    %3687 = vmatprep.subr.mxu0 %v3626
    %3688 = vmatpush1.msra.mxu0 %v3625
    %3689 = vmatprep.subr.mxu0 %v3630
    %3690 = vmatpush1.msra.mxu0 %v3629
    %3691 = vmatprep.subr.mxu0 %v3634
    %3692 = vmatpush1.msra.mxu0 %v3633
    %3693 = vmatprep.subr.mxu0 %v3638
    %3694 = vmatpush1.msra.mxu0 %v3637
    %3695 = vmatprep.subr.mxu0 %v3642
    %3696 = vmatpush1.msra.mxu0 %v3641
    %3697 = vmatprep.subr.mxu0 %v3646
    %3698 = vmatpush1.msra.mxu0 %v3645
    %3699 = vmatprep.subr.mxu0 %v3650
    %3700 = vmatpush1.msra.mxu0 %v3649
    %3701 = vmatprep.subr.mxu0 %v3654
    %3702 = vmatpush1.msra.mxu0 %v3653
    %3703 = vmatprep.subr.mxu0 %v3658
    %3704 = vmatpush1.msra.mxu0 %v3657
    %3705 = vmatprep.subr.mxu0 %v3662
    %3706 = vmatpush1.msra.mxu0 %v3661
    %3707 = vmatprep.subr.mxu0 %v3666
    %3708 = vmatpush1.msra.mxu0 %v3665
    %3709 = vmatprep.subr.mxu0 %v3670
    %3710 = vmatpush1.msra.mxu0 %v3669
    %3711 = vmatprep.subr.mxu0 %v3674
    %3712 = vmatpush1.msra.mxu0 %v3673
    %3713 = vmatprep.subr.mxu0 %v3678
    %3714 = vmatpush1.msra.mxu0 %v3677
    %3715 = vmatprep.subr.mxu0 %v3682
    %3716 = vmatpush1.msra.mxu0 %v3681
    %3717 = vmatprep.subr.mxu0 0.0
    %3718 = vmatpush1.msra.mxu0 0.0
    %3719 = vmatprep.subr.mxu0 0.0
    %3720 = vmatpush1.msra.mxu0 0.0
    %3721 = vmatprep.subr.mxu0 0.0
    %3722 = vmatpush1.msra.mxu0 0.0
    %3723 = vmatprep.subr.mxu0 0.0
    %3724 = vmatpush1.msra.mxu0 0.0
    %3725 = vmatprep.subr.mxu0 0.0
    %3726 = vmatpush1.msra.mxu0 0.0
    %3727 = vmatprep.subr.mxu0 0.0
    %3728 = vmatpush1.msra.mxu0 0.0
    %3729 = vmatprep.subr.mxu0 0.0
    %3730 = vmatpush1.msra.mxu0 0.0
    %3731 = vmatprep.subr.mxu0 0.0
    %3732 = vmatpush1.msra.mxu0 0.0
    %3733 = vmatprep.subr.mxu0 0.0
    %3734 = vmatpush1.msra.mxu0 0.0
    %3735 = vmatprep.subr.mxu0 0.0
    %3736 = vmatpush1.msra.mxu0 0.0
    %3737 = vmatprep.subr.mxu0 0.0
    %3738 = vmatpush1.msra.mxu0 0.0
    %3739 = vmatprep.subr.mxu0 0.0
    %3740 = vmatpush1.msra.mxu0 0.0
    %3741 = vmatprep.subr.mxu0 0.0
    %3742 = vmatpush1.msra.mxu0 0.0
    %3743 = vmatprep.subr.mxu0 0.0
    %3744 = vmatpush1.msra.mxu0 0.0
    %3745 = vmatprep.subr.mxu0 0.0
    %3746 = vmatpush1.msra.mxu0 0.0
    %3747 = vmatprep.subr.mxu0 0.0
    %3748 = vmatpush1.msra.mxu0 0.0
    %3749 = vmatprep.mubr.f32.mxu0 0.0
    %3750 = vmatmul.mubr.f32.gmra.mrb[0].mxu0 %v3615
    %v3751 = vpop.f32.mrb[0].mxu0
    %v3752 = vadd.f32 0.0, %v3751
    %v3753 = vpop.f32.mrb[0].mxu0
    %v3754 = vadd.f32 0.0, %v3753
    %3755 = vdwg.mxu0
    %3756 = vmatprep.subr.mxu0 %v3624
    %3757 = vmatpush1.msra.mxu0 %v3623
    %3758 = vmatprep.subr.mxu0 %v3628
    %3759 = vmatpush1.msra.mxu0 %v3627
    %3760 = vmatprep.subr.mxu0 %v3632
    %3761 = vmatpush1.msra.mxu0 %v3631
    %3762 = vmatprep.subr.mxu0 %v3636
    %3763 = vmatpush1.msra.mxu0 %v3635
    %3764 = vmatprep.subr.mxu0 %v3640
    %3765 = vmatpush1.msra.mxu0 %v3639
    %3766 = vmatprep.subr.mxu0 %v3644
    %3767 = vmatpush1.msra.mxu0 %v3643
    %3768 = vmatprep.subr.mxu0 %v3648
    %3769 = vmatpush1.msra.mxu0 %v3647
    %3770 = vmatprep.subr.mxu0 %v3652
    %3771 = vmatpush1.msra.mxu0 %v3651
    %3772 = vmatprep.subr.mxu0 %v3656
    %3773 = vmatpush1.msra.mxu0 %v3655
    %3774 = vmatprep.subr.mxu0 %v3660
    %3775 = vmatpush1.msra.mxu0 %v3659
    %3776 = vmatprep.subr.mxu0 %v3664
    %3777 = vmatpush1.msra.mxu0 %v3663
    %3778 = vmatprep.subr.mxu0 %v3668
    %3779 = vmatpush1.msra.mxu0 %v3667
    %3780 = vmatprep.subr.mxu0 %v3672
    %3781 = vmatpush1.msra.mxu0 %v3671
    %3782 = vmatprep.subr.mxu0 %v3676
    %3783 = vmatpush1.msra.mxu0 %v3675
    %3784 = vmatprep.subr.mxu0 %v3680
    %3785 = vmatpush1.msra.mxu0 %v3679
    %3786 = vmatprep.subr.mxu0 %v3684
    %3787 = vmatpush1.msra.mxu0 %v3683
    %3788 = vmatprep.subr.mxu0 0.0
    %3789 = vmatpush1.msra.mxu0 0.0
    %3790 = vmatprep.subr.mxu0 0.0
    %3791 = vmatpush1.msra.mxu0 0.0
    %3792 = vmatprep.subr.mxu0 0.0
    %3793 = vmatpush1.msra.mxu0 0.0
    %3794 = vmatprep.subr.mxu0 0.0
    %3795 = vmatpush1.msra.mxu0 0.0
    %3796 = vmatprep.subr.mxu0 0.0
    %3797 = vmatpush1.msra.mxu0 0.0
    %3798 = vmatprep.subr.mxu0 0.0
    %3799 = vmatpush1.msra.mxu0 0.0
    %3800 = vmatprep.subr.mxu0 0.0
    %3801 = vmatpush1.msra.mxu0 0.0
    %3802 = vmatprep.subr.mxu0 0.0
    %3803 = vmatpush1.msra.mxu0 0.0
    %3804 = vmatprep.subr.mxu0 0.0
    %3805 = vmatpush1.msra.mxu0 0.0
    %3806 = vmatprep.subr.mxu0 0.0
    %3807 = vmatpush1.msra.mxu0 0.0
    %3808 = vmatprep.subr.mxu0 0.0
    %3809 = vmatpush1.msra.mxu0 0.0
    %3810 = vmatprep.subr.mxu0 0.0
    %3811 = vmatpush1.msra.mxu0 0.0
    %3812 = vmatprep.subr.mxu0 0.0
    %3813 = vmatpush1.msra.mxu0 0.0
    %3814 = vmatprep.subr.mxu0 0.0
    %3815 = vmatpush1.msra.mxu0 0.0
    %3816 = vmatprep.subr.mxu0 0.0
    %3817 = vmatpush1.msra.mxu0 0.0
    %3818 = vmatprep.subr.mxu0 0.0
    %3819 = vmatpush1.msra.mxu0 0.0
    %3820 = vmatprep.mubr.f32.mxu0 0.0
    %3821 = vmatmul.mubr.f32.gmra.mrb[0].mxu0 %v3615
    %v3822 = vpop.f32.mrb[0].mxu0
    %v3823 = vadd.f32 0.0, %v3822
    %v3824 = vpop.f32.mrb[0].mxu0
    %v3825 = vadd.f32 0.0, %v3824
    %3826 = vdwg.mxu0
    %v3827 = vadd.f32 %v3617, %v3752
    %v3828 = vadd.f32 %v3618, %v3754
    %v3829 = vadd.f32 %v3619, %v3823
    %v3830 = vadd.f32 %v3620, %v3825
    %v3831 = vxor.u32 %v3827, 2147483648
    %v3832 = vmul.f32 %v3831, 1.442695
    %v3833 = vpow.pop %v3832
    %v3834 = vadd.f32 %v3833, 1.0
    %v3835 = vrcp.pop %v3834
    %v3836 = vmul.f32 1.0, %v3835
    %v3837 = vxor.u32 %v3828, 2147483648
    %v3838 = vmul.f32 %v3837, 1.442695
    %v3839 = vpow.pop %v3838
    %v3840 = vadd.f32 %v3839, 1.0
    %v3841 = vrcp.pop %v3840
    %v3842 = vmul.f32 1.0, %v3841
    %v3843 = vtanh.pop %v3829
    %v3844 = vxor.u32 %v3830, 2147483648
    %v3845 = vmul.f32 %v3844, 1.442695
    %v3846 = vpow.pop %v3845
    %v3847 = vadd.f32 %v3846, 1.0
    %v3848 = vrcp.pop %v3847
    %v3849 = vmul.f32 1.0, %v3848
    %v3850 = vmul.f32 %v3842, %v3613
    %v3851 = vmul.f32 %v3836, %v3843
    %v3852 = vadd.f32 %v3850, %v3851
    %v3853 = vtanh.pop %v3852
    %v3854 = vmul.f32 %v3849, %v3853
    %3855 = vst [vmem:[#allocation3 + $0x20] sm:$0xff] %v3854
    %v3856 = vld [vmem:[#allocation2 + $0xa0] sm:$0xff]
    %v3857 = vld [vmem:[#allocation2 + $0xa8] sm:$0xff]
    %v3858 = vld [vmem:[#allocation2 + $0xb0] sm:$0xff]
    %v3859 = vld [vmem:[#allocation2 + $0xb8] sm:$0xff]
    %v3860 = vld [vmem:[#allocation8] sm:$0xff]
    %v3861 = vld [vmem:[#allocation8 + $0x8] sm:$0xff]
    %v3862 = vld [vmem:[#allocation8 + $0x10] sm:$0xff]
    %v3863 = vld [vmem:[#allocation8 + $0x18] sm:$0xff]
    %v3864 = vld [vmem:[#allocation8 + $0x20] sm:$0xff]
    %v3865 = vld [vmem:[#allocation8 + $0x28] sm:$0xff]
    %v3866 = vld [vmem:[#allocation8 + $0x30] sm:$0xff]
    %v3867 = vld [vmem:[#allocation8 + $0x38] sm:$0xff]
    %v3868 = vld [vmem:[#allocation8 + $0x40] sm:$0xff]
    %v3869 = vld [vmem:[#allocation8 + $0x48] sm:$0xff]
    %v3870 = vld [vmem:[#allocation8 + $0x50] sm:$0xff]
    %v3871 = vld [vmem:[#allocation8 + $0x58] sm:$0xff]
    %v3872 = vld [vmem:[#allocation8 + $0x60] sm:$0xff]
    %v3873 = vld [vmem:[#allocation8 + $0x68] sm:$0xff]
    %v3874 = vld [vmem:[#allocation8 + $0x70] sm:$0xff]
    %v3875 = vld [vmem:[#allocation8 + $0x78] sm:$0xff]
    %v3876 = vld [vmem:[#allocation8 + $0x80] sm:$0xff]
    %v3877 = vld [vmem:[#allocation8 + $0x88] sm:$0xff]
    %v3878 = vld [vmem:[#allocation8 + $0x90] sm:$0xff]
    %v3879 = vld [vmem:[#allocation8 + $0x98] sm:$0xff]
    %v3880 = vld [vmem:[#allocation8 + $0xa0] sm:$0xff]
    %v3881 = vld [vmem:[#allocation8 + $0xa8] sm:$0xff]
    %v3882 = vld [vmem:[#allocation8 + $0xb0] sm:$0xff]
    %v3883 = vld [vmem:[#allocation8 + $0xb8] sm:$0xff]
    %v3884 = vld [vmem:[#allocation8 + $0xc0] sm:$0xff]
    %v3885 = vld [vmem:[#allocation8 + $0xc8] sm:$0xff]
    %v3886 = vld [vmem:[#allocation8 + $0xd0] sm:$0xff]
    %v3887 = vld [vmem:[#allocation8 + $0xd8] sm:$0xff]
    %v3888 = vld [vmem:[#allocation8 + $0xe0] sm:$0xff]
    %v3889 = vld [vmem:[#allocation8 + $0xe8] sm:$0xff]
    %v3890 = vld [vmem:[#allocation8 + $0xf0] sm:$0xff]
    %v3891 = vld [vmem:[#allocation8 + $0xf8] sm:$0xff]
    %v3892 = vld [vmem:[#allocation8 + $0x100] sm:$0xff]
    %v3893 = vld [vmem:[#allocation8 + $0x108] sm:$0xff]
    %v3894 = vld [vmem:[#allocation8 + $0x110] sm:$0xff]
    %v3895 = vld [vmem:[#allocation8 + $0x118] sm:$0xff]
    %v3896 = vld [vmem:[#allocation8 + $0x120] sm:$0xff]
    %v3897 = vld [vmem:[#allocation8 + $0x128] sm:$0xff]
    %v3898 = vld [vmem:[#allocation8 + $0x130] sm:$0xff]
    %v3899 = vld [vmem:[#allocation8 + $0x138] sm:$0xff]
    %v3900 = vld [vmem:[#allocation8 + $0x140] sm:$0xff]
    %v3901 = vld [vmem:[#allocation8 + $0x148] sm:$0xff]
    %v3902 = vld [vmem:[#allocation8 + $0x150] sm:$0xff]
    %v3903 = vld [vmem:[#allocation8 + $0x158] sm:$0xff]
    %v3904 = vld [vmem:[#allocation8 + $0x160] sm:$0xff]
    %v3905 = vld [vmem:[#allocation8 + $0x168] sm:$0xff]
    %v3906 = vld [vmem:[#allocation8 + $0x170] sm:$0xff]
    %v3907 = vld [vmem:[#allocation8 + $0x178] sm:$0xff]
    %v3908 = vld [vmem:[#allocation8 + $0x180] sm:$0xff]
    %v3909 = vld [vmem:[#allocation8 + $0x188] sm:$0xff]
    %v3910 = vld [vmem:[#allocation8 + $0x190] sm:$0xff]
    %v3911 = vld [vmem:[#allocation8 + $0x198] sm:$0xff]
    %v3912 = vld [vmem:[#allocation8 + $0x1a0] sm:$0xff]
    %v3913 = vld [vmem:[#allocation8 + $0x1a8] sm:$0xff]
    %v3914 = vld [vmem:[#allocation8 + $0x1b0] sm:$0xff]
    %v3915 = vld [vmem:[#allocation8 + $0x1b8] sm:$0xff]
    %v3916 = vld [vmem:[#allocation8 + $0x1c0] sm:$0xff]
    %v3917 = vld [vmem:[#allocation8 + $0x1c8] sm:$0xff]
    %v3918 = vld [vmem:[#allocation8 + $0x1d0] sm:$0xff]
    %v3919 = vld [vmem:[#allocation8 + $0x1d8] sm:$0xff]
    %v3920 = vld [vmem:[#allocation8 + $0x1e0] sm:$0xff]
    %v3921 = vld [vmem:[#allocation8 + $0x1e8] sm:$0xff]
    %v3922 = vld [vmem:[#allocation8 + $0x1f0] sm:$0xff]
    %v3923 = vld [vmem:[#allocation8 + $0x1f8] sm:$0xff]
    %3924 = vmatprep.subr.mxu0 %v3861
    %3925 = vmatpush1.msra.mxu0 %v3860
    %3926 = vmatprep.subr.mxu0 %v3865
    %3927 = vmatpush1.msra.mxu0 %v3864
    %3928 = vmatprep.subr.mxu0 %v3869
    %3929 = vmatpush1.msra.mxu0 %v3868
    %3930 = vmatprep.subr.mxu0 %v3873
    %3931 = vmatpush1.msra.mxu0 %v3872
    %3932 = vmatprep.subr.mxu0 %v3877
    %3933 = vmatpush1.msra.mxu0 %v3876
    %3934 = vmatprep.subr.mxu0 %v3881
    %3935 = vmatpush1.msra.mxu0 %v3880
    %3936 = vmatprep.subr.mxu0 %v3885
    %3937 = vmatpush1.msra.mxu0 %v3884
    %3938 = vmatprep.subr.mxu0 %v3889
    %3939 = vmatpush1.msra.mxu0 %v3888
    %3940 = vmatprep.subr.mxu0 %v3893
    %3941 = vmatpush1.msra.mxu0 %v3892
    %3942 = vmatprep.subr.mxu0 %v3897
    %3943 = vmatpush1.msra.mxu0 %v3896
    %3944 = vmatprep.subr.mxu0 %v3901
    %3945 = vmatpush1.msra.mxu0 %v3900
    %3946 = vmatprep.subr.mxu0 %v3905
    %3947 = vmatpush1.msra.mxu0 %v3904
    %3948 = vmatprep.subr.mxu0 %v3909
    %3949 = vmatpush1.msra.mxu0 %v3908
    %3950 = vmatprep.subr.mxu0 %v3913
    %3951 = vmatpush1.msra.mxu0 %v3912
    %3952 = vmatprep.subr.mxu0 %v3917
    %3953 = vmatpush1.msra.mxu0 %v3916
    %3954 = vmatprep.subr.mxu0 %v3921
    %3955 = vmatpush1.msra.mxu0 %v3920
    %3956 = vmatprep.subr.mxu0 0.0
    %3957 = vmatpush1.msra.mxu0 0.0
    %3958 = vmatprep.subr.mxu0 0.0
    %3959 = vmatpush1.msra.mxu0 0.0
    %3960 = vmatprep.subr.mxu0 0.0
    %3961 = vmatpush1.msra.mxu0 0.0
    %3962 = vmatprep.subr.mxu0 0.0
    %3963 = vmatpush1.msra.mxu0 0.0
    %3964 = vmatprep.subr.mxu0 0.0
    %3965 = vmatpush1.msra.mxu0 0.0
    %3966 = vmatprep.subr.mxu0 0.0
    %3967 = vmatpush1.msra.mxu0 0.0
    %3968 = vmatprep.subr.mxu0 0.0
    %3969 = vmatpush1.msra.mxu0 0.0
    %3970 = vmatprep.subr.mxu0 0.0
    %3971 = vmatpush1.msra.mxu0 0.0
    %3972 = vmatprep.subr.mxu0 0.0
    %3973 = vmatpush1.msra.mxu0 0.0
    %3974 = vmatprep.subr.mxu0 0.0
    %3975 = vmatpush1.msra.mxu0 0.0
    %3976 = vmatprep.subr.mxu0 0.0
    %3977 = vmatpush1.msra.mxu0 0.0
    %3978 = vmatprep.subr.mxu0 0.0
    %3979 = vmatpush1.msra.mxu0 0.0
    %3980 = vmatprep.subr.mxu0 0.0
    %3981 = vmatpush1.msra.mxu0 0.0
    %3982 = vmatprep.subr.mxu0 0.0
    %3983 = vmatpush1.msra.mxu0 0.0
    %3984 = vmatprep.subr.mxu0 0.0
    %3985 = vmatpush1.msra.mxu0 0.0
    %3986 = vmatprep.subr.mxu0 0.0
    %3987 = vmatpush1.msra.mxu0 0.0
    %3988 = vmatprep.mubr.f32.mxu0 0.0
    %3989 = vmatmul.mubr.f32.gmra.mrb[0].mxu0 %v3854
    %v3990 = vpop.f32.mrb[0].mxu0
    %v3991 = vadd.f32 0.0, %v3990
    %v3992 = vpop.f32.mrb[0].mxu0
    %v3993 = vadd.f32 0.0, %v3992
    %3994 = vdwg.mxu0
    %3995 = vmatprep.subr.mxu0 %v3863
    %3996 = vmatpush1.msra.mxu0 %v3862
    %3997 = vmatprep.subr.mxu0 %v3867
    %3998 = vmatpush1.msra.mxu0 %v3866
    %3999 = vmatprep.subr.mxu0 %v3871
    %4000 = vmatpush1.msra.mxu0 %v3870
    %4001 = vmatprep.subr.mxu0 %v3875
    %4002 = vmatpush1.msra.mxu0 %v3874
    %4003 = vmatprep.subr.mxu0 %v3879
    %4004 = vmatpush1.msra.mxu0 %v3878
    %4005 = vmatprep.subr.mxu0 %v3883
    %4006 = vmatpush1.msra.mxu0 %v3882
    %4007 = vmatprep.subr.mxu0 %v3887
    %4008 = vmatpush1.msra.mxu0 %v3886
    %4009 = vmatprep.subr.mxu0 %v3891
    %4010 = vmatpush1.msra.mxu0 %v3890
    %4011 = vmatprep.subr.mxu0 %v3895
    %4012 = vmatpush1.msra.mxu0 %v3894
    %4013 = vmatprep.subr.mxu0 %v3899
    %4014 = vmatpush1.msra.mxu0 %v3898
    %4015 = vmatprep.subr.mxu0 %v3903
    %4016 = vmatpush1.msra.mxu0 %v3902
    %4017 = vmatprep.subr.mxu0 %v3907
    %4018 = vmatpush1.msra.mxu0 %v3906
    %4019 = vmatprep.subr.mxu0 %v3911
    %4020 = vmatpush1.msra.mxu0 %v3910
    %4021 = vmatprep.subr.mxu0 %v3915
    %4022 = vmatpush1.msra.mxu0 %v3914
    %4023 = vmatprep.subr.mxu0 %v3919
    %4024 = vmatpush1.msra.mxu0 %v3918
    %4025 = vmatprep.subr.mxu0 %v3923
    %4026 = vmatpush1.msra.mxu0 %v3922
    %4027 = vmatprep.subr.mxu0 0.0
    %4028 = vmatpush1.msra.mxu0 0.0
    %4029 = vmatprep.subr.mxu0 0.0
    %4030 = vmatpush1.msra.mxu0 0.0
    %4031 = vmatprep.subr.mxu0 0.0
    %4032 = vmatpush1.msra.mxu0 0.0
    %4033 = vmatprep.subr.mxu0 0.0
    %4034 = vmatpush1.msra.mxu0 0.0
    %4035 = vmatprep.subr.mxu0 0.0
    %4036 = vmatpush1.msra.mxu0 0.0
    %4037 = vmatprep.subr.mxu0 0.0
    %4038 = vmatpush1.msra.mxu0 0.0
    %4039 = vmatprep.subr.mxu0 0.0
    %4040 = vmatpush1.msra.mxu0 0.0
    %4041 = vmatprep.subr.mxu0 0.0
    %4042 = vmatpush1.msra.mxu0 0.0
    %4043 = vmatprep.subr.mxu0 0.0
    %4044 = vmatpush1.msra.mxu0 0.0
    %4045 = vmatprep.subr.mxu0 0.0
    %4046 = vmatpush1.msra.mxu0 0.0
    %4047 = vmatprep.subr.mxu0 0.0
    %4048 = vmatpush1.msra.mxu0 0.0
    %4049 = vmatprep.subr.mxu0 0.0
    %4050 = vmatpush1.msra.mxu0 0.0
    %4051 = vmatprep.subr.mxu0 0.0
    %4052 = vmatpush1.msra.mxu0 0.0
    %4053 = vmatprep.subr.mxu0 0.0
    %4054 = vmatpush1.msra.mxu0 0.0
    %4055 = vmatprep.subr.mxu0 0.0
    %4056 = vmatpush1.msra.mxu0 0.0
    %4057 = vmatprep.subr.mxu0 0.0
    %4058 = vmatpush1.msra.mxu0 0.0
    %4059 = vmatprep.mubr.f32.mxu0 0.0
    %4060 = vmatmul.mubr.f32.gmra.mrb[0].mxu0 %v3854
    %v4061 = vpop.f32.mrb[0].mxu0
    %v4062 = vadd.f32 0.0, %v4061
    %v4063 = vpop.f32.mrb[0].mxu0
    %v4064 = vadd.f32 0.0, %v4063
    %4065 = vdwg.mxu0
    %v4066 = vadd.f32 %v3856, %v3991
    %v4067 = vadd.f32 %v3857, %v3993
    %v4068 = vadd.f32 %v3858, %v4062
    %v4069 = vadd.f32 %v3859, %v4064
    %v4070 = vxor.u32 %v4066, 2147483648
    %v4071 = vmul.f32 %v4070, 1.442695
    %v4072 = vpow.pop %v4071
    %v4073 = vadd.f32 %v4072, 1.0
    %v4074 = vrcp.pop %v4073
    %v4075 = vmul.f32 1.0, %v4074
    %v4076 = vxor.u32 %v4067, 2147483648
    %v4077 = vmul.f32 %v4076, 1.442695
    %v4078 = vpow.pop %v4077
    %v4079 = vadd.f32 %v4078, 1.0
    %v4080 = vrcp.pop %v4079
    %v4081 = vmul.f32 1.0, %v4080
    %v4082 = vtanh.pop %v4068
    %v4083 = vxor.u32 %v4069, 2147483648
    %v4084 = vmul.f32 %v4083, 1.442695
    %v4085 = vpow.pop %v4084
    %v4086 = vadd.f32 %v4085, 1.0
    %v4087 = vrcp.pop %v4086
    %v4088 = vmul.f32 1.0, %v4087
    %v4089 = vmul.f32 %v4081, %v3852
    %v4090 = vmul.f32 %v4075, %v4082
    %v4091 = vadd.f32 %v4089, %v4090
    %v4092 = vtanh.pop %v4091
    %v4093 = vmul.f32 %v4088, %v4092
    %4094 = vst [vmem:[#allocation3 + $0x28] sm:$0xff] %v4093
    %v4095 = vld [vmem:[#allocation2 + $0xc0] sm:$0xff]
    %v4096 = vld [vmem:[#allocation2 + $0xc8] sm:$0xff]
    %v4097 = vld [vmem:[#allocation2 + $0xd0] sm:$0xff]
    %v4098 = vld [vmem:[#allocation2 + $0xd8] sm:$0xff]
    %v4099 = vld [vmem:[#allocation8] sm:$0xff]
    %v4100 = vld [vmem:[#allocation8 + $0x8] sm:$0xff]
    %v4101 = vld [vmem:[#allocation8 + $0x10] sm:$0xff]
    %v4102 = vld [vmem:[#allocation8 + $0x18] sm:$0xff]
    %v4103 = vld [vmem:[#allocation8 + $0x20] sm:$0xff]
    %v4104 = vld [vmem:[#allocation8 + $0x28] sm:$0xff]
    %v4105 = vld [vmem:[#allocation8 + $0x30] sm:$0xff]
    %v4106 = vld [vmem:[#allocation8 + $0x38] sm:$0xff]
    %v4107 = vld [vmem:[#allocation8 + $0x40] sm:$0xff]
    %v4108 = vld [vmem:[#allocation8 + $0x48] sm:$0xff]
    %v4109 = vld [vmem:[#allocation8 + $0x50] sm:$0xff]
    %v4110 = vld [vmem:[#allocation8 + $0x58] sm:$0xff]
    %v4111 = vld [vmem:[#allocation8 + $0x60] sm:$0xff]
    %v4112 = vld [vmem:[#allocation8 + $0x68] sm:$0xff]
    %v4113 = vld [vmem:[#allocation8 + $0x70] sm:$0xff]
    %v4114 = vld [vmem:[#allocation8 + $0x78] sm:$0xff]
    %v4115 = vld [vmem:[#allocation8 + $0x80] sm:$0xff]
    %v4116 = vld [vmem:[#allocation8 + $0x88] sm:$0xff]
    %v4117 = vld [vmem:[#allocation8 + $0x90] sm:$0xff]
    %v4118 = vld [vmem:[#allocation8 + $0x98] sm:$0xff]
    %v4119 = vld [vmem:[#allocation8 + $0xa0] sm:$0xff]
    %v4120 = vld [vmem:[#allocation8 + $0xa8] sm:$0xff]
    %v4121 = vld [vmem:[#allocation8 + $0xb0] sm:$0xff]
    %v4122 = vld [vmem:[#allocation8 + $0xb8] sm:$0xff]
    %v4123 = vld [vmem:[#allocation8 + $0xc0] sm:$0xff]
    %v4124 = vld [vmem:[#allocation8 + $0xc8] sm:$0xff]
    %v4125 = vld [vmem:[#allocation8 + $0xd0] sm:$0xff]
    %v4126 = vld [vmem:[#allocation8 + $0xd8] sm:$0xff]
    %v4127 = vld [vmem:[#allocation8 + $0xe0] sm:$0xff]
    %v4128 = vld [vmem:[#allocation8 + $0xe8] sm:$0xff]
    %v4129 = vld [vmem:[#allocation8 + $0xf0] sm:$0xff]
    %v4130 = vld [vmem:[#allocation8 + $0xf8] sm:$0xff]
    %v4131 = vld [vmem:[#allocation8 + $0x100] sm:$0xff]
    %v4132 = vld [vmem:[#allocation8 + $0x108] sm:$0xff]
    %v4133 = vld [vmem:[#allocation8 + $0x110] sm:$0xff]
    %v4134 = vld [vmem:[#allocation8 + $0x118] sm:$0xff]
    %v4135 = vld [vmem:[#allocation8 + $0x120] sm:$0xff]
    %v4136 = vld [vmem:[#allocation8 + $0x128] sm:$0xff]
    %v4137 = vld [vmem:[#allocation8 + $0x130] sm:$0xff]
    %v4138 = vld [vmem:[#allocation8 + $0x138] sm:$0xff]
    %v4139 = vld [vmem:[#allocation8 + $0x140] sm:$0xff]
    %v4140 = vld [vmem:[#allocation8 + $0x148] sm:$0xff]
    %v4141 = vld [vmem:[#allocation8 + $0x150] sm:$0xff]
    %v4142 = vld [vmem:[#allocation8 + $0x158] sm:$0xff]
    %v4143 = vld [vmem:[#allocation8 + $0x160] sm:$0xff]
    %v4144 = vld [vmem:[#allocation8 + $0x168] sm:$0xff]
    %v4145 = vld [vmem:[#allocation8 + $0x170] sm:$0xff]
    %v4146 = vld [vmem:[#allocation8 + $0x178] sm:$0xff]
    %v4147 = vld [vmem:[#allocation8 + $0x180] sm:$0xff]
    %v4148 = vld [vmem:[#allocation8 + $0x188] sm:$0xff]
    %v4149 = vld [vmem:[#allocation8 + $0x190] sm:$0xff]
    %v4150 = vld [vmem:[#allocation8 + $0x198] sm:$0xff]
    %v4151 = vld [vmem:[#allocation8 + $0x1a0] sm:$0xff]
    %v4152 = vld [vmem:[#allocation8 + $0x1a8] sm:$0xff]
    %v4153 = vld [vmem:[#allocation8 + $0x1b0] sm:$0xff]
    %v4154 = vld [vmem:[#allocation8 + $0x1b8] sm:$0xff]
    %v4155 = vld [vmem:[#allocation8 + $0x1c0] sm:$0xff]
    %v4156 = vld [vmem:[#allocation8 + $0x1c8] sm:$0xff]
    %v4157 = vld [vmem:[#allocation8 + $0x1d0] sm:$0xff]
    %v4158 = vld [vmem:[#allocation8 + $0x1d8] sm:$0xff]
    %v4159 = vld [vmem:[#allocation8 + $0x1e0] sm:$0xff]
    %v4160 = vld [vmem:[#allocation8 + $0x1e8] sm:$0xff]
    %v4161 = vld [vmem:[#allocation8 + $0x1f0] sm:$0xff]
    %v4162 = vld [vmem:[#allocation8 + $0x1f8] sm:$0xff]
    %4163 = vmatprep.subr.mxu0 %v4100
    %4164 = vmatpush1.msra.mxu0 %v4099
    %4165 = vmatprep.subr.mxu0 %v4104
    %4166 = vmatpush1.msra.mxu0 %v4103
    %4167 = vmatprep.subr.mxu0 %v4108
    %4168 = vmatpush1.msra.mxu0 %v4107
    %4169 = vmatprep.subr.mxu0 %v4112
    %4170 = vmatpush1.msra.mxu0 %v4111
    %4171 = vmatprep.subr.mxu0 %v4116
    %4172 = vmatpush1.msra.mxu0 %v4115
    %4173 = vmatprep.subr.mxu0 %v4120
    %4174 = vmatpush1.msra.mxu0 %v4119
    %4175 = vmatprep.subr.mxu0 %v4124
    %4176 = vmatpush1.msra.mxu0 %v4123
    %4177 = vmatprep.subr.mxu0 %v4128
    %4178 = vmatpush1.msra.mxu0 %v4127
    %4179 = vmatprep.subr.mxu0 %v4132
    %4180 = vmatpush1.msra.mxu0 %v4131
    %4181 = vmatprep.subr.mxu0 %v4136
    %4182 = vmatpush1.msra.mxu0 %v4135
    %4183 = vmatprep.subr.mxu0 %v4140
    %4184 = vmatpush1.msra.mxu0 %v4139
    %4185 = vmatprep.subr.mxu0 %v4144
    %4186 = vmatpush1.msra.mxu0 %v4143
    %4187 = vmatprep.subr.mxu0 %v4148
    %4188 = vmatpush1.msra.mxu0 %v4147
    %4189 = vmatprep.subr.mxu0 %v4152
    %4190 = vmatpush1.msra.mxu0 %v4151
    %4191 = vmatprep.subr.mxu0 %v4156
    %4192 = vmatpush1.msra.mxu0 %v4155
    %4193 = vmatprep.subr.mxu0 %v4160
    %4194 = vmatpush1.msra.mxu0 %v4159
    %4195 = vmatprep.subr.mxu0 0.0
    %4196 = vmatpush1.msra.mxu0 0.0
    %4197 = vmatprep.subr.mxu0 0.0
    %4198 = vmatpush1.msra.mxu0 0.0
    %4199 = vmatprep.subr.mxu0 0.0
    %4200 = vmatpush1.msra.mxu0 0.0
    %4201 = vmatprep.subr.mxu0 0.0
    %4202 = vmatpush1.msra.mxu0 0.0
    %4203 = vmatprep.subr.mxu0 0.0
    %4204 = vmatpush1.msra.mxu0 0.0
    %4205 = vmatprep.subr.mxu0 0.0
    %4206 = vmatpush1.msra.mxu0 0.0
    %4207 = vmatprep.subr.mxu0 0.0
    %4208 = vmatpush1.msra.mxu0 0.0
    %4209 = vmatprep.subr.mxu0 0.0
    %4210 = vmatpush1.msra.mxu0 0.0
    %4211 = vmatprep.subr.mxu0 0.0
    %4212 = vmatpush1.msra.mxu0 0.0
    %4213 = vmatprep.subr.mxu0 0.0
    %4214 = vmatpush1.msra.mxu0 0.0
    %4215 = vmatprep.subr.mxu0 0.0
    %4216 = vmatpush1.msra.mxu0 0.0
    %4217 = vmatprep.subr.mxu0 0.0
    %4218 = vmatpush1.msra.mxu0 0.0
    %4219 = vmatprep.subr.mxu0 0.0
    %4220 = vmatpush1.msra.mxu0 0.0
    %4221 = vmatprep.subr.mxu0 0.0
    %4222 = vmatpush1.msra.mxu0 0.0
    %4223 = vmatprep.subr.mxu0 0.0
    %4224 = vmatpush1.msra.mxu0 0.0
    %4225 = vmatprep.subr.mxu0 0.0
    %4226 = vmatpush1.msra.mxu0 0.0
    %4227 = vmatprep.mubr.f32.mxu0 0.0
    %4228 = vmatmul.mubr.f32.gmra.mrb[0].mxu0 %v4093
    %v4229 = vpop.f32.mrb[0].mxu0
    %v4230 = vadd.f32 0.0, %v4229
    %v4231 = vpop.f32.mrb[0].mxu0
    %v4232 = vadd.f32 0.0, %v4231
    %4233 = vdwg.mxu0
    %4234 = vmatprep.subr.mxu0 %v4102
    %4235 = vmatpush1.msra.mxu0 %v4101
    %4236 = vmatprep.subr.mxu0 %v4106
    %4237 = vmatpush1.msra.mxu0 %v4105
    %4238 = vmatprep.subr.mxu0 %v4110
    %4239 = vmatpush1.msra.mxu0 %v4109
    %4240 = vmatprep.subr.mxu0 %v4114
    %4241 = vmatpush1.msra.mxu0 %v4113
    %4242 = vmatprep.subr.mxu0 %v4118
    %4243 = vmatpush1.msra.mxu0 %v4117
    %4244 = vmatprep.subr.mxu0 %v4122
    %4245 = vmatpush1.msra.mxu0 %v4121
    %4246 = vmatprep.subr.mxu0 %v4126
    %4247 = vmatpush1.msra.mxu0 %v4125
    %4248 = vmatprep.subr.mxu0 %v4130
    %4249 = vmatpush1.msra.mxu0 %v4129
    %4250 = vmatprep.subr.mxu0 %v4134
    %4251 = vmatpush1.msra.mxu0 %v4133
    %4252 = vmatprep.subr.mxu0 %v4138
    %4253 = vmatpush1.msra.mxu0 %v4137
    %4254 = vmatprep.subr.mxu0 %v4142
    %4255 = vmatpush1.msra.mxu0 %v4141
    %4256 = vmatprep.subr.mxu0 %v4146
    %4257 = vmatpush1.msra.mxu0 %v4145
    %4258 = vmatprep.subr.mxu0 %v4150
    %4259 = vmatpush1.msra.mxu0 %v4149
    %4260 = vmatprep.subr.mxu0 %v4154
    %4261 = vmatpush1.msra.mxu0 %v4153
    %4262 = vmatprep.subr.mxu0 %v4158
    %4263 = vmatpush1.msra.mxu0 %v4157
    %4264 = vmatprep.subr.mxu0 %v4162
    %4265 = vmatpush1.msra.mxu0 %v4161
    %4266 = vmatprep.subr.mxu0 0.0
    %4267 = vmatpush1.msra.mxu0 0.0
    %4268 = vmatprep.subr.mxu0 0.0
    %4269 = vmatpush1.msra.mxu0 0.0
    %4270 = vmatprep.subr.mxu0 0.0
    %4271 = vmatpush1.msra.mxu0 0.0
    %4272 = vmatprep.subr.mxu0 0.0
    %4273 = vmatpush1.msra.mxu0 0.0
    %4274 = vmatprep.subr.mxu0 0.0
    %4275 = vmatpush1.msra.mxu0 0.0
    %4276 = vmatprep.subr.mxu0 0.0
    %4277 = vmatpush1.msra.mxu0 0.0
    %4278 = vmatprep.subr.mxu0 0.0
    %4279 = vmatpush1.msra.mxu0 0.0
    %4280 = vmatprep.subr.mxu0 0.0
    %4281 = vmatpush1.msra.mxu0 0.0
    %4282 = vmatprep.subr.mxu0 0.0
    %4283 = vmatpush1.msra.mxu0 0.0
    %4284 = vmatprep.subr.mxu0 0.0
    %4285 = vmatpush1.msra.mxu0 0.0
    %4286 = vmatprep.subr.mxu0 0.0
    %4287 = vmatpush1.msra.mxu0 0.0
    %4288 = vmatprep.subr.mxu0 0.0
    %4289 = vmatpush1.msra.mxu0 0.0
    %4290 = vmatprep.subr.mxu0 0.0
    %4291 = vmatpush1.msra.mxu0 0.0
    %4292 = vmatprep.subr.mxu0 0.0
    %4293 = vmatpush1.msra.mxu0 0.0
    %4294 = vmatprep.subr.mxu0 0.0
    %4295 = vmatpush1.msra.mxu0 0.0
    %4296 = vmatprep.subr.mxu0 0.0
    %4297 = vmatpush1.msra.mxu0 0.0
    %4298 = vmatprep.mubr.f32.mxu0 0.0
    %4299 = vmatmul.mubr.f32.gmra.mrb[0].mxu0 %v4093
    %v4300 = vpop.f32.mrb[0].mxu0
    %v4301 = vadd.f32 0.0, %v4300
    %v4302 = vpop.f32.mrb[0].mxu0
    %v4303 = vadd.f32 0.0, %v4302
    %4304 = vdwg.mxu0
    %v4305 = vadd.f32 %v4095, %v4230
    %v4306 = vadd.f32 %v4096, %v4232
    %v4307 = vadd.f32 %v4097, %v4301
    %v4308 = vadd.f32 %v4098, %v4303
    %v4309 = vxor.u32 %v4305, 2147483648
    %v4310 = vmul.f32 %v4309, 1.442695
    %v4311 = vpow.pop %v4310
    %v4312 = vadd.f32 %v4311, 1.0
    %v4313 = vrcp.pop %v4312
    %v4314 = vmul.f32 1.0, %v4313
    %v4315 = vxor.u32 %v4306, 2147483648
    %v4316 = vmul.f32 %v4315, 1.442695
    %v4317 = vpow.pop %v4316
    %v4318 = vadd.f32 %v4317, 1.0
    %v4319 = vrcp.pop %v4318
    %v4320 = vmul.f32 1.0, %v4319
    %v4321 = vtanh.pop %v4307
    %v4322 = vxor.u32 %v4308, 2147483648
    %v4323 = vmul.f32 %v4322, 1.442695
    %v4324 = vpow.pop %v4323
    %v4325 = vadd.f32 %v4324, 1.0
    %v4326 = vrcp.pop %v4325
    %v4327 = vmul.f32 1.0, %v4326
    %v4328 = vmul.f32 %v4320, %v4091
    %v4329 = vmul.f32 %v4314, %v4321
    %v4330 = vadd.f32 %v4328, %v4329
    %v4331 = vtanh.pop %v4330
    %v4332 = vmul.f32 %v4327, %v4331
    %4333 = vst [vmem:[#allocation3 + $0x30] sm:$0xff] %v4332
    %v4334 = vld [vmem:[#allocation2 + $0xe0] sm:$0xff]
    %v4335 = vld [vmem:[#allocation2 + $0xe8] sm:$0xff]
    %v4336 = vld [vmem:[#allocation2 + $0xf0] sm:$0xff]
    %v4337 = vld [vmem:[#allocation2 + $0xf8] sm:$0xff]
    %v4338 = vld [vmem:[#allocation8] sm:$0xff]
    %v4339 = vld [vmem:[#allocation8 + $0x8] sm:$0xff]
    %v4340 = vld [vmem:[#allocation8 + $0x10] sm:$0xff]
    %v4341 = vld [vmem:[#allocation8 + $0x18] sm:$0xff]
    %v4342 = vld [vmem:[#allocation8 + $0x20] sm:$0xff]
    %v4343 = vld [vmem:[#allocation8 + $0x28] sm:$0xff]
    %v4344 = vld [vmem:[#allocation8 + $0x30] sm:$0xff]
    %v4345 = vld [vmem:[#allocation8 + $0x38] sm:$0xff]
    %v4346 = vld [vmem:[#allocation8 + $0x40] sm:$0xff]
    %v4347 = vld [vmem:[#allocation8 + $0x48] sm:$0xff]
    %v4348 = vld [vmem:[#allocation8 + $0x50] sm:$0xff]
    %v4349 = vld [vmem:[#allocation8 + $0x58] sm:$0xff]
    %v4350 = vld [vmem:[#allocation8 + $0x60] sm:$0xff]
    %v4351 = vld [vmem:[#allocation8 + $0x68] sm:$0xff]
    %v4352 = vld [vmem:[#allocation8 + $0x70] sm:$0xff]
    %v4353 = vld [vmem:[#allocation8 + $0x78] sm:$0xff]
    %v4354 = vld [vmem:[#allocation8 + $0x80] sm:$0xff]
    %v4355 = vld [vmem:[#allocation8 + $0x88] sm:$0xff]
    %v4356 = vld [vmem:[#allocation8 + $0x90] sm:$0xff]
    %v4357 = vld [vmem:[#allocation8 + $0x98] sm:$0xff]
    %v4358 = vld [vmem:[#allocation8 + $0xa0] sm:$0xff]
    %v4359 = vld [vmem:[#allocation8 + $0xa8] sm:$0xff]
    %v4360 = vld [vmem:[#allocation8 + $0xb0] sm:$0xff]
    %v4361 = vld [vmem:[#allocation8 + $0xb8] sm:$0xff]
    %v4362 = vld [vmem:[#allocation8 + $0xc0] sm:$0xff]
    %v4363 = vld [vmem:[#allocation8 + $0xc8] sm:$0xff]
    %v4364 = vld [vmem:[#allocation8 + $0xd0] sm:$0xff]
    %v4365 = vld [vmem:[#allocation8 + $0xd8] sm:$0xff]
    %v4366 = vld [vmem:[#allocation8 + $0xe0] sm:$0xff]
    %v4367 = vld [vmem:[#allocation8 + $0xe8] sm:$0xff]
    %v4368 = vld [vmem:[#allocation8 + $0xf0] sm:$0xff]
    %v4369 = vld [vmem:[#allocation8 + $0xf8] sm:$0xff]
    %v4370 = vld [vmem:[#allocation8 + $0x100] sm:$0xff]
    %v4371 = vld [vmem:[#allocation8 + $0x108] sm:$0xff]
    %v4372 = vld [vmem:[#allocation8 + $0x110] sm:$0xff]
    %v4373 = vld [vmem:[#allocation8 + $0x118] sm:$0xff]
    %v4374 = vld [vmem:[#allocation8 + $0x120] sm:$0xff]
    %v4375 = vld [vmem:[#allocation8 + $0x128] sm:$0xff]
    %v4376 = vld [vmem:[#allocation8 + $0x130] sm:$0xff]
    %v4377 = vld [vmem:[#allocation8 + $0x138] sm:$0xff]
    %v4378 = vld [vmem:[#allocation8 + $0x140] sm:$0xff]
    %v4379 = vld [vmem:[#allocation8 + $0x148] sm:$0xff]
    %v4380 = vld [vmem:[#allocation8 + $0x150] sm:$0xff]
    %v4381 = vld [vmem:[#allocation8 + $0x158] sm:$0xff]
    %v4382 = vld [vmem:[#allocation8 + $0x160] sm:$0xff]
    %v4383 = vld [vmem:[#allocation8 + $0x168] sm:$0xff]
    %v4384 = vld [vmem:[#allocation8 + $0x170] sm:$0xff]
    %v4385 = vld [vmem:[#allocation8 + $0x178] sm:$0xff]
    %v4386 = vld [vmem:[#allocation8 + $0x180] sm:$0xff]
    %v4387 = vld [vmem:[#allocation8 + $0x188] sm:$0xff]
    %v4388 = vld [vmem:[#allocation8 + $0x190] sm:$0xff]
    %v4389 = vld [vmem:[#allocation8 + $0x198] sm:$0xff]
    %v4390 = vld [vmem:[#allocation8 + $0x1a0] sm:$0xff]
    %v4391 = vld [vmem:[#allocation8 + $0x1a8] sm:$0xff]
    %v4392 = vld [vmem:[#allocation8 + $0x1b0] sm:$0xff]
    %v4393 = vld [vmem:[#allocation8 + $0x1b8] sm:$0xff]
    %v4394 = vld [vmem:[#allocation8 + $0x1c0] sm:$0xff]
    %v4395 = vld [vmem:[#allocation8 + $0x1c8] sm:$0xff]
    %v4396 = vld [vmem:[#allocation8 + $0x1d0] sm:$0xff]
    %v4397 = vld [vmem:[#allocation8 + $0x1d8] sm:$0xff]
    %v4398 = vld [vmem:[#allocation8 + $0x1e0] sm:$0xff]
    %v4399 = vld [vmem:[#allocation8 + $0x1e8] sm:$0xff]
    %v4400 = vld [vmem:[#allocation8 + $0x1f0] sm:$0xff]
    %v4401 = vld [vmem:[#allocation8 + $0x1f8] sm:$0xff]
    %4402 = vmatprep.subr.mxu0 %v4339
    %4403 = vmatpush1.msra.mxu0 %v4338
    %4404 = vmatprep.subr.mxu0 %v4343
    %4405 = vmatpush1.msra.mxu0 %v4342
    %4406 = vmatprep.subr.mxu0 %v4347
    %4407 = vmatpush1.msra.mxu0 %v4346
    %4408 = vmatprep.subr.mxu0 %v4351
    %4409 = vmatpush1.msra.mxu0 %v4350
    %4410 = vmatprep.subr.mxu0 %v4355
    %4411 = vmatpush1.msra.mxu0 %v4354
    %4412 = vmatprep.subr.mxu0 %v4359
    %4413 = vmatpush1.msra.mxu0 %v4358
    %4414 = vmatprep.subr.mxu0 %v4363
    %4415 = vmatpush1.msra.mxu0 %v4362
    %4416 = vmatprep.subr.mxu0 %v4367
    %4417 = vmatpush1.msra.mxu0 %v4366
    %4418 = vmatprep.subr.mxu0 %v4371
    %4419 = vmatpush1.msra.mxu0 %v4370
    %4420 = vmatprep.subr.mxu0 %v4375
    %4421 = vmatpush1.msra.mxu0 %v4374
    %4422 = vmatprep.subr.mxu0 %v4379
    %4423 = vmatpush1.msra.mxu0 %v4378
    %4424 = vmatprep.subr.mxu0 %v4383
    %4425 = vmatpush1.msra.mxu0 %v4382
    %4426 = vmatprep.subr.mxu0 %v4387
    %4427 = vmatpush1.msra.mxu0 %v4386
    %4428 = vmatprep.subr.mxu0 %v4391
    %4429 = vmatpush1.msra.mxu0 %v4390
    %4430 = vmatprep.subr.mxu0 %v4395
    %4431 = vmatpush1.msra.mxu0 %v4394
    %4432 = vmatprep.subr.mxu0 %v4399
    %4433 = vmatpush1.msra.mxu0 %v4398
    %4434 = vmatprep.subr.mxu0 0.0
    %4435 = vmatpush1.msra.mxu0 0.0
    %4436 = vmatprep.subr.mxu0 0.0
    %4437 = vmatpush1.msra.mxu0 0.0
    %4438 = vmatprep.subr.mxu0 0.0
    %4439 = vmatpush1.msra.mxu0 0.0
    %4440 = vmatprep.subr.mxu0 0.0
    %4441 = vmatpush1.msra.mxu0 0.0
    %4442 = vmatprep.subr.mxu0 0.0
    %4443 = vmatpush1.msra.mxu0 0.0
    %4444 = vmatprep.subr.mxu0 0.0
    %4445 = vmatpush1.msra.mxu0 0.0
    %4446 = vmatprep.subr.mxu0 0.0
    %4447 = vmatpush1.msra.mxu0 0.0
    %4448 = vmatprep.subr.mxu0 0.0
    %4449 = vmatpush1.msra.mxu0 0.0
    %4450 = vmatprep.subr.mxu0 0.0
    %4451 = vmatpush1.msra.mxu0 0.0
    %4452 = vmatprep.subr.mxu0 0.0
    %4453 = vmatpush1.msra.mxu0 0.0
    %4454 = vmatprep.subr.mxu0 0.0
    %4455 = vmatpush1.msra.mxu0 0.0
    %4456 = vmatprep.subr.mxu0 0.0
    %4457 = vmatpush1.msra.mxu0 0.0
    %4458 = vmatprep.subr.mxu0 0.0
    %4459 = vmatpush1.msra.mxu0 0.0
    %4460 = vmatprep.subr.mxu0 0.0
    %4461 = vmatpush1.msra.mxu0 0.0
    %4462 = vmatprep.subr.mxu0 0.0
    %4463 = vmatpush1.msra.mxu0 0.0
    %4464 = vmatprep.subr.mxu0 0.0
    %4465 = vmatpush1.msra.mxu0 0.0
    %4466 = vmatprep.mubr.f32.mxu0 0.0
    %4467 = vmatmul.mubr.f32.gmra.mrb[0].mxu0 %v4332
    %v4468 = vpop.f32.mrb[0].mxu0
    %v4469 = vadd.f32 0.0, %v4468
    %v4470 = vpop.f32.mrb[0].mxu0
    %v4471 = vadd.f32 0.0, %v4470
    %4472 = vdwg.mxu0
    %4473 = vmatprep.subr.mxu0 %v4341
    %4474 = vmatpush1.msra.mxu0 %v4340
    %4475 = vmatprep.subr.mxu0 %v4345
    %4476 = vmatpush1.msra.mxu0 %v4344
    %4477 = vmatprep.subr.mxu0 %v4349
    %4478 = vmatpush1.msra.mxu0 %v4348
    %4479 = vmatprep.subr.mxu0 %v4353
    %4480 = vmatpush1.msra.mxu0 %v4352
    %4481 = vmatprep.subr.mxu0 %v4357
    %4482 = vmatpush1.msra.mxu0 %v4356
    %4483 = vmatprep.subr.mxu0 %v4361
    %4484 = vmatpush1.msra.mxu0 %v4360
    %4485 = vmatprep.subr.mxu0 %v4365
    %4486 = vmatpush1.msra.mxu0 %v4364
    %4487 = vmatprep.subr.mxu0 %v4369
    %4488 = vmatpush1.msra.mxu0 %v4368
    %4489 = vmatprep.subr.mxu0 %v4373
    %4490 = vmatpush1.msra.mxu0 %v4372
    %4491 = vmatprep.subr.mxu0 %v4377
    %4492 = vmatpush1.msra.mxu0 %v4376
    %4493 = vmatprep.subr.mxu0 %v4381
    %4494 = vmatpush1.msra.mxu0 %v4380
    %4495 = vmatprep.subr.mxu0 %v4385
    %4496 = vmatpush1.msra.mxu0 %v4384
    %4497 = vmatprep.subr.mxu0 %v4389
    %4498 = vmatpush1.msra.mxu0 %v4388
    %4499 = vmatprep.subr.mxu0 %v4393
    %4500 = vmatpush1.msra.mxu0 %v4392
    %4501 = vmatprep.subr.mxu0 %v4397
    %4502 = vmatpush1.msra.mxu0 %v4396
    %4503 = vmatprep.subr.mxu0 %v4401
    %4504 = vmatpush1.msra.mxu0 %v4400
    %4505 = vmatprep.subr.mxu0 0.0
    %4506 = vmatpush1.msra.mxu0 0.0
    %4507 = vmatprep.subr.mxu0 0.0
    %4508 = vmatpush1.msra.mxu0 0.0
    %4509 = vmatprep.subr.mxu0 0.0
    %4510 = vmatpush1.msra.mxu0 0.0
    %4511 = vmatprep.subr.mxu0 0.0
    %4512 = vmatpush1.msra.mxu0 0.0
    %4513 = vmatprep.subr.mxu0 0.0
    %4514 = vmatpush1.msra.mxu0 0.0
    %4515 = vmatprep.subr.mxu0 0.0
    %4516 = vmatpush1.msra.mxu0 0.0
    %4517 = vmatprep.subr.mxu0 0.0
    %4518 = vmatpush1.msra.mxu0 0.0
    %4519 = vmatprep.subr.mxu0 0.0
    %4520 = vmatpush1.msra.mxu0 0.0
    %4521 = vmatprep.subr.mxu0 0.0
    %4522 = vmatpush1.msra.mxu0 0.0
    %4523 = vmatprep.subr.mxu0 0.0
    %4524 = vmatpush1.msra.mxu0 0.0
    %4525 = vmatprep.subr.mxu0 0.0
    %4526 = vmatpush1.msra.mxu0 0.0
    %4527 = vmatprep.subr.mxu0 0.0
    %4528 = vmatpush1.msra.mxu0 0.0
    %4529 = vmatprep.subr.mxu0 0.0
    %4530 = vmatpush1.msra.mxu0 0.0
    %4531 = vmatprep.subr.mxu0 0.0
    %4532 = vmatpush1.msra.mxu0 0.0
    %4533 = vmatprep.subr.mxu0 0.0
    %4534 = vmatpush1.msra.mxu0 0.0
    %4535 = vmatprep.subr.mxu0 0.0
    %4536 = vmatpush1.msra.mxu0 0.0
    %4537 = vmatprep.mubr.f32.mxu0 0.0
    %4538 = vmatmul.mubr.f32.gmra.mrb[0].mxu0 %v4332
    %v4539 = vpop.f32.mrb[0].mxu0
    %v4540 = vadd.f32 0.0, %v4539
    %v4541 = vpop.f32.mrb[0].mxu0
    %v4542 = vadd.f32 0.0, %v4541
    %4543 = vdwg.mxu0
    %v4544 = vadd.f32 %v4334, %v4469
    %v4545 = vadd.f32 %v4335, %v4471
    %v4546 = vadd.f32 %v4336, %v4540
    %v4547 = vadd.f32 %v4337, %v4542
    %v4548 = vxor.u32 %v4544, 2147483648
    %v4549 = vmul.f32 %v4548, 1.442695
    %v4550 = vpow.pop %v4549
    %v4551 = vadd.f32 %v4550, 1.0
    %v4552 = vrcp.pop %v4551
    %v4553 = vmul.f32 1.0, %v4552
    %v4554 = vxor.u32 %v4545, 2147483648
    %v4555 = vmul.f32 %v4554, 1.442695
    %v4556 = vpow.pop %v4555
    %v4557 = vadd.f32 %v4556, 1.0
    %v4558 = vrcp.pop %v4557
    %v4559 = vmul.f32 1.0, %v4558
    %v4560 = vtanh.pop %v4546
    %v4561 = vxor.u32 %v4547, 2147483648
    %v4562 = vmul.f32 %v4561, 1.442695
    %v4563 = vpow.pop %v4562
    %v4564 = vadd.f32 %v4563, 1.0
    %v4565 = vrcp.pop %v4564
    %v4566 = vmul.f32 1.0, %v4565
    %v4567 = vmul.f32 %v4559, %v4330
    %v4568 = vmul.f32 %v4553, %v4560
    %v4569 = vadd.f32 %v4567, %v4568
    %v4570 = vtanh.pop %v4569
    %v4571 = vmul.f32 %v4566, %v4570
    %4572 = vst [vmem:[#allocation3 + $0x38] sm:$0xff] %v4571
    %v4573 = vld [vmem:[#allocation3] sm:$0xff]
    %v4574 = vld [vmem:[#allocation3 + $0x8] sm:$0xff]
    %v4575 = vld [vmem:[#allocation3 + $0x10] sm:$0xff]
    %v4576 = vld [vmem:[#allocation3 + $0x18] sm:$0xff]
    %v4577 = vld [vmem:[#allocation3 + $0x20] sm:$0xff]
    %v4578 = vld [vmem:[#allocation3 + $0x28] sm:$0xff]
    %v4579 = vld [vmem:[#allocation3 + $0x30] sm:$0xff]
    %v4580 = vld [vmem:[#allocation3 + $0x38] sm:$0xff]
    %v4581 = vld [vmem:[%s1] sm:$0xff]
    %v4582 = vld [vmem:[%s1 + $0x8] sm:$0xff]
    %v4583 = vld [vmem:[%s1 + $0x10] sm:$0xff]
    %v4584 = vld [vmem:[%s1 + $0x18] sm:$0xff]
    %v4585 = vld [vmem:[%s1 + $0x20] sm:$0xff]
    %v4586 = vld [vmem:[%s1 + $0x28] sm:$0xff]
    %v4587 = vld [vmem:[%s1 + $0x30] sm:$0xff]
    %v4588 = vld [vmem:[%s1 + $0x38] sm:$0xff]
    %4590 = vset.pattern.permute.xlu0 0
    %4591 = vperm.xlu0 %4590, %v4581
    %v4592 = vpop.permute.xlu0 %4591
    %4595 = vset.pattern.permute.xlu0 0
    %4596 = vperm.xlu0 %4595, %v4582
    %v4597 = vpop.permute.xlu0 %4596
    %4600 = vset.pattern.permute.xlu0 0
    %4601 = vperm.xlu0 %4600, %v4583
    %v4602 = vpop.permute.xlu0 %4601
    %4605 = vset.pattern.permute.xlu0 0
    %4606 = vperm.xlu0 %4605, %v4584
    %v4607 = vpop.permute.xlu0 %4606
    %4610 = vset.pattern.permute.xlu0 0
    %4611 = vperm.xlu0 %4610, %v4585
    %v4612 = vpop.permute.xlu0 %4611
    %4615 = vset.pattern.permute.xlu0 0
    %4616 = vperm.xlu0 %4615, %v4586
    %v4617 = vpop.permute.xlu0 %4616
    %4620 = vset.pattern.permute.xlu0 0
    %4621 = vperm.xlu0 %4620, %v4587
    %v4622 = vpop.permute.xlu0 %4621
    %4625 = vset.pattern.permute.xlu0 0
    %4626 = vperm.xlu0 %4625, %v4588
    %v4627 = vpop.permute.xlu0 %4626
    %v4629 = vmul.f32 %v4573, %v4592
    %v4630 = vmul.f32 %v4574, %v4597
    %v4631 = vmul.f32 %v4575, %v4602
    %v4632 = vmul.f32 %v4576, %v4607
    %v4633 = vmul.f32 %v4577, %v4612
    %v4634 = vmul.f32 %v4578, %v4617
    %v4635 = vmul.f32 %v4579, %v4622
    %v4636 = vmul.f32 %v4580, %v4627
    %v4637 = vld [vmem:[%s8] sm:$0xff]
    %v4638 = vld [vmem:[%s8 + $0x8] sm:$0xff]
    %v4639 = vld [vmem:[%s8 + $0x10] sm:$0xff]
    %v4640 = vld [vmem:[%s8 + $0x18] sm:$0xff]
    %v4641 = vld [vmem:[%s8 + $0x20] sm:$0xff]
    %v4642 = vld [vmem:[%s8 + $0x28] sm:$0xff]
    %v4643 = vld [vmem:[%s8 + $0x30] sm:$0xff]
    %v4644 = vld [vmem:[%s8 + $0x38] sm:$0xff]
    %v4645 = vld [vmem:[%s8 + $0x40] sm:$0xff]
    %v4646 = vld [vmem:[%s8 + $0x48] sm:$0xff]
    %v4647 = vld [vmem:[%s8 + $0x50] sm:$0xff]
    %v4648 = vld [vmem:[%s8 + $0x58] sm:$0xff]
    %v4649 = vld [vmem:[%s8 + $0x60] sm:$0xff]
    %v4650 = vld [vmem:[%s8 + $0x68] sm:$0xff]
    %v4651 = vld [vmem:[%s8 + $0x70] sm:$0xff]
    %v4652 = vld [vmem:[%s8 + $0x78] sm:$0xff]
    %v4653 = vld [vmem:[%s9] sm:$0x1]
    %v4655 = vlaneseq
    %v4656 = vshrl.u32 %v4655, 7
    %v4657 = vsub.s32 0, %v4656
    %v4658 = vrot.slane %v4653, %v4657
    %4660 = vmatprep.subr.mxu0 0.0
    %4661 = vmatpush1.msra.mxu0 %v4637
    %4662 = vmatprep.subr.mxu0 0.0
    %4663 = vmatpush1.msra.mxu0 %v4638
    %4664 = vmatprep.subr.mxu0 0.0
    %4665 = vmatpush1.msra.mxu0 %v4639
    %4666 = vmatprep.subr.mxu0 0.0
    %4667 = vmatpush1.msra.mxu0 %v4640
    %4668 = vmatprep.subr.mxu0 0.0
    %4669 = vmatpush1.msra.mxu0 %v4641
    %4670 = vmatprep.subr.mxu0 0.0
    %4671 = vmatpush1.msra.mxu0 %v4642
    %4672 = vmatprep.subr.mxu0 0.0
    %4673 = vmatpush1.msra.mxu0 %v4643
    %4674 = vmatprep.subr.mxu0 0.0
    %4675 = vmatpush1.msra.mxu0 %v4644
    %4676 = vmatprep.subr.mxu0 0.0
    %4677 = vmatpush1.msra.mxu0 %v4645
    %4678 = vmatprep.subr.mxu0 0.0
    %4679 = vmatpush1.msra.mxu0 %v4646
    %4680 = vmatprep.subr.mxu0 0.0
    %4681 = vmatpush1.msra.mxu0 %v4647
    %4682 = vmatprep.subr.mxu0 0.0
    %4683 = vmatpush1.msra.mxu0 %v4648
    %4684 = vmatprep.subr.mxu0 0.0
    %4685 = vmatpush1.msra.mxu0 %v4649
    %4686 = vmatprep.subr.mxu0 0.0
    %4687 = vmatpush1.msra.mxu0 %v4650
    %4688 = vmatprep.subr.mxu0 0.0
    %4689 = vmatpush1.msra.mxu0 %v4651
    %4690 = vmatprep.subr.mxu0 0.0
    %4691 = vmatpush1.msra.mxu0 %v4652
    %4692 = vmatprep.subr.mxu0 0.0
    %4693 = vmatpush1.msra.mxu0 0.0
    %4694 = vmatprep.subr.mxu0 0.0
    %4695 = vmatpush1.msra.mxu0 0.0
    %4696 = vmatprep.subr.mxu0 0.0
    %4697 = vmatpush1.msra.mxu0 0.0
    %4698 = vmatprep.subr.mxu0 0.0
    %4699 = vmatpush1.msra.mxu0 0.0
    %4700 = vmatprep.subr.mxu0 0.0
    %4701 = vmatpush1.msra.mxu0 0.0
    %4702 = vmatprep.subr.mxu0 0.0
    %4703 = vmatpush1.msra.mxu0 0.0
    %4704 = vmatprep.subr.mxu0 0.0
    %4705 = vmatpush1.msra.mxu0 0.0
    %4706 = vmatprep.subr.mxu0 0.0
    %4707 = vmatpush1.msra.mxu0 0.0
    %4708 = vmatprep.subr.mxu0 0.0
    %4709 = vmatpush1.msra.mxu0 0.0
    %4710 = vmatprep.subr.mxu0 0.0
    %4711 = vmatpush1.msra.mxu0 0.0
    %4712 = vmatprep.subr.mxu0 0.0
    %4713 = vmatpush1.msra.mxu0 0.0
    %4714 = vmatprep.subr.mxu0 0.0
    %4715 = vmatpush1.msra.mxu0 0.0
    %4716 = vmatprep.subr.mxu0 0.0
    %4717 = vmatpush1.msra.mxu0 0.0
    %4718 = vmatprep.subr.mxu0 0.0
    %4719 = vmatpush1.msra.mxu0 0.0
    %4720 = vmatprep.subr.mxu0 0.0
    %4721 = vmatpush1.msra.mxu0 0.0
    %4722 = vmatprep.subr.mxu0 0.0
    %4723 = vmatpush1.msra.mxu0 0.0
    %4724 = vmatprep.mubr.f32.mxu0 0.0
    %4725 = vmatmul.mubr.f32.gmra.mrb[0].mxu0 %v4629
    %v4726 = vpop.f32.mrb[0].mxu0
    %v4727 = vadd.f32 %v4658, %v4726
    %v4728 = vpop.f32.mrb[0].mxu0
    %4729 = vmatprep.mubr.f32.mxu0 0.0
    %4730 = vmatmul.mubr.f32.gmra.mrb[0].mxu0 %v4630
    %v4731 = vpop.f32.mrb[0].mxu0
    %v4732 = vadd.f32 %v4658, %v4731
    %v4733 = vpop.f32.mrb[0].mxu0
    %4734 = vmatprep.mubr.f32.mxu0 0.0
    %4735 = vmatmul.mubr.f32.gmra.mrb[0].mxu0 %v4631
    %v4736 = vpop.f32.mrb[0].mxu0
    %v4737 = vadd.f32 %v4658, %v4736
    %v4738 = vpop.f32.mrb[0].mxu0
    %4739 = vmatprep.mubr.f32.mxu0 0.0
    %4740 = vmatmul.mubr.f32.gmra.mrb[0].mxu0 %v4632
    %v4741 = vpop.f32.mrb[0].mxu0
    %v4742 = vadd.f32 %v4658, %v4741
    %v4743 = vpop.f32.mrb[0].mxu0
    %4744 = vmatprep.mubr.f32.mxu0 0.0
    %4745 = vmatmul.mubr.f32.gmra.mrb[0].mxu0 %v4633
    %v4746 = vpop.f32.mrb[0].mxu0
    %v4747 = vadd.f32 %v4658, %v4746
    %v4748 = vpop.f32.mrb[0].mxu0
    %4749 = vmatprep.mubr.f32.mxu0 0.0
    %4750 = vmatmul.mubr.f32.gmra.mrb[0].mxu0 %v4634
    %v4751 = vpop.f32.mrb[0].mxu0
    %v4752 = vadd.f32 %v4658, %v4751
    %v4753 = vpop.f32.mrb[0].mxu0
    %4754 = vmatprep.mubr.f32.mxu0 0.0
    %4755 = vmatmul.mubr.f32.gmra.mrb[0].mxu0 %v4635
    %v4756 = vpop.f32.mrb[0].mxu0
    %v4757 = vadd.f32 %v4658, %v4756
    %v4758 = vpop.f32.mrb[0].mxu0
    %4759 = vmatprep.mubr.f32.mxu0 0.0
    %4760 = vmatmul.mubr.f32.gmra.mrb[0].mxu0 %v4636
    %v4761 = vpop.f32.mrb[0].mxu0
    %v4762 = vadd.f32 %v4658, %v4761
    %v4763 = vpop.f32.mrb[0].mxu0
    %4764 = vdwg.mxu0
    %4765 = vst [vmem:[%s10] sm:$0xff] %v4727
    %4766 = vst [vmem:[%s10 + $0x8] sm:$0xff] %v4732
    %4767 = vst [vmem:[%s10 + $0x10] sm:$0xff] %v4737
    %4768 = vst [vmem:[%s10 + $0x18] sm:$0xff] %v4742
    %4769 = vst [vmem:[%s10 + $0x20] sm:$0xff] %v4747
    %4770 = vst [vmem:[%s10 + $0x28] sm:$0xff] %v4752
    %4771 = vst [vmem:[%s10 + $0x30] sm:$0xff] %v4757
    %4772 = vst [vmem:[%s10 + $0x38] sm:$0xff] %v4762
    // Predicated region
    $region54: #{lstm_forward.1} parent=1 // pred_check
      _
    $region55: #{lstm_forward.1} parent=1 // pred_check_branch
      %4774 = sbr.rel (0) target = $region57
    $region56: #{lstm_forward.1} parent=1 // pred_region
      _
    $region57: #{lstm_forward.1} parent=1 // pred_fallthru
      _
    // Predicated region
    $region58: #{lstm_forward.1} parent=1 // pred_check
      _
    $region59: #{lstm_forward.1} parent=1 // pred_check_branch
      %4776 = sbr.rel (0) target = $region61
    $region60: #{lstm_forward.1} parent=1 // pred_region
      _
    $region61: #{lstm_forward.1} parent=1 // pred_fallthru
      _
    %4777 = vsyncpa [#allocation5], 1
    %4778 = vsyncpa [#allocation7], 1

</llo_original>
